<compile_context>
chip_gen: v7x
topology: tpu7x:2x2x1
jax: 0.10.0
libtpu: 0.0.40
codegen_flags: <defaults>
</compile_context>

<pallas_src>
import functools
import math

import jax
import jax.numpy as jnp
import numpy as np
from jax.experimental import pallas as pl
from jax.experimental.pallas import tpu as pltpu


# --------------------------------------------------------------------------
# Fused decoder kernel (one grid step == one DecoderLayer)
# --------------------------------------------------------------------------
def _decoder_kernel(
    # inputs (30)
    dec_ref, enc_ref, posd_ref, pose_ref, sbias_ref, cbias_ref,
    ln0_g, ln0_b, w_qkv_s, b_qkv_s, w_o_s, b_o_s, ln1_g, ln1_b,
    w_q_c, b_q_c, w_kv_c, b_kv_c, w_o_c, b_o_c, ln2_g, ln2_b,
    w_fc1, b_fc1, w_fc2, b_fc2, ln3_g, ln3_b, fin_g, fin_b,
    # outputs (3)
    dec_out_ref, sattn_ref, cattn_ref,
    # scratch (2)
    x_ref, e_ref,
    *, n_heads, head_size, hidden_scale, eps):
    layer = pl.program_id(0)
    B, LT, _ = sbias_ref.shape
    LS = cbias_ref.shape[2]
    DA = n_heads * head_size
    scale = 1.0 / math.sqrt(head_size)
    bf16 = jnp.bfloat16

    def layer_norm(z, g, b):
        mean = jnp.mean(z, axis=-1, keepdims=True)
        var = jnp.mean(jnp.square(z - mean), axis=-1, keepdims=True)
        return (z - mean) * jax.lax.rsqrt(var + eps) * g + b

    def softmax(s):
        s = s - jnp.max(s, axis=-1, keepdims=True)
        e = jnp.exp(s)
        return e * pl.reciprocal(jnp.sum(e, axis=-1, keepdims=True), approx=True)

    def split_heads(z2, L):
        # (B*L, DA) -> (n_heads*B, L, head_size): head-major batch built from
        # static lane slices stacked on a NEW leading axis (major-dim placement
        # only; no minor-dim transposes), then leading-dim merge.
        z3 = z2.reshape(B, L, DA)
        parts = [z3[:, :, h * head_size:(h + 1) * head_size]
                 for h in range(n_heads)]
        return jnp.stack(parts, axis=0).reshape(n_heads * B, L, head_size)

    def mha(q2, k2, v2, bias, lq, lk, w_o, b_o, attn_ref):
        """Batched all-head attention.

        One batched score matmul, one softmax, ONE full-block attention store,
        one batched context matmul, one (B*lq, DA) @ (DA, H) output projection.
        q2: (B*lq, DA), k2/v2: (B*lk, DA), bias: (B, lq, lk) additive (f32).
        """
        qh = split_heads(q2, lq)                    # (nH*B, lq, hd)
        kh = split_heads(k2, lk)                    # (nH*B, lk, hd)
        vh = split_heads(v2, lk)                    # (nH*B, lk, hd)
        s = jnp.einsum("bqd,bkd->bqk", qh.astype(bf16), kh.astype(bf16),
                       preferred_element_type=jnp.float32) * scale
        s = s.reshape(n_heads, B, lq, lk) + bias[None]      # mask, f32
        a = softmax(s)                                      # (nH, B, lq, lk)
        attn_ref[...] = a.reshape(1, n_heads, B, lq, lk)    # ONE block store
        ctx = jnp.einsum("bqk,bkd->bqd",
                         a.reshape(n_heads * B, lq, lk).astype(bf16),
                         vh.astype(bf16),
                         preferred_element_type=jnp.float32)
        ctx = ctx.reshape(n_heads, B, lq, head_size)
        # concat heads back along lanes -> single full-width output projection
        ctx2 = jnp.concatenate([ctx[h] for h in range(n_heads)],
                               axis=-1).reshape(B * lq, DA)
        return jnp.dot(ctx2.astype(bf16), w_o,
                       preferred_element_type=jnp.float32) + b_o

    # ---- layer 0 only: sqrt(H)-scale inputs and add positional embeddings ----
    @pl.when(layer == 0)
    def _():
        x_ref[...] = dec_ref[...] * hidden_scale + posd_ref[...]
        e_ref[...] = enc_ref[...] * hidden_scale + pose_ref[...]

    x = x_ref[...]                       # (B*LT, H) f32 running decoder state
    enc = e_ref[...]                     # (B*LS, H) f32 embedded encoder output
    sbias = sbias_ref[...]               # (B, LT, LT) additive self-attn mask
    cbias = cbias_ref[...]               # (B, LT, LS) additive cross-attn mask

    # ---- masked self-attention sublayer (pre-LN, post-residual LN) ----
    residual = x
    xn = layer_norm(x, ln0_g[0], ln0_b[0])
    qkv = jnp.dot(xn.astype(bf16), w_qkv_s[0],
                  preferred_element_type=jnp.float32) + b_qkv_s[0]
    sa = mha(qkv[:, :DA], qkv[:, DA:2 * DA], qkv[:, 2 * DA:], sbias,
             LT, LT, w_o_s[0], b_o_s[0], sattn_ref)
    x = layer_norm(sa + residual, ln1_g[0], ln1_b[0])

    # ---- encoder-decoder cross-attention (no pre-LN, per the reference) ----
    residual = x
    q = jnp.dot(x.astype(bf16), w_q_c[0],
                preferred_element_type=jnp.float32) + b_q_c[0]
    kv = jnp.dot(enc.astype(bf16), w_kv_c[0],
                 preferred_element_type=jnp.float32) + b_kv_c[0]
    ca = mha(q, kv[:, :DA], kv[:, DA:], cbias,
             LT, LS, w_o_c[0], b_o_c[0], cattn_ref)
    x = layer_norm(ca + residual, ln2_g[0], ln2_b[0])

    # ---- position-wise FFN (4*H inner width, per the reference module) ----
    residual = x
    h1 = jnp.maximum(
        jnp.dot(x.astype(bf16), w_fc1[0],
                preferred_element_type=jnp.float32) + b_fc1[0], 0.0)
    h2 = jnp.dot(h1.astype(bf16), w_fc2[0],
                 preferred_element_type=jnp.float32) + b_fc2[0]
    x = layer_norm(h2 + residual, ln3_g[0], ln3_b[0])

    x_ref[...] = x                       # carry state to the next layer step

    # ---- final decoder LayerNorm after the last layer ----
    @pl.when(layer == pl.num_programs(0) - 1)
    def _():
        dec_out_ref[...] = layer_norm(x, fin_g[...], fin_b[...])


# --------------------------------------------------------------------------
# Wrapper
# --------------------------------------------------------------------------
_PARAM_ORDER = (
    "ln0_g", "ln0_b", "w_qkv_s", "b_qkv_s", "w_o_s", "b_o_s", "ln1_g", "ln1_b",
    "w_q_c", "b_q_c", "w_kv_c", "b_kv_c", "w_o_c", "b_o_c", "ln2_g", "ln2_b",
    "w_fc1", "b_fc1", "w_fc2", "b_fc2", "ln3_g", "ln3_b",
)
# matmul weights are fed to the MXU in bf16 (f32 accumulation)
_BF16_WEIGHTS = frozenset(
    {"w_qkv_s", "w_o_s", "w_q_c", "w_kv_c", "w_o_c", "w_fc1", "w_fc2"})


def _sinusoidal_pos_emb(length, dim):
    # TODO(synk): SinusoidalPositionalEmbedding source not provided; the
    # standard interleaved sin/cos table of shape (length, dim) is assumed.
    pos = np.arange(length, dtype=np.float32)[:, None]
    idx = np.arange(dim, dtype=np.float32)[None, :]
    angle = pos / np.power(10000.0, (2.0 * np.floor(idx / 2.0)) / dim)
    pe = np.where(np.arange(dim)[None, :] % 2 == 0, np.sin(angle), np.cos(angle))
    return jnp.asarray(pe, jnp.float32)                 # (length, dim)


def _const_index_map(rank):
    def im(l):
        return (0,) * rank
    return im


def _layer_index_map(rank):
    def im(l):
        return (l,) + (0,) * (rank - 1)
    return im


@functools.partial(jax.jit, static_argnames=("n_heads", "head_size"))
def decoder_forward(params, dec_inputs, enc_outputs,
                    dec_self_attn_mask, dec_enc_attn_mask, *, n_heads, head_size):
    B, LT, H = dec_inputs.shape
    LS = enc_outputs.shape[1]
    n_layers = params["w_qkv_s"].shape[0]

    # ---- XLA-side layout plumbing (free): lane-dense 2-D slabs ----
    dec2 = dec_inputs.reshape(B * LT, H)
    enc2 = enc_outputs.reshape(B * LS, H)
    posd2 = jnp.broadcast_to(_sinusoidal_pos_emb(LT, H), (B, LT, H)).reshape(B * LT, H)
    pose2 = jnp.broadcast_to(_sinusoidal_pos_emb(LS, H), (B, LS, H)).reshape(B * LS, H)
    # mask convention: 1.0 == masked position; converted ONCE to additive bias
    self_bias = dec_self_attn_mask.astype(jnp.float32) * jnp.float32(-1e9)
    cross_bias = dec_enc_attn_mask.astype(jnp.float32) * jnp.float32(-1e9)

    # bf16 at MXU inputs; biases / LayerNorm params stay f32
    pc = {k: (v.astype(jnp.bfloat16) if k in _BF16_WEIGHTS else v)
          for k, v in params.items()}

    def full_spec(x):
        return pl.BlockSpec(x.shape, _const_index_map(x.ndim))

    def layer_spec(x):
        return pl.BlockSpec((1,) + x.shape[1:], _layer_index_map(x.ndim))

    operands = (dec2, enc2, posd2, pose2, self_bias, cross_bias,
                *(pc[k] for k in _PARAM_ORDER),
                pc["final_g"], pc["final_b"])
    in_specs = ([full_spec(o) for o in
                 (dec2, enc2, posd2, pose2, self_bias, cross_bias)]
                + [layer_spec(pc[k]) for k in _PARAM_ORDER]
                + [full_spec(pc["final_g"]), full_spec(pc["final_b"])])

    # attention maps are stored head-major ((layer, head, batch, LT, LK)) with
    # one full-block store per layer; re-ordered to (B, heads, ...) in XLA.
    out_shape = (
        jax.ShapeDtypeStruct((B * LT, H), jnp.float32),
        jax.ShapeDtypeStruct((n_layers, n_heads, B, LT, LT), jnp.float32),
        jax.ShapeDtypeStruct((n_layers, n_heads, B, LT, LS), jnp.float32),
    )
    out_specs = (
        pl.BlockSpec((B * LT, H), lambda l: (0, 0)),
        pl.BlockSpec((1, n_heads, B, LT, LT), lambda l: (l, 0, 0, 0, 0)),
        pl.BlockSpec((1, n_heads, B, LT, LS), lambda l: (l, 0, 0, 0, 0)),
    )

    kernel = functools.partial(
        _decoder_kernel, n_heads=n_heads, head_size=head_size,
        hidden_scale=float(np.sqrt(H)), eps=1e-5)

    dec_out2, sattn, cattn = pl.pallas_call(
        kernel,
        grid=(n_layers,),
        in_specs=in_specs,
        out_specs=out_specs,
        out_shape=out_shape,
        scratch_shapes=[pltpu.VMEM((B * LT, H), jnp.float32),   # decoder state
                        pltpu.VMEM((B * LS, H), jnp.float32)],  # encoder embed
        compiler_params=pltpu.CompilerParams(
            dimension_semantics=("arbitrary",)),
    )(*operands)

    dec_out = dec_out2.reshape(B, LT, H)
    sattn = jnp.transpose(sattn, (0, 2, 1, 3, 4))   # (L, B, nH, LT, LT)
    cattn = jnp.transpose(cattn, (0, 2, 1, 3, 4))   # (L, B, nH, LT, LS)
    return (dec_out,
            [sattn[i] for i in range(n_layers)],
            [cattn[i] for i in range(n_layers)])


# --------------------------------------------------------------------------
# Deterministic parameter init (per-layer params stacked on a leading axis)
# --------------------------------------------------------------------------
def _init_dense(key, din, dout, scale=0.05):
    kw, kb = jax.random.split(key)
    w = scale * jax.random.normal(kw, (din, dout), jnp.float32)
    b = scale * jax.random.normal(kb, (1, dout), jnp.float32)
    return w, b


def init_params(key, hidden, head_size, n_heads, ff_size, n_layers):
    # NB: ff_size is unused — the reference PoswiseFeedForwardNet hard-codes
    # an inner width of 4 * hidden.
    del ff_size
    da = n_heads * head_size
    ffn = 4 * hidden
    ones = jnp.ones((1, hidden), jnp.float32)
    zeros = jnp.zeros((1, hidden), jnp.float32)

    def one_layer(k):
        ks = jax.random.split(k, 7)
        w_qkv, b_qkv = _init_dense(ks[0], hidden, 3 * da)   # fused self Q/K/V
        w_os, b_os = _init_dense(ks[1], da, hidden)
        w_qc, b_qc = _init_dense(ks[2], hidden, da)
        w_kvc, b_kvc = _init_dense(ks[3], hidden, 2 * da)   # fused cross K/V
        w_oc, b_oc = _init_dense(ks[4], da, hidden)
        w_f1, b_f1 = _init_dense(ks[5], hidden, ffn)
        w_f2, b_f2 = _init_dense(ks[6], ffn, hidden)
        return dict(
            ln0_g=ones, ln0_b=zeros,
            w_qkv_s=w_qkv, b_qkv_s=b_qkv, w_o_s=w_os, b_o_s=b_os,
            ln1_g=ones, ln1_b=zeros,
            w_q_c=w_qc, b_q_c=b_qc, w_kv_c=w_kvc, b_kv_c=b_kvc,
            w_o_c=w_oc, b_o_c=b_oc,
            ln2_g=ones, ln2_b=zeros,
            w_fc1=w_f1, b_fc1=b_f1, w_fc2=w_f2, b_fc2=b_f2,
            ln3_g=ones, ln3_b=zeros,
        )

    layers = [one_layer(k) for k in jax.random.split(key, n_layers)]
    stacked = {k: jnp.stack([lyr[k] for lyr in layers], axis=0)
               for k in layers[0]}
    stacked["final_g"] = jnp.ones((1, hidden), jnp.float32)
    stacked["final_b"] = jnp.zeros((1, hidden), jnp.float32)
    return stacked


# --------------------------------------------------------------------------
if __name__ == "__main__":
    B, LT, LS = 2, 8, 8
    HIDDEN, N_HEADS, HEAD_SIZE, FF_SIZE, N_LAYERS = 32, 2, 16, 64, 2

    key = jax.random.PRNGKey(0)
    kp, kd, ke = jax.random.split(key, 3)

    params = init_params(kp, HIDDEN, HEAD_SIZE, N_HEADS, FF_SIZE, N_LAYERS)
    dec_inputs = jax.random.normal(kd, (B, LT, HIDDEN), jnp.float32)
    enc_outputs = jax.random.normal(ke, (B, LS, HIDDEN), jnp.float32)

    # decoder self-attention mask: causal (1.0 = masked future position)
    causal = np.triu(np.ones((LT, LT), np.float32), k=1)
    dec_self_attn_mask = jnp.broadcast_to(jnp.asarray(causal), (B, LT, LT))
    # decoder-encoder mask: last 2 encoder positions of batch 1 are masked
    dec_enc_attn_mask = jnp.zeros((B, LT, LS), jnp.float32).at[1, :, -2:].set(1.0)

    dec_out, self_attns, enc_attns = decoder_forward(
        params, dec_inputs, enc_outputs, dec_self_attn_mask, dec_enc_attn_mask,
        n_heads=N_HEADS, head_size=HEAD_SIZE)
    jax.block_until_ready(dec_out)
    jax.block_until_ready(self_attns)
    jax.block_until_ready(enc_attns)

    assert dec_out.shape == (B, LT, HIDDEN)
    assert len(self_attns) == N_LAYERS and len(enc_attns) == N_LAYERS
    assert self_attns[0].shape == (B, N_HEADS, LT, LT)
    assert enc_attns[0].shape == (B, N_HEADS, LT, LS)
    assert bool(jnp.all(jnp.isfinite(dec_out)))
    # attention rows sum to ~1 (approx. EUP reciprocal + bf16 MXU scores)
    assert bool(jnp.all(jnp.abs(jnp.sum(self_attns[0], -1) - 1.0) < 5e-2))
    assert bool(jnp.all(jnp.abs(jnp.sum(enc_attns[0], -1) - 1.0) < 5e-2))
    print("KERNEL_OK")
</pallas_src>

<mosaic_0001>
module attributes {stable_mosaic.version = 11 : i64} {
  func.func @_decoder_kernel(%arg0: i32, %arg1: memref<16x32xf32, #tpu.memory_space<vmem>>, %arg2: memref<16x32xf32, #tpu.memory_space<vmem>>, %arg3: memref<16x32xf32, #tpu.memory_space<vmem>>, %arg4: memref<16x32xf32, #tpu.memory_space<vmem>>, %arg5: memref<2x8x8xf32, #tpu.memory_space<vmem>>, %arg6: memref<2x8x8xf32, #tpu.memory_space<vmem>>, %arg7: memref<1x1x32xf32, #tpu.memory_space<vmem>>, %arg8: memref<1x1x32xf32, #tpu.memory_space<vmem>>, %arg9: memref<1x32x96xbf16, #tpu.memory_space<vmem>>, %arg10: memref<1x1x96xf32, #tpu.memory_space<vmem>>, %arg11: memref<1x32x32xbf16, #tpu.memory_space<vmem>>, %arg12: memref<1x1x32xf32, #tpu.memory_space<vmem>>, %arg13: memref<1x1x32xf32, #tpu.memory_space<vmem>>, %arg14: memref<1x1x32xf32, #tpu.memory_space<vmem>>, %arg15: memref<1x32x32xbf16, #tpu.memory_space<vmem>>, %arg16: memref<1x1x32xf32, #tpu.memory_space<vmem>>, %arg17: memref<1x32x64xbf16, #tpu.memory_space<vmem>>, %arg18: memref<1x1x64xf32, #tpu.memory_space<vmem>>, %arg19: memref<1x32x32xbf16, #tpu.memory_space<vmem>>, %arg20: memref<1x1x32xf32, #tpu.memory_space<vmem>>, %arg21: memref<1x1x32xf32, #tpu.memory_space<vmem>>, %arg22: memref<1x1x32xf32, #tpu.memory_space<vmem>>, %arg23: memref<1x32x128xbf16, #tpu.memory_space<vmem>>, %arg24: memref<1x1x128xf32, #tpu.memory_space<vmem>>, %arg25: memref<1x128x32xbf16, #tpu.memory_space<vmem>>, %arg26: memref<1x1x32xf32, #tpu.memory_space<vmem>>, %arg27: memref<1x1x32xf32, #tpu.memory_space<vmem>>, %arg28: memref<1x1x32xf32, #tpu.memory_space<vmem>>, %arg29: memref<1x32xf32, #tpu.memory_space<vmem>>, %arg30: memref<1x32xf32, #tpu.memory_space<vmem>>, %arg31: memref<16x32xf32, #tpu.memory_space<vmem>>, %arg32: memref<1x2x2x8x8xf32, #tpu.memory_space<vmem>>, %arg33: memref<1x2x2x8x8xf32, #tpu.memory_space<vmem>>, %arg34: memref<16x32xf32, #tpu.memory_space<vmem>>, %arg35: memref<16x32xf32, #tpu.memory_space<vmem>>) attributes {dimension_semantics = [#tpu.dimension_semantics<arbitrary>], iteration_bounds = array<i64: 2>, scalar_prefetch = 0 : i64, scratch_operands = 2 : i64, tpu.core_type = #tpu.core_type<tc>, window_params = [{pipeline_mode = #tpu.pipeline_mode<synchronous>, transform_indices = @transform_0, window_bounds = array<i64: 16, 32>}, {pipeline_mode = #tpu.pipeline_mode<synchronous>, transform_indices = @transform_1, window_bounds = array<i64: 16, 32>}, {pipeline_mode = #tpu.pipeline_mode<synchronous>, transform_indices = @transform_2, window_bounds = array<i64: 16, 32>}, {pipeline_mode = #tpu.pipeline_mode<synchronous>, transform_indices = @transform_3, window_bounds = array<i64: 16, 32>}, {pipeline_mode = #tpu.pipeline_mode<synchronous>, transform_indices = @transform_4, window_bounds = array<i64: 2, 8, 8>}, {pipeline_mode = #tpu.pipeline_mode<synchronous>, transform_indices = @transform_5, window_bounds = array<i64: 2, 8, 8>}, {transform_indices = @transform_6, window_bounds = array<i64: 1, 1, 32>}, {transform_indices = @transform_7, window_bounds = array<i64: 1, 1, 32>}, {transform_indices = @transform_8, window_bounds = array<i64: 1, 32, 96>}, {transform_indices = @transform_9, window_bounds = array<i64: 1, 1, 96>}, {transform_indices = @transform_10, window_bounds = array<i64: 1, 32, 32>}, {transform_indices = @transform_11, window_bounds = array<i64: 1, 1, 32>}, {transform_indices = @transform_12, window_bounds = array<i64: 1, 1, 32>}, {transform_indices = @transform_13, window_bounds = array<i64: 1, 1, 32>}, {transform_indices = @transform_14, window_bounds = array<i64: 1, 32, 32>}, {transform_indices = @transform_15, window_bounds = array<i64: 1, 1, 32>}, {transform_indices = @transform_16, window_bounds = array<i64: 1, 32, 64>}, {transform_indices = @transform_17, window_bounds = array<i64: 1, 1, 64>}, {transform_indices = @transform_18, window_bounds = array<i64: 1, 32, 32>}, {transform_indices = @transform_19, window_bounds = array<i64: 1, 1, 32>}, {transform_indices = @transform_20, window_bounds = array<i64: 1, 1, 32>}, {transform_indices = @transform_21, window_bounds = array<i64: 1, 1, 32>}, {transform_indices = @transform_22, window_bounds = array<i64: 1, 32, 128>}, {transform_indices = @transform_23, window_bounds = array<i64: 1, 1, 128>}, {transform_indices = @transform_24, window_bounds = array<i64: 1, 128, 32>}, {transform_indices = @transform_25, window_bounds = array<i64: 1, 1, 32>}, {transform_indices = @transform_26, window_bounds = array<i64: 1, 1, 32>}, {transform_indices = @transform_27, window_bounds = array<i64: 1, 1, 32>}, {pipeline_mode = #tpu.pipeline_mode<synchronous>, transform_indices = @transform_28, window_bounds = array<i64: 1, 32>}, {pipeline_mode = #tpu.pipeline_mode<synchronous>, transform_indices = @transform_29, window_bounds = array<i64: 1, 32>}, {pipeline_mode = #tpu.pipeline_mode<synchronous>, transform_indices = @transform_30, window_bounds = array<i64: 16, 32>}, {transform_indices = @transform_31, window_bounds = array<i64: 1, 2, 2, 8, 8>}, {transform_indices = @transform_32, window_bounds = array<i64: 1, 2, 2, 8, 8>}]} {
    %c0_i32 = arith.constant 0 : i32
    %0 = arith.cmpi eq, %arg0, %c0_i32 : i32
    %1 = arith.extui %0 : i1 to i32
    %c0_i32_0 = arith.constant 0 : i32
    %2 = arith.cmpi ne, %1, %c0_i32_0 : i32
    scf.if %2 {
      %c0_126 = arith.constant 0 : index
      %c0_127 = arith.constant 0 : index
      %287 = vector.load %arg1[%c0_126, %c0_127] : memref<16x32xf32, #tpu.memory_space<vmem>>, vector<16x32xf32>
      %cst_128 = arith.constant 5.65685415 : f32
      %288 = vector.broadcast %cst_128 : f32 to vector<16x32xf32>
      %289 = arith.mulf %287, %288 : vector<16x32xf32>
      %c0_129 = arith.constant 0 : index
      %c0_130 = arith.constant 0 : index
      %290 = vector.load %arg3[%c0_129, %c0_130] : memref<16x32xf32, #tpu.memory_space<vmem>>, vector<16x32xf32>
      %291 = arith.addf %289, %290 : vector<16x32xf32>
      %c0_131 = arith.constant 0 : index
      %c0_132 = arith.constant 0 : index
      %292 = vector.load %arg34[%c0_131, %c0_132] : memref<16x32xf32, #tpu.memory_space<vmem>>, vector<16x32xf32>
      tpu.vector_store %arg34[%c0_131, %c0_132], %291 {strides = array<i32>} : memref<16x32xf32, #tpu.memory_space<vmem>>, vector<16x32xf32>,
      %c0_133 = arith.constant 0 : index
      %c0_134 = arith.constant 0 : index
      %293 = vector.load %arg2[%c0_133, %c0_134] : memref<16x32xf32, #tpu.memory_space<vmem>>, vector<16x32xf32>
      %cst_135 = arith.constant 5.65685415 : f32
      %294 = vector.broadcast %cst_135 : f32 to vector<16x32xf32>
      %295 = arith.mulf %293, %294 : vector<16x32xf32>
      %c0_136 = arith.constant 0 : index
      %c0_137 = arith.constant 0 : index
      %296 = vector.load %arg4[%c0_136, %c0_137] : memref<16x32xf32, #tpu.memory_space<vmem>>, vector<16x32xf32>
      %297 = arith.addf %295, %296 : vector<16x32xf32>
      %c0_138 = arith.constant 0 : index
      %c0_139 = arith.constant 0 : index
      %298 = vector.load %arg35[%c0_138, %c0_139] : memref<16x32xf32, #tpu.memory_space<vmem>>, vector<16x32xf32>
      tpu.vector_store %arg35[%c0_138, %c0_139], %297 {strides = array<i32>} : memref<16x32xf32, #tpu.memory_space<vmem>>, vector<16x32xf32>,
    } else {
    }
    %c0 = arith.constant 0 : index
    %c0_1 = arith.constant 0 : index
    %3 = vector.load %arg34[%c0, %c0_1] : memref<16x32xf32, #tpu.memory_space<vmem>>, vector<16x32xf32>
    %c0_2 = arith.constant 0 : index
    %c0_3 = arith.constant 0 : index
    %4 = vector.load %arg35[%c0_2, %c0_3] : memref<16x32xf32, #tpu.memory_space<vmem>>, vector<16x32xf32>
    %c0_4 = arith.constant 0 : index
    %c0_5 = arith.constant 0 : index
    %c0_6 = arith.constant 0 : index
    %5 = vector.load %arg5[%c0_4, %c0_5, %c0_6] : memref<2x8x8xf32, #tpu.memory_space<vmem>>, vector<2x8x8xf32>
    %c0_7 = arith.constant 0 : index
    %c0_8 = arith.constant 0 : index
    %c0_9 = arith.constant 0 : index
    %6 = vector.load %arg6[%c0_7, %c0_8, %c0_9] : memref<2x8x8xf32, #tpu.memory_space<vmem>>, vector<2x8x8xf32>
    %c0_10 = arith.constant 0 : index
    %c0_11 = arith.constant 0 : index
    %c0_12 = arith.constant 0 : index
    %7 = vector.load %arg7[%c0_10, %c0_11, %c0_12] : memref<1x1x32xf32, #tpu.memory_space<vmem>>, vector<1x1x32xf32>
    %8 = vector.shape_cast %7 : vector<1x1x32xf32> to vector<1x32xf32>
    %c0_13 = arith.constant 0 : index
    %c0_14 = arith.constant 0 : index
    %c0_15 = arith.constant 0 : index
    %9 = vector.load %arg8[%c0_13, %c0_14, %c0_15] : memref<1x1x32xf32, #tpu.memory_space<vmem>>, vector<1x1x32xf32>
    %10 = vector.shape_cast %9 : vector<1x1x32xf32> to vector<1x32xf32>
    %cst = arith.constant dense<0.000000e+00> : vector<16xf32>
    %11 = vector.multi_reduction <add>, %3, %cst [1] : vector<16x32xf32> to vector<16xf32>
    %12 = vector.shape_cast %11 : vector<16xf32> to vector<16x1xf32>
    %cst_16 = arith.constant 3.200000e+01 : f32
    %13 = vector.broadcast %cst_16 : f32 to vector<16x1xf32>
    %14 = arith.divf %12, %13 : vector<16x1xf32>
    %15 = vector.broadcast %14 : vector<16x1xf32> to vector<16x32xf32>
    %16 = arith.subf %3, %15 : vector<16x32xf32>
    %17 = arith.mulf %16, %16 : vector<16x32xf32>
    %cst_17 = arith.constant dense<0.000000e+00> : vector<16xf32>
    %18 = vector.multi_reduction <add>, %17, %cst_17 [1] : vector<16x32xf32> to vector<16xf32>
    %19 = vector.shape_cast %18 : vector<16xf32> to vector<16x1xf32>
    %cst_18 = arith.constant 3.200000e+01 : f32
    %20 = vector.broadcast %cst_18 : f32 to vector<16x1xf32>
    %21 = arith.divf %19, %20 : vector<16x1xf32>
    %22 = vector.broadcast %14 : vector<16x1xf32> to vector<16x32xf32>
    %23 = arith.subf %3, %22 : vector<16x32xf32>
    %cst_19 = arith.constant 9.99999974E-6 : f32
    %24 = vector.broadcast %cst_19 : f32 to vector<16x1xf32>
    %25 = arith.addf %21, %24 : vector<16x1xf32>
    %26 = math.rsqrt %25 : vector<16x1xf32>
    %27 = vector.broadcast %26 : vector<16x1xf32> to vector<16x32xf32>
    %28 = arith.mulf %23, %27 : vector<16x32xf32>
    %29 = vector.broadcast %8 : vector<1x32xf32> to vector<16x32xf32>
    %30 = arith.mulf %28, %29 : vector<16x32xf32>
    %31 = vector.broadcast %10 : vector<1x32xf32> to vector<16x32xf32>
    %32 = arith.addf %30, %31 : vector<16x32xf32>
    %33 = arith.truncf %32 : vector<16x32xf32> to vector<16x32xbf16>
    %c0_20 = arith.constant 0 : index
    %c0_21 = arith.constant 0 : index
    %c0_22 = arith.constant 0 : index
    %34 = vector.load %arg9[%c0_20, %c0_21, %c0_22] : memref<1x32x96xbf16, #tpu.memory_space<vmem>>, vector<1x32x96xbf16>
    %35 = vector.shape_cast %34 : vector<1x32x96xbf16> to vector<32x96xbf16>
    %cst_23 = arith.constant dense<0.000000e+00> : vector<16x96xf32>
    %36 = tpu.matmul %33, %35, %cst_23 {dimension_numbers = #tpu.dot_dimension_numbers<[1], [0], [0], [1], [0, 0, 1, 1], [], []>} : vector<16x32xbf16>, vector<32x96xbf16>, vector<16x96xf32> -> vector<16x96xf32>
    %c0_24 = arith.constant 0 : index
    %c0_25 = arith.constant 0 : index
    %c0_26 = arith.constant 0 : index
    %37 = vector.load %arg10[%c0_24, %c0_25, %c0_26] : memref<1x1x96xf32, #tpu.memory_space<vmem>>, vector<1x1x96xf32>
    %38 = vector.shape_cast %37 : vector<1x1x96xf32> to vector<1x96xf32>
    %39 = vector.broadcast %38 : vector<1x96xf32> to vector<16x96xf32>
    %40 = arith.addf %36, %39 : vector<16x96xf32>
    %41 = vector.extract_strided_slice %40 {offsets = [0, 0], sizes = [16, 32], strides = [1, 1]} : vector<16x96xf32> to vector<16x32xf32>
    %42 = vector.extract_strided_slice %40 {offsets = [0, 32], sizes = [16, 32], strides = [1, 1]} : vector<16x96xf32> to vector<16x32xf32>
    %43 = vector.extract_strided_slice %40 {offsets = [0, 64], sizes = [16, 32], strides = [1, 1]} : vector<16x96xf32> to vector<16x32xf32>
    %c0_27 = arith.constant 0 : index
    %c0_28 = arith.constant 0 : index
    %c0_29 = arith.constant 0 : index
    %44 = vector.load %arg11[%c0_27, %c0_28, %c0_29] : memref<1x32x32xbf16, #tpu.memory_space<vmem>>, vector<1x32x32xbf16>
    %45 = vector.shape_cast %44 : vector<1x32x32xbf16> to vector<32x32xbf16>
    %c0_30 = arith.constant 0 : index
    %c0_31 = arith.constant 0 : index
    %c0_32 = arith.constant 0 : index
    %46 = vector.load %arg12[%c0_30, %c0_31, %c0_32] : memref<1x1x32xf32, #tpu.memory_space<vmem>>, vector<1x1x32xf32>
    %47 = vector.shape_cast %46 : vector<1x1x32xf32> to vector<1x32xf32>
    %48 = vector.shape_cast %41 : vector<16x32xf32> to vector<2x8x32xf32>
    %49 = vector.extract_strided_slice %48 {offsets = [0, 0, 0], sizes = [2, 8, 16], strides = [1, 1, 1]} : vector<2x8x32xf32> to vector<2x8x16xf32>
    %50 = vector.extract_strided_slice %48 {offsets = [0, 0, 16], sizes = [2, 8, 16], strides = [1, 1, 1]} : vector<2x8x32xf32> to vector<2x8x16xf32>
    %51 = vector.shape_cast %49 : vector<2x8x16xf32> to vector<1x2x8x16xf32>
    %52 = vector.shape_cast %50 : vector<2x8x16xf32> to vector<1x2x8x16xf32>
    %53 = tpu.concatenate %51, %52 in 0 : vector<1x2x8x16xf32>, vector<1x2x8x16xf32> -> vector<2x2x8x16xf32>
    %54 = vector.shape_cast %53 : vector<2x2x8x16xf32> to vector<4x8x16xf32>
    %55 = vector.shape_cast %42 : vector<16x32xf32> to vector<2x8x32xf32>
    %56 = vector.extract_strided_slice %55 {offsets = [0, 0, 0], sizes = [2, 8, 16], strides = [1, 1, 1]} : vector<2x8x32xf32> to vector<2x8x16xf32>
    %57 = vector.extract_strided_slice %55 {offsets = [0, 0, 16], sizes = [2, 8, 16], strides = [1, 1, 1]} : vector<2x8x32xf32> to vector<2x8x16xf32>
    %58 = vector.shape_cast %56 : vector<2x8x16xf32> to vector<1x2x8x16xf32>
    %59 = vector.shape_cast %57 : vector<2x8x16xf32> to vector<1x2x8x16xf32>
    %60 = tpu.concatenate %58, %59 in 0 : vector<1x2x8x16xf32>, vector<1x2x8x16xf32> -> vector<2x2x8x16xf32>
    %61 = vector.shape_cast %60 : vector<2x2x8x16xf32> to vector<4x8x16xf32>
    %62 = vector.shape_cast %43 : vector<16x32xf32> to vector<2x8x32xf32>
    %63 = vector.extract_strided_slice %62 {offsets = [0, 0, 0], sizes = [2, 8, 16], strides = [1, 1, 1]} : vector<2x8x32xf32> to vector<2x8x16xf32>
    %64 = vector.extract_strided_slice %62 {offsets = [0, 0, 16], sizes = [2, 8, 16], strides = [1, 1, 1]} : vector<2x8x32xf32> to vector<2x8x16xf32>
    %65 = vector.shape_cast %63 : vector<2x8x16xf32> to vector<1x2x8x16xf32>
    %66 = vector.shape_cast %64 : vector<2x8x16xf32> to vector<1x2x8x16xf32>
    %67 = tpu.concatenate %65, %66 in 0 : vector<1x2x8x16xf32>, vector<1x2x8x16xf32> -> vector<2x2x8x16xf32>
    %68 = vector.shape_cast %67 : vector<2x2x8x16xf32> to vector<4x8x16xf32>
    %69 = arith.truncf %54 : vector<4x8x16xf32> to vector<4x8x16xbf16>
    %70 = arith.truncf %61 : vector<4x8x16xf32> to vector<4x8x16xbf16>
    "tpu.trace_start"() <{level = 10 : i32, message = "bqd,bkd->bqk"}> : () -> ()
    %cst_33 = arith.constant dense<0.000000e+00> : vector<4x8x8xf32>
    %71 = tpu.matmul %69, %70, %cst_33 {dimension_numbers = #tpu.dot_dimension_numbers<[2], [2], [1], [1], [0, 0, 0, 1, 1, 1], [0], [0]>} : vector<4x8x16xbf16>, vector<4x8x16xbf16>, vector<4x8x8xf32> -> vector<4x8x8xf32>
    "tpu.trace_stop"() : () -> ()
    %cst_34 = arith.constant 2.500000e-01 : f32
    %72 = vector.broadcast %cst_34 : f32 to vector<4x8x8xf32>
    %73 = arith.mulf %71, %72 : vector<4x8x8xf32>
    %74 = vector.shape_cast %73 : vector<4x8x8xf32> to vector<2x2x8x8xf32>
    %75 = vector.shape_cast %5 : vector<2x8x8xf32> to vector<1x2x8x8xf32>
    %76 = vector.broadcast %75 : vector<1x2x8x8xf32> to vector<2x2x8x8xf32>
    %77 = arith.addf %74, %76 : vector<2x2x8x8xf32>
    %cst_35 = arith.constant dense<0xFF800000> : vector<2x2x8xf32>
    %78 = vector.multi_reduction <maximumf>, %77, %cst_35 [3] : vector<2x2x8x8xf32> to vector<2x2x8xf32>
    %79 = vector.shape_cast %78 : vector<2x2x8xf32> to vector<2x2x8x1xf32>
    %80 = vector.broadcast %79 : vector<2x2x8x1xf32> to vector<2x2x8x8xf32>
    %81 = arith.subf %77, %80 : vector<2x2x8x8xf32>
    %82 = math.exp %81 : vector<2x2x8x8xf32>
    %cst_36 = arith.constant dense<0.000000e+00> : vector<2x2x8xf32>
    %83 = vector.multi_reduction <add>, %82, %cst_36 [3] : vector<2x2x8x8xf32> to vector<2x2x8xf32>
    %84 = vector.shape_cast %83 : vector<2x2x8xf32> to vector<2x2x8x1xf32>
    %85 = tpu.reciprocal %84 {approx = true} : vector<2x2x8x1xf32> -> vector<2x2x8x1xf32>
    %86 = vector.broadcast %85 : vector<2x2x8x1xf32> to vector<2x2x8x8xf32>
    %87 = arith.mulf %82, %86 : vector<2x2x8x8xf32>
    %88 = vector.shape_cast %87 : vector<2x2x8x8xf32> to vector<1x2x2x8x8xf32>
    %c0_37 = arith.constant 0 : index
    %c0_38 = arith.constant 0 : index
    %c0_39 = arith.constant 0 : index
    %c0_40 = arith.constant 0 : index
    %c0_41 = arith.constant 0 : index
    %89 = vector.load %arg32[%c0_37, %c0_38, %c0_39, %c0_40, %c0_41] : memref<1x2x2x8x8xf32, #tpu.memory_space<vmem>>, vector<1x2x2x8x8xf32>
    tpu.vector_store %arg32[%c0_37, %c0_38, %c0_39, %c0_40, %c0_41], %88 {strides = array<i32>} : memref<1x2x2x8x8xf32, #tpu.memory_space<vmem>>, vector<1x2x2x8x8xf32>,
    %90 = vector.shape_cast %87 : vector<2x2x8x8xf32> to vector<4x8x8xf32>
    %91 = arith.truncf %90 : vector<4x8x8xf32> to vector<4x8x8xbf16>
    %92 = arith.truncf %68 : vector<4x8x16xf32> to vector<4x8x16xbf16>
    "tpu.trace_start"() <{level = 10 : i32, message = "bqk,bkd->bqd"}> : () -> ()
    %cst_42 = arith.constant dense<0.000000e+00> : vector<4x8x16xf32>
    %93 = tpu.matmul %91, %92, %cst_42 {dimension_numbers = #tpu.dot_dimension_numbers<[2], [1], [1], [2], [0, 0, 0, 1, 1, 2], [0], [0]>} : vector<4x8x8xbf16>, vector<4x8x16xbf16>, vector<4x8x16xf32> -> vector<4x8x16xf32>
    "tpu.trace_stop"() : () -> ()
    %94 = vector.shape_cast %93 : vector<4x8x16xf32> to vector<2x2x8x16xf32>
    %95 = vector.extract_strided_slice %94 {offsets = [0, 0, 0, 0], sizes = [1, 2, 8, 16], strides = [1, 1, 1, 1]} : vector<2x2x8x16xf32> to vector<1x2x8x16xf32>
    %96 = vector.shape_cast %95 : vector<1x2x8x16xf32> to vector<2x8x16xf32>
    %97 = vector.extract_strided_slice %94 {offsets = [1, 0, 0, 0], sizes = [1, 2, 8, 16], strides = [1, 1, 1, 1]} : vector<2x2x8x16xf32> to vector<1x2x8x16xf32>
    %98 = vector.shape_cast %97 : vector<1x2x8x16xf32> to vector<2x8x16xf32>
    %99 = tpu.concatenate %96, %98 in 2 : vector<2x8x16xf32>, vector<2x8x16xf32> -> vector<2x8x32xf32>
    %100 = vector.shape_cast %99 : vector<2x8x32xf32> to vector<16x32xf32>
    %101 = arith.truncf %100 : vector<16x32xf32> to vector<16x32xbf16>
    %cst_43 = arith.constant dense<0.000000e+00> : vector<16x32xf32>
    %102 = tpu.matmul %101, %45, %cst_43 {dimension_numbers = #tpu.dot_dimension_numbers<[1], [0], [0], [1], [0, 0, 1, 1], [], []>} : vector<16x32xbf16>, vector<32x32xbf16>, vector<16x32xf32> -> vector<16x32xf32>
    %103 = vector.broadcast %47 : vector<1x32xf32> to vector<16x32xf32>
    %104 = arith.addf %102, %103 : vector<16x32xf32>
    %105 = arith.addf %104, %3 : vector<16x32xf32>
    %c0_44 = arith.constant 0 : index
    %c0_45 = arith.constant 0 : index
    %c0_46 = arith.constant 0 : index
    %106 = vector.load %arg13[%c0_44, %c0_45, %c0_46] : memref<1x1x32xf32, #tpu.memory_space<vmem>>, vector<1x1x32xf32>
    %107 = vector.shape_cast %106 : vector<1x1x32xf32> to vector<1x32xf32>
    %c0_47 = arith.constant 0 : index
    %c0_48 = arith.constant 0 : index
    %c0_49 = arith.constant 0 : index
    %108 = vector.load %arg14[%c0_47, %c0_48, %c0_49] : memref<1x1x32xf32, #tpu.memory_space<vmem>>, vector<1x1x32xf32>
    %109 = vector.shape_cast %108 : vector<1x1x32xf32> to vector<1x32xf32>
    %cst_50 = arith.constant dense<0.000000e+00> : vector<16xf32>
    %110 = vector.multi_reduction <add>, %105, %cst_50 [1] : vector<16x32xf32> to vector<16xf32>
    %111 = vector.shape_cast %110 : vector<16xf32> to vector<16x1xf32>
    %cst_51 = arith.constant 3.200000e+01 : f32
    %112 = vector.broadcast %cst_51 : f32 to vector<16x1xf32>
    %113 = arith.divf %111, %112 : vector<16x1xf32>
    %114 = vector.broadcast %113 : vector<16x1xf32> to vector<16x32xf32>
    %115 = arith.subf %105, %114 : vector<16x32xf32>
    %116 = arith.mulf %115, %115 : vector<16x32xf32>
    %cst_52 = arith.constant dense<0.000000e+00> : vector<16xf32>
    %117 = vector.multi_reduction <add>, %116, %cst_52 [1] : vector<16x32xf32> to vector<16xf32>
    %118 = vector.shape_cast %117 : vector<16xf32> to vector<16x1xf32>
    %cst_53 = arith.constant 3.200000e+01 : f32
    %119 = vector.broadcast %cst_53 : f32 to vector<16x1xf32>
    %120 = arith.divf %118, %119 : vector<16x1xf32>
    %121 = vector.broadcast %113 : vector<16x1xf32> to vector<16x32xf32>
    %122 = arith.subf %105, %121 : vector<16x32xf32>
    %cst_54 = arith.constant 9.99999974E-6 : f32
    %123 = vector.broadcast %cst_54 : f32 to vector<16x1xf32>
    %124 = arith.addf %120, %123 : vector<16x1xf32>
    %125 = math.rsqrt %124 : vector<16x1xf32>
    %126 = vector.broadcast %125 : vector<16x1xf32> to vector<16x32xf32>
    %127 = arith.mulf %122, %126 : vector<16x32xf32>
    %128 = vector.broadcast %107 : vector<1x32xf32> to vector<16x32xf32>
    %129 = arith.mulf %127, %128 : vector<16x32xf32>
    %130 = vector.broadcast %109 : vector<1x32xf32> to vector<16x32xf32>
    %131 = arith.addf %129, %130 : vector<16x32xf32>
    %132 = arith.truncf %131 : vector<16x32xf32> to vector<16x32xbf16>
    %c0_55 = arith.constant 0 : index
    %c0_56 = arith.constant 0 : index
    %c0_57 = arith.constant 0 : index
    %133 = vector.load %arg15[%c0_55, %c0_56, %c0_57] : memref<1x32x32xbf16, #tpu.memory_space<vmem>>, vector<1x32x32xbf16>
    %134 = vector.shape_cast %133 : vector<1x32x32xbf16> to vector<32x32xbf16>
    %cst_58 = arith.constant dense<0.000000e+00> : vector<16x32xf32>
    %135 = tpu.matmul %132, %134, %cst_58 {dimension_numbers = #tpu.dot_dimension_numbers<[1], [0], [0], [1], [0, 0, 1, 1], [], []>} : vector<16x32xbf16>, vector<32x32xbf16>, vector<16x32xf32> -> vector<16x32xf32>
    %c0_59 = arith.constant 0 : index
    %c0_60 = arith.constant 0 : index
    %c0_61 = arith.constant 0 : index
    %136 = vector.load %arg16[%c0_59, %c0_60, %c0_61] : memref<1x1x32xf32, #tpu.memory_space<vmem>>, vector<1x1x32xf32>
    %137 = vector.shape_cast %136 : vector<1x1x32xf32> to vector<1x32xf32>
    %138 = vector.broadcast %137 : vector<1x32xf32> to vector<16x32xf32>
    %139 = arith.addf %135, %138 : vector<16x32xf32>
    %140 = arith.truncf %4 : vector<16x32xf32> to vector<16x32xbf16>
    %c0_62 = arith.constant 0 : index
    %c0_63 = arith.constant 0 : index
    %c0_64 = arith.constant 0 : index
    %141 = vector.load %arg17[%c0_62, %c0_63, %c0_64] : memref<1x32x64xbf16, #tpu.memory_space<vmem>>, vector<1x32x64xbf16>
    %142 = vector.shape_cast %141 : vector<1x32x64xbf16> to vector<32x64xbf16>
    %cst_65 = arith.constant dense<0.000000e+00> : vector<16x64xf32>
    %143 = tpu.matmul %140, %142, %cst_65 {dimension_numbers = #tpu.dot_dimension_numbers<[1], [0], [0], [1], [0, 0, 1, 1], [], []>} : vector<16x32xbf16>, vector<32x64xbf16>, vector<16x64xf32> -> vector<16x64xf32>
    %c0_66 = arith.constant 0 : index
    %c0_67 = arith.constant 0 : index
    %c0_68 = arith.constant 0 : index
    %144 = vector.load %arg18[%c0_66, %c0_67, %c0_68] : memref<1x1x64xf32, #tpu.memory_space<vmem>>, vector<1x1x64xf32>
    %145 = vector.shape_cast %144 : vector<1x1x64xf32> to vector<1x64xf32>
    %146 = vector.broadcast %145 : vector<1x64xf32> to vector<16x64xf32>
    %147 = arith.addf %143, %146 : vector<16x64xf32>
    %148 = vector.extract_strided_slice %147 {offsets = [0, 0], sizes = [16, 32], strides = [1, 1]} : vector<16x64xf32> to vector<16x32xf32>
    %149 = vector.extract_strided_slice %147 {offsets = [0, 32], sizes = [16, 32], strides = [1, 1]} : vector<16x64xf32> to vector<16x32xf32>
    %c0_69 = arith.constant 0 : index
    %c0_70 = arith.constant 0 : index
    %c0_71 = arith.constant 0 : index
    %150 = vector.load %arg19[%c0_69, %c0_70, %c0_71] : memref<1x32x32xbf16, #tpu.memory_space<vmem>>, vector<1x32x32xbf16>
    %151 = vector.shape_cast %150 : vector<1x32x32xbf16> to vector<32x32xbf16>
    %c0_72 = arith.constant 0 : index
    %c0_73 = arith.constant 0 : index
    %c0_74 = arith.constant 0 : index
    %152 = vector.load %arg20[%c0_72, %c0_73, %c0_74] : memref<1x1x32xf32, #tpu.memory_space<vmem>>, vector<1x1x32xf32>
    %153 = vector.shape_cast %152 : vector<1x1x32xf32> to vector<1x32xf32>
    %154 = vector.shape_cast %139 : vector<16x32xf32> to vector<2x8x32xf32>
    %155 = vector.extract_strided_slice %154 {offsets = [0, 0, 0], sizes = [2, 8, 16], strides = [1, 1, 1]} : vector<2x8x32xf32> to vector<2x8x16xf32>
    %156 = vector.extract_strided_slice %154 {offsets = [0, 0, 16], sizes = [2, 8, 16], strides = [1, 1, 1]} : vector<2x8x32xf32> to vector<2x8x16xf32>
    %157 = vector.shape_cast %155 : vector<2x8x16xf32> to vector<1x2x8x16xf32>
    %158 = vector.shape_cast %156 : vector<2x8x16xf32> to vector<1x2x8x16xf32>
    %159 = tpu.concatenate %157, %158 in 0 : vector<1x2x8x16xf32>, vector<1x2x8x16xf32> -> vector<2x2x8x16xf32>
    %160 = vector.shape_cast %159 : vector<2x2x8x16xf32> to vector<4x8x16xf32>
    %161 = vector.shape_cast %148 : vector<16x32xf32> to vector<2x8x32xf32>
    %162 = vector.extract_strided_slice %161 {offsets = [0, 0, 0], sizes = [2, 8, 16], strides = [1, 1, 1]} : vector<2x8x32xf32> to vector<2x8x16xf32>
    %163 = vector.extract_strided_slice %161 {offsets = [0, 0, 16], sizes = [2, 8, 16], strides = [1, 1, 1]} : vector<2x8x32xf32> to vector<2x8x16xf32>
    %164 = vector.shape_cast %162 : vector<2x8x16xf32> to vector<1x2x8x16xf32>
    %165 = vector.shape_cast %163 : vector<2x8x16xf32> to vector<1x2x8x16xf32>
    %166 = tpu.concatenate %164, %165 in 0 : vector<1x2x8x16xf32>, vector<1x2x8x16xf32> -> vector<2x2x8x16xf32>
    %167 = vector.shape_cast %166 : vector<2x2x8x16xf32> to vector<4x8x16xf32>
    %168 = vector.shape_cast %149 : vector<16x32xf32> to vector<2x8x32xf32>
    %169 = vector.extract_strided_slice %168 {offsets = [0, 0, 0], sizes = [2, 8, 16], strides = [1, 1, 1]} : vector<2x8x32xf32> to vector<2x8x16xf32>
    %170 = vector.extract_strided_slice %168 {offsets = [0, 0, 16], sizes = [2, 8, 16], strides = [1, 1, 1]} : vector<2x8x32xf32> to vector<2x8x16xf32>
    %171 = vector.shape_cast %169 : vector<2x8x16xf32> to vector<1x2x8x16xf32>
    %172 = vector.shape_cast %170 : vector<2x8x16xf32> to vector<1x2x8x16xf32>
    %173 = tpu.concatenate %171, %172 in 0 : vector<1x2x8x16xf32>, vector<1x2x8x16xf32> -> vector<2x2x8x16xf32>
    %174 = vector.shape_cast %173 : vector<2x2x8x16xf32> to vector<4x8x16xf32>
    %175 = arith.truncf %160 : vector<4x8x16xf32> to vector<4x8x16xbf16>
    %176 = arith.truncf %167 : vector<4x8x16xf32> to vector<4x8x16xbf16>
    "tpu.trace_start"() <{level = 10 : i32, message = "bqd,bkd->bqk"}> : () -> ()
    %cst_75 = arith.constant dense<0.000000e+00> : vector<4x8x8xf32>
    %177 = tpu.matmul %175, %176, %cst_75 {dimension_numbers = #tpu.dot_dimension_numbers<[2], [2], [1], [1], [0, 0, 0, 1, 1, 1], [0], [0]>} : vector<4x8x16xbf16>, vector<4x8x16xbf16>, vector<4x8x8xf32> -> vector<4x8x8xf32>
    "tpu.trace_stop"() : () -> ()
    %cst_76 = arith.constant 2.500000e-01 : f32
    %178 = vector.broadcast %cst_76 : f32 to vector<4x8x8xf32>
    %179 = arith.mulf %177, %178 : vector<4x8x8xf32>
    %180 = vector.shape_cast %179 : vector<4x8x8xf32> to vector<2x2x8x8xf32>
    %181 = vector.shape_cast %6 : vector<2x8x8xf32> to vector<1x2x8x8xf32>
    %182 = vector.broadcast %181 : vector<1x2x8x8xf32> to vector<2x2x8x8xf32>
    %183 = arith.addf %180, %182 : vector<2x2x8x8xf32>
    %cst_77 = arith.constant dense<0xFF800000> : vector<2x2x8xf32>
    %184 = vector.multi_reduction <maximumf>, %183, %cst_77 [3] : vector<2x2x8x8xf32> to vector<2x2x8xf32>
    %185 = vector.shape_cast %184 : vector<2x2x8xf32> to vector<2x2x8x1xf32>
    %186 = vector.broadcast %185 : vector<2x2x8x1xf32> to vector<2x2x8x8xf32>
    %187 = arith.subf %183, %186 : vector<2x2x8x8xf32>
    %188 = math.exp %187 : vector<2x2x8x8xf32>
    %cst_78 = arith.constant dense<0.000000e+00> : vector<2x2x8xf32>
    %189 = vector.multi_reduction <add>, %188, %cst_78 [3] : vector<2x2x8x8xf32> to vector<2x2x8xf32>
    %190 = vector.shape_cast %189 : vector<2x2x8xf32> to vector<2x2x8x1xf32>
    %191 = tpu.reciprocal %190 {approx = true} : vector<2x2x8x1xf32> -> vector<2x2x8x1xf32>
    %192 = vector.broadcast %191 : vector<2x2x8x1xf32> to vector<2x2x8x8xf32>
    %193 = arith.mulf %188, %192 : vector<2x2x8x8xf32>
    %194 = vector.shape_cast %193 : vector<2x2x8x8xf32> to vector<1x2x2x8x8xf32>
    %c0_79 = arith.constant 0 : index
    %c0_80 = arith.constant 0 : index
    %c0_81 = arith.constant 0 : index
    %c0_82 = arith.constant 0 : index
    %c0_83 = arith.constant 0 : index
    %195 = vector.load %arg33[%c0_79, %c0_80, %c0_81, %c0_82, %c0_83] : memref<1x2x2x8x8xf32, #tpu.memory_space<vmem>>, vector<1x2x2x8x8xf32>
    tpu.vector_store %arg33[%c0_79, %c0_80, %c0_81, %c0_82, %c0_83], %194 {strides = array<i32>} : memref<1x2x2x8x8xf32, #tpu.memory_space<vmem>>, vector<1x2x2x8x8xf32>,
    %196 = vector.shape_cast %193 : vector<2x2x8x8xf32> to vector<4x8x8xf32>
    %197 = arith.truncf %196 : vector<4x8x8xf32> to vector<4x8x8xbf16>
    %198 = arith.truncf %174 : vector<4x8x16xf32> to vector<4x8x16xbf16>
    "tpu.trace_start"() <{level = 10 : i32, message = "bqk,bkd->bqd"}> : () -> ()
    %cst_84 = arith.constant dense<0.000000e+00> : vector<4x8x16xf32>
    %199 = tpu.matmul %197, %198, %cst_84 {dimension_numbers = #tpu.dot_dimension_numbers<[2], [1], [1], [2], [0, 0, 0, 1, 1, 2], [0], [0]>} : vector<4x8x8xbf16>, vector<4x8x16xbf16>, vector<4x8x16xf32> -> vector<4x8x16xf32>
    "tpu.trace_stop"() : () -> ()
    %200 = vector.shape_cast %199 : vector<4x8x16xf32> to vector<2x2x8x16xf32>
    %201 = vector.extract_strided_slice %200 {offsets = [0, 0, 0, 0], sizes = [1, 2, 8, 16], strides = [1, 1, 1, 1]} : vector<2x2x8x16xf32> to vector<1x2x8x16xf32>
    %202 = vector.shape_cast %201 : vector<1x2x8x16xf32> to vector<2x8x16xf32>
    %203 = vector.extract_strided_slice %200 {offsets = [1, 0, 0, 0], sizes = [1, 2, 8, 16], strides = [1, 1, 1, 1]} : vector<2x2x8x16xf32> to vector<1x2x8x16xf32>
    %204 = vector.shape_cast %203 : vector<1x2x8x16xf32> to vector<2x8x16xf32>
    %205 = tpu.concatenate %202, %204 in 2 : vector<2x8x16xf32>, vector<2x8x16xf32> -> vector<2x8x32xf32>
    %206 = vector.shape_cast %205 : vector<2x8x32xf32> to vector<16x32xf32>
    %207 = arith.truncf %206 : vector<16x32xf32> to vector<16x32xbf16>
    %cst_85 = arith.constant dense<0.000000e+00> : vector<16x32xf32>
    %208 = tpu.matmul %207, %151, %cst_85 {dimension_numbers = #tpu.dot_dimension_numbers<[1], [0], [0], [1], [0, 0, 1, 1], [], []>} : vector<16x32xbf16>, vector<32x32xbf16>, vector<16x32xf32> -> vector<16x32xf32>
    %209 = vector.broadcast %153 : vector<1x32xf32> to vector<16x32xf32>
    %210 = arith.addf %208, %209 : vector<16x32xf32>
    %211 = arith.addf %210, %131 : vector<16x32xf32>
    %c0_86 = arith.constant 0 : index
    %c0_87 = arith.constant 0 : index
    %c0_88 = arith.constant 0 : index
    %212 = vector.load %arg21[%c0_86, %c0_87, %c0_88] : memref<1x1x32xf32, #tpu.memory_space<vmem>>, vector<1x1x32xf32>
    %213 = vector.shape_cast %212 : vector<1x1x32xf32> to vector<1x32xf32>
    %c0_89 = arith.constant 0 : index
    %c0_90 = arith.constant 0 : index
    %c0_91 = arith.constant 0 : index
    %214 = vector.load %arg22[%c0_89, %c0_90, %c0_91] : memref<1x1x32xf32, #tpu.memory_space<vmem>>, vector<1x1x32xf32>
    %215 = vector.shape_cast %214 : vector<1x1x32xf32> to vector<1x32xf32>
    %cst_92 = arith.constant dense<0.000000e+00> : vector<16xf32>
    %216 = vector.multi_reduction <add>, %211, %cst_92 [1] : vector<16x32xf32> to vector<16xf32>
    %217 = vector.shape_cast %216 : vector<16xf32> to vector<16x1xf32>
    %cst_93 = arith.constant 3.200000e+01 : f32
    %218 = vector.broadcast %cst_93 : f32 to vector<16x1xf32>
    %219 = arith.divf %217, %218 : vector<16x1xf32>
    %220 = vector.broadcast %219 : vector<16x1xf32> to vector<16x32xf32>
    %221 = arith.subf %211, %220 : vector<16x32xf32>
    %222 = arith.mulf %221, %221 : vector<16x32xf32>
    %cst_94 = arith.constant dense<0.000000e+00> : vector<16xf32>
    %223 = vector.multi_reduction <add>, %222, %cst_94 [1] : vector<16x32xf32> to vector<16xf32>
    %224 = vector.shape_cast %223 : vector<16xf32> to vector<16x1xf32>
    %cst_95 = arith.constant 3.200000e+01 : f32
    %225 = vector.broadcast %cst_95 : f32 to vector<16x1xf32>
    %226 = arith.divf %224, %225 : vector<16x1xf32>
    %227 = vector.broadcast %219 : vector<16x1xf32> to vector<16x32xf32>
    %228 = arith.subf %211, %227 : vector<16x32xf32>
    %cst_96 = arith.constant 9.99999974E-6 : f32
    %229 = vector.broadcast %cst_96 : f32 to vector<16x1xf32>
    %230 = arith.addf %226, %229 : vector<16x1xf32>
    %231 = math.rsqrt %230 : vector<16x1xf32>
    %232 = vector.broadcast %231 : vector<16x1xf32> to vector<16x32xf32>
    %233 = arith.mulf %228, %232 : vector<16x32xf32>
    %234 = vector.broadcast %213 : vector<1x32xf32> to vector<16x32xf32>
    %235 = arith.mulf %233, %234 : vector<16x32xf32>
    %236 = vector.broadcast %215 : vector<1x32xf32> to vector<16x32xf32>
    %237 = arith.addf %235, %236 : vector<16x32xf32>
    %238 = arith.truncf %237 : vector<16x32xf32> to vector<16x32xbf16>
    %c0_97 = arith.constant 0 : index
    %c0_98 = arith.constant 0 : index
    %c0_99 = arith.constant 0 : index
    %239 = vector.load %arg23[%c0_97, %c0_98, %c0_99] : memref<1x32x128xbf16, #tpu.memory_space<vmem>>, vector<1x32x128xbf16>
    %240 = vector.shape_cast %239 : vector<1x32x128xbf16> to vector<32x128xbf16>
    %cst_100 = arith.constant dense<0.000000e+00> : vector<16x128xf32>
    %241 = tpu.matmul %238, %240, %cst_100 {dimension_numbers = #tpu.dot_dimension_numbers<[1], [0], [0], [1], [0, 0, 1, 1], [], []>} : vector<16x32xbf16>, vector<32x128xbf16>, vector<16x128xf32> -> vector<16x128xf32>
    %c0_101 = arith.constant 0 : index
    %c0_102 = arith.constant 0 : index
    %c0_103 = arith.constant 0 : index
    %242 = vector.load %arg24[%c0_101, %c0_102, %c0_103] : memref<1x1x128xf32, #tpu.memory_space<vmem>>, vector<1x1x128xf32>
    %243 = vector.shape_cast %242 : vector<1x1x128xf32> to vector<1x128xf32>
    %244 = vector.broadcast %243 : vector<1x128xf32> to vector<16x128xf32>
    %245 = arith.addf %241, %244 : vector<16x128xf32>
    %cst_104 = arith.constant 0.000000e+00 : f32
    %246 = vector.broadcast %cst_104 : f32 to vector<16x128xf32>
    %247 = arith.maximumf %245, %246 : vector<16x128xf32>
    %248 = arith.truncf %247 : vector<16x128xf32> to vector<16x128xbf16>
    %c0_105 = arith.constant 0 : index
    %c0_106 = arith.constant 0 : index
    %c0_107 = arith.constant 0 : index
    %249 = vector.load %arg25[%c0_105, %c0_106, %c0_107] : memref<1x128x32xbf16, #tpu.memory_space<vmem>>, vector<1x128x32xbf16>
    %250 = vector.shape_cast %249 : vector<1x128x32xbf16> to vector<128x32xbf16>
    %cst_108 = arith.constant dense<0.000000e+00> : vector<16x32xf32>
    %251 = tpu.matmul %248, %250, %cst_108 {dimension_numbers = #tpu.dot_dimension_numbers<[1], [0], [0], [1], [0, 0, 1, 1], [], []>} : vector<16x128xbf16>, vector<128x32xbf16>, vector<16x32xf32> -> vector<16x32xf32>
    %c0_109 = arith.constant 0 : index
    %c0_110 = arith.constant 0 : index
    %c0_111 = arith.constant 0 : index
    %252 = vector.load %arg26[%c0_109, %c0_110, %c0_111] : memref<1x1x32xf32, #tpu.memory_space<vmem>>, vector<1x1x32xf32>
    %253 = vector.shape_cast %252 : vector<1x1x32xf32> to vector<1x32xf32>
    %254 = vector.broadcast %253 : vector<1x32xf32> to vector<16x32xf32>
    %255 = arith.addf %251, %254 : vector<16x32xf32>
    %256 = arith.addf %255, %237 : vector<16x32xf32>
    %c0_112 = arith.constant 0 : index
    %c0_113 = arith.constant 0 : index
    %c0_114 = arith.constant 0 : index
    %257 = vector.load %arg27[%c0_112, %c0_113, %c0_114] : memref<1x1x32xf32, #tpu.memory_space<vmem>>, vector<1x1x32xf32>
    %258 = vector.shape_cast %257 : vector<1x1x32xf32> to vector<1x32xf32>
    %c0_115 = arith.constant 0 : index
    %c0_116 = arith.constant 0 : index
    %c0_117 = arith.constant 0 : index
    %259 = vector.load %arg28[%c0_115, %c0_116, %c0_117] : memref<1x1x32xf32, #tpu.memory_space<vmem>>, vector<1x1x32xf32>
    %260 = vector.shape_cast %259 : vector<1x1x32xf32> to vector<1x32xf32>
    %cst_118 = arith.constant dense<0.000000e+00> : vector<16xf32>
    %261 = vector.multi_reduction <add>, %256, %cst_118 [1] : vector<16x32xf32> to vector<16xf32>
    %262 = vector.shape_cast %261 : vector<16xf32> to vector<16x1xf32>
    %cst_119 = arith.constant 3.200000e+01 : f32
    %263 = vector.broadcast %cst_119 : f32 to vector<16x1xf32>
    %264 = arith.divf %262, %263 : vector<16x1xf32>
    %265 = vector.broadcast %264 : vector<16x1xf32> to vector<16x32xf32>
    %266 = arith.subf %256, %265 : vector<16x32xf32>
    %267 = arith.mulf %266, %266 : vector<16x32xf32>
    %cst_120 = arith.constant dense<0.000000e+00> : vector<16xf32>
    %268 = vector.multi_reduction <add>, %267, %cst_120 [1] : vector<16x32xf32> to vector<16xf32>
    %269 = vector.shape_cast %268 : vector<16xf32> to vector<16x1xf32>
    %cst_121 = arith.constant 3.200000e+01 : f32
    %270 = vector.broadcast %cst_121 : f32 to vector<16x1xf32>
    %271 = arith.divf %269, %270 : vector<16x1xf32>
    %272 = vector.broadcast %264 : vector<16x1xf32> to vector<16x32xf32>
    %273 = arith.subf %256, %272 : vector<16x32xf32>
    %cst_122 = arith.constant 9.99999974E-6 : f32
    %274 = vector.broadcast %cst_122 : f32 to vector<16x1xf32>
    %275 = arith.addf %271, %274 : vector<16x1xf32>
    %276 = math.rsqrt %275 : vector<16x1xf32>
    %277 = vector.broadcast %276 : vector<16x1xf32> to vector<16x32xf32>
    %278 = arith.mulf %273, %277 : vector<16x32xf32>
    %279 = vector.broadcast %258 : vector<1x32xf32> to vector<16x32xf32>
    %280 = arith.mulf %278, %279 : vector<16x32xf32>
    %281 = vector.broadcast %260 : vector<1x32xf32> to vector<16x32xf32>
    %282 = arith.addf %280, %281 : vector<16x32xf32>
    %c0_123 = arith.constant 0 : index
    %c0_124 = arith.constant 0 : index
    %283 = vector.load %arg34[%c0_123, %c0_124] : memref<16x32xf32, #tpu.memory_space<vmem>>, vector<16x32xf32>
    tpu.vector_store %arg34[%c0_123, %c0_124], %282 {strides = array<i32>} : memref<16x32xf32, #tpu.memory_space<vmem>>, vector<16x32xf32>,
    %c1_i32 = arith.constant 1 : i32
    %284 = arith.cmpi eq, %arg0, %c1_i32 : i32
    %285 = arith.extui %284 : i1 to i32
    %c0_i32_125 = arith.constant 0 : i32
    %286 = arith.cmpi ne, %285, %c0_i32_125 : i32
    scf.if %286 {
      %c0_126 = arith.constant 0 : index
      %c0_127 = arith.constant 0 : index
      %287 = vector.load %arg29[%c0_126, %c0_127] : memref<1x32xf32, #tpu.memory_space<vmem>>, vector<1x32xf32>
      %c0_128 = arith.constant 0 : index
      %c0_129 = arith.constant 0 : index
      %288 = vector.load %arg30[%c0_128, %c0_129] : memref<1x32xf32, #tpu.memory_space<vmem>>, vector<1x32xf32>
      %cst_130 = arith.constant dense<0.000000e+00> : vector<16xf32>
      %289 = vector.multi_reduction <add>, %282, %cst_130 [1] : vector<16x32xf32> to vector<16xf32>
      %290 = vector.shape_cast %289 : vector<16xf32> to vector<16x1xf32>
      %cst_131 = arith.constant 3.200000e+01 : f32
      %291 = vector.broadcast %cst_131 : f32 to vector<16x1xf32>
      %292 = arith.divf %290, %291 : vector<16x1xf32>
      %293 = vector.broadcast %292 : vector<16x1xf32> to vector<16x32xf32>
      %294 = arith.subf %282, %293 : vector<16x32xf32>
      %295 = arith.mulf %294, %294 : vector<16x32xf32>
      %cst_132 = arith.constant dense<0.000000e+00> : vector<16xf32>
      %296 = vector.multi_reduction <add>, %295, %cst_132 [1] : vector<16x32xf32> to vector<16xf32>
      %297 = vector.shape_cast %296 : vector<16xf32> to vector<16x1xf32>
      %cst_133 = arith.constant 3.200000e+01 : f32
      %298 = vector.broadcast %cst_133 : f32 to vector<16x1xf32>
      %299 = arith.divf %297, %298 : vector<16x1xf32>
      %300 = vector.broadcast %292 : vector<16x1xf32> to vector<16x32xf32>
      %301 = arith.subf %282, %300 : vector<16x32xf32>
      %cst_134 = arith.constant 9.99999974E-6 : f32
      %302 = vector.broadcast %cst_134 : f32 to vector<16x1xf32>
      %303 = arith.addf %299, %302 : vector<16x1xf32>
      %304 = math.rsqrt %303 : vector<16x1xf32>
      %305 = vector.broadcast %304 : vector<16x1xf32> to vector<16x32xf32>
      %306 = arith.mulf %301, %305 : vector<16x32xf32>
      %307 = vector.broadcast %287 : vector<1x32xf32> to vector<16x32xf32>
      %308 = arith.mulf %306, %307 : vector<16x32xf32>
      %309 = vector.broadcast %288 : vector<1x32xf32> to vector<16x32xf32>
      %310 = arith.addf %308, %309 : vector<16x32xf32>
      %c0_135 = arith.constant 0 : index
      %c0_136 = arith.constant 0 : index
      %311 = vector.load %arg31[%c0_135, %c0_136] : memref<16x32xf32, #tpu.memory_space<vmem>>, vector<16x32xf32>
      tpu.vector_store %arg31[%c0_135, %c0_136], %310 {strides = array<i32>} : memref<16x32xf32, #tpu.memory_space<vmem>>, vector<16x32xf32>,
    } else {
    }
    return
  }
  func.func @transform_0(%arg0: i32) -> (i32, i32) {
    %c0_i32 = arith.constant 0 : i32
    %c0_i32_0 = arith.constant 0 : i32
    %c0_i32_1 = arith.constant 0 : i32
    return %c0_i32, %c0_i32_0 : i32, i32
  }
  func.func @transform_1(%arg0: i32) -> (i32, i32) {
    %c0_i32 = arith.constant 0 : i32
    %c0_i32_0 = arith.constant 0 : i32
    %c0_i32_1 = arith.constant 0 : i32
    return %c0_i32, %c0_i32_0 : i32, i32
  }
  func.func @transform_2(%arg0: i32) -> (i32, i32) {
    %c0_i32 = arith.constant 0 : i32
    %c0_i32_0 = arith.constant 0 : i32
    %c0_i32_1 = arith.constant 0 : i32
    return %c0_i32, %c0_i32_0 : i32, i32
  }
  func.func @transform_3(%arg0: i32) -> (i32, i32) {
    %c0_i32 = arith.constant 0 : i32
    %c0_i32_0 = arith.constant 0 : i32
    %c0_i32_1 = arith.constant 0 : i32
    return %c0_i32, %c0_i32_0 : i32, i32
  }
  func.func @transform_4(%arg0: i32) -> (i32, i32, i32) {
    %c0_i32 = arith.constant 0 : i32
    %c0_i32_0 = arith.constant 0 : i32
    %c0_i32_1 = arith.constant 0 : i32
    %c0_i32_2 = arith.constant 0 : i32
    return %c0_i32, %c0_i32_0, %c0_i32_1 : i32, i32, i32
  }
  func.func @transform_5(%arg0: i32) -> (i32, i32, i32) {
    %c0_i32 = arith.constant 0 : i32
    %c0_i32_0 = arith.constant 0 : i32
    %c0_i32_1 = arith.constant 0 : i32
    %c0_i32_2 = arith.constant 0 : i32
    return %c0_i32, %c0_i32_0, %c0_i32_1 : i32, i32, i32
  }
  func.func @transform_6(%arg0: i32) -> (i32, i32, i32) {
    %c0_i32 = arith.constant 0 : i32
    %c0_i32_0 = arith.constant 0 : i32
    %c0_i32_1 = arith.constant 0 : i32
    return %arg0, %c0_i32, %c0_i32_0 : i32, i32, i32
  }
  func.func @transform_7(%arg0: i32) -> (i32, i32, i32) {
    %c0_i32 = arith.constant 0 : i32
    %c0_i32_0 = arith.constant 0 : i32
    %c0_i32_1 = arith.constant 0 : i32
    return %arg0, %c0_i32, %c0_i32_0 : i32, i32, i32
  }
  func.func @transform_8(%arg0: i32) -> (i32, i32, i32) {
    %c0_i32 = arith.constant 0 : i32
    %c0_i32_0 = arith.constant 0 : i32
    %c0_i32_1 = arith.constant 0 : i32
    return %arg0, %c0_i32, %c0_i32_0 : i32, i32, i32
  }
  func.func @transform_9(%arg0: i32) -> (i32, i32, i32) {
    %c0_i32 = arith.constant 0 : i32
    %c0_i32_0 = arith.constant 0 : i32
    %c0_i32_1 = arith.constant 0 : i32
    return %arg0, %c0_i32, %c0_i32_0 : i32, i32, i32
  }
  func.func @transform_10(%arg0: i32) -> (i32, i32, i32) {
    %c0_i32 = arith.constant 0 : i32
    %c0_i32_0 = arith.constant 0 : i32
    %c0_i32_1 = arith.constant 0 : i32
    return %arg0, %c0_i32, %c0_i32_0 : i32, i32, i32
  }
  func.func @transform_11(%arg0: i32) -> (i32, i32, i32) {
    %c0_i32 = arith.constant 0 : i32
    %c0_i32_0 = arith.constant 0 : i32
    %c0_i32_1 = arith.constant 0 : i32
    return %arg0, %c0_i32, %c0_i32_0 : i32, i32, i32
  }
  func.func @transform_12(%arg0: i32) -> (i32, i32, i32) {
    %c0_i32 = arith.constant 0 : i32
    %c0_i32_0 = arith.constant 0 : i32
    %c0_i32_1 = arith.constant 0 : i32
    return %arg0, %c0_i32, %c0_i32_0 : i32, i32, i32
  }
  func.func @transform_13(%arg0: i32) -> (i32, i32, i32) {
    %c0_i32 = arith.constant 0 : i32
    %c0_i32_0 = arith.constant 0 : i32
    %c0_i32_1 = arith.constant 0 : i32
    return %arg0, %c0_i32, %c0_i32_0 : i32, i32, i32
  }
  func.func @transform_14(%arg0: i32) -> (i32, i32, i32) {
    %c0_i32 = arith.constant 0 : i32
    %c0_i32_0 = arith.constant 0 : i32
    %c0_i32_1 = arith.constant 0 : i32
    return %arg0, %c0_i32, %c0_i32_0 : i32, i32, i32
  }
  func.func @transform_15(%arg0: i32) -> (i32, i32, i32) {
    %c0_i32 = arith.constant 0 : i32
    %c0_i32_0 = arith.constant 0 : i32
    %c0_i32_1 = arith.constant 0 : i32
    return %arg0, %c0_i32, %c0_i32_0 : i32, i32, i32
  }
  func.func @transform_16(%arg0: i32) -> (i32, i32, i32) {
    %c0_i32 = arith.constant 0 : i32
    %c0_i32_0 = arith.constant 0 : i32
    %c0_i32_1 = arith.constant 0 : i32
    return %arg0, %c0_i32, %c0_i32_0 : i32, i32, i32
  }
  func.func @transform_17(%arg0: i32) -> (i32, i32, i32) {
    %c0_i32 = arith.constant 0 : i32
    %c0_i32_0 = arith.constant 0 : i32
    %c0_i32_1 = arith.constant 0 : i32
    return %arg0, %c0_i32, %c0_i32_0 : i32, i32, i32
  }
  func.func @transform_18(%arg0: i32) -> (i32, i32, i32) {
    %c0_i32 = arith.constant 0 : i32
    %c0_i32_0 = arith.constant 0 : i32
    %c0_i32_1 = arith.constant 0 : i32
    return %arg0, %c0_i32, %c0_i32_0 : i32, i32, i32
  }
  func.func @transform_19(%arg0: i32) -> (i32, i32, i32) {
    %c0_i32 = arith.constant 0 : i32
    %c0_i32_0 = arith.constant 0 : i32
    %c0_i32_1 = arith.constant 0 : i32
    return %arg0, %c0_i32, %c0_i32_0 : i32, i32, i32
  }
  func.func @transform_20(%arg0: i32) -> (i32, i32, i32) {
    %c0_i32 = arith.constant 0 : i32
    %c0_i32_0 = arith.constant 0 : i32
    %c0_i32_1 = arith.constant 0 : i32
    return %arg0, %c0_i32, %c0_i32_0 : i32, i32, i32
  }
  func.func @transform_21(%arg0: i32) -> (i32, i32, i32) {
    %c0_i32 = arith.constant 0 : i32
    %c0_i32_0 = arith.constant 0 : i32
    %c0_i32_1 = arith.constant 0 : i32
    return %arg0, %c0_i32, %c0_i32_0 : i32, i32, i32
  }
  func.func @transform_22(%arg0: i32) -> (i32, i32, i32) {
    %c0_i32 = arith.constant 0 : i32
    %c0_i32_0 = arith.constant 0 : i32
    %c0_i32_1 = arith.constant 0 : i32
    return %arg0, %c0_i32, %c0_i32_0 : i32, i32, i32
  }
  func.func @transform_23(%arg0: i32) -> (i32, i32, i32) {
    %c0_i32 = arith.constant 0 : i32
    %c0_i32_0 = arith.constant 0 : i32
    %c0_i32_1 = arith.constant 0 : i32
    return %arg0, %c0_i32, %c0_i32_0 : i32, i32, i32
  }
  func.func @transform_24(%arg0: i32) -> (i32, i32, i32) {
    %c0_i32 = arith.constant 0 : i32
    %c0_i32_0 = arith.constant 0 : i32
    %c0_i32_1 = arith.constant 0 : i32
    return %arg0, %c0_i32, %c0_i32_0 : i32, i32, i32
  }
  func.func @transform_25(%arg0: i32) -> (i32, i32, i32) {
    %c0_i32 = arith.constant 0 : i32
    %c0_i32_0 = arith.constant 0 : i32
    %c0_i32_1 = arith.constant 0 : i32
    return %arg0, %c0_i32, %c0_i32_0 : i32, i32, i32
  }
  func.func @transform_26(%arg0: i32) -> (i32, i32, i32) {
    %c0_i32 = arith.constant 0 : i32
    %c0_i32_0 = arith.constant 0 : i32
    %c0_i32_1 = arith.constant 0 : i32
    return %arg0, %c0_i32, %c0_i32_0 : i32, i32, i32
  }
  func.func @transform_27(%arg0: i32) -> (i32, i32, i32) {
    %c0_i32 = arith.constant 0 : i32
    %c0_i32_0 = arith.constant 0 : i32
    %c0_i32_1 = arith.constant 0 : i32
    return %arg0, %c0_i32, %c0_i32_0 : i32, i32, i32
  }
  func.func @transform_28(%arg0: i32) -> (i32, i32) {
    %c0_i32 = arith.constant 0 : i32
    %c0_i32_0 = arith.constant 0 : i32
    %c0_i32_1 = arith.constant 0 : i32
    return %c0_i32, %c0_i32_0 : i32, i32
  }
  func.func @transform_29(%arg0: i32) -> (i32, i32) {
    %c0_i32 = arith.constant 0 : i32
    %c0_i32_0 = arith.constant 0 : i32
    %c0_i32_1 = arith.constant 0 : i32
    return %c0_i32, %c0_i32_0 : i32, i32
  }
  func.func @transform_30(%arg0: i32) -> (i32, i32) {
    %c0_i32 = arith.constant 0 : i32
    %c0_i32_0 = arith.constant 0 : i32
    %c0_i32_1 = arith.constant 0 : i32
    return %c0_i32, %c0_i32_0 : i32, i32
  }
  func.func @transform_31(%arg0: i32) -> (i32, i32, i32, i32, i32) {
    %c0_i32 = arith.constant 0 : i32
    %c0_i32_0 = arith.constant 0 : i32
    %c0_i32_1 = arith.constant 0 : i32
    %c0_i32_2 = arith.constant 0 : i32
    %c0_i32_3 = arith.constant 0 : i32
    return %arg0, %c0_i32, %c0_i32_0, %c0_i32_1, %c0_i32_2 : i32, i32, i32, i32, i32
  }
  func.func @transform_32(%arg0: i32) -> (i32, i32, i32, i32, i32) {
    %c0_i32 = arith.constant 0 : i32
    %c0_i32_0 = arith.constant 0 : i32
    %c0_i32_1 = arith.constant 0 : i32
    %c0_i32_2 = arith.constant 0 : i32
    %c0_i32_3 = arith.constant 0 : i32
    return %arg0, %c0_i32, %c0_i32_0, %c0_i32_1, %c0_i32_2 : i32, i32, i32, i32, i32
  }
}

</mosaic_0001>

<llo_original>
// kernel: decoder_forward.1
$region0: #{decoder_forward.1}
  #allocation0 [shape = 'u32[]', space=smem, size = 0x4, offset = 0x4, fixed_abs, tag = 'smem constant byte address 0x4 - core index']
  #allocation1 [shape = 'u32[144,128]{1,0:T(1,128)}', space=vmem, size = 0x12000, scoped, tag = 'internal scratch']
  #allocation2 [shape = 'f32[16,32]{1,0:T(8,128)}', space=vmem, size = 0x2000, scoped, tag = 'scratch operand']
  #allocation3 [shape = 'f32[16,32]{1,0:T(8,128)}', space=vmem, size = 0x2000, scoped, tag = 'scratch operand']
  %s0 = inlined_call_operand.smem [shape: u32[33], index: -1, kind: input, shape index: {}]
  %s1 = sld [smem:[%s0]]
  %s2 = scalar_lea.smem %s0, 1
  %s3 = sld [smem:[%s2]]
  %s4 = scalar_lea.smem %s0, 2
  %s5 = sld [smem:[%s4]]
  %s6 = scalar_lea.smem %s0, 3
  %s7 = sld [smem:[%s6]]
  %s8 = scalar_lea.smem %s0, 4
  %s9 = sld [smem:[%s8]]
  %s10 = scalar_lea.smem %s0, 5
  %s11 = sld [smem:[%s10]]
  %s12 = scalar_lea.smem %s0, 6
  %s13 = sld [smem:[%s12]]
  %s14 = scalar_lea.smem %s0, 7
  %s15 = sld [smem:[%s14]]
  %s16 = scalar_lea.smem %s0, 8
  %s17 = sld [smem:[%s16]]
  %s18 = scalar_lea.smem %s0, 9
  %s19 = sld [smem:[%s18]]
  %s20 = scalar_lea.smem %s0, 10
  %s21 = sld [smem:[%s20]]
  %s22 = scalar_lea.smem %s0, 11
  %s23 = sld [smem:[%s22]]
  %s24 = scalar_lea.smem %s0, 12
  %s25 = sld [smem:[%s24]]
  %s26 = scalar_lea.smem %s0, 13
  %s27 = sld [smem:[%s26]]
  %s28 = scalar_lea.smem %s0, 14
  %s29 = sld [smem:[%s28]]
  %s30 = scalar_lea.smem %s0, 15
  %s31 = sld [smem:[%s30]]
  %s32 = scalar_lea.smem %s0, 16
  %s33 = sld [smem:[%s32]]
  %s34 = scalar_lea.smem %s0, 17
  %s35 = sld [smem:[%s34]]
  %s36 = scalar_lea.smem %s0, 18
  %s37 = sld [smem:[%s36]]
  %s38 = scalar_lea.smem %s0, 19
  %s39 = sld [smem:[%s38]]
  %s40 = scalar_lea.smem %s0, 20
  %s41 = sld [smem:[%s40]]
  %s42 = scalar_lea.smem %s0, 21
  %s43 = sld [smem:[%s42]]
  %s44 = scalar_lea.smem %s0, 22
  %s45 = sld [smem:[%s44]]
  %s46 = scalar_lea.smem %s0, 23
  %s47 = sld [smem:[%s46]]
  %s48 = scalar_lea.smem %s0, 24
  %s49 = sld [smem:[%s48]]
  %s50 = scalar_lea.smem %s0, 25
  %s51 = sld [smem:[%s50]]
  %s52 = scalar_lea.smem %s0, 26
  %s53 = sld [smem:[%s52]]
  %s54 = scalar_lea.smem %s0, 27
  %s55 = sld [smem:[%s54]]
  %s56 = scalar_lea.smem %s0, 28
  %s57 = sld [smem:[%s56]]
  %s58 = scalar_lea.smem %s0, 29
  %s59 = sld [smem:[%s58]]
  %s60 = scalar_lea.smem %s0, 30
  %s61 = sld [smem:[%s60]]
  %s62 = scalar_lea.smem %s0, 31
  %s63 = sld [smem:[%s62]]
  %s64 = scalar_lea.smem %s0, 32
  %s65 = sld [smem:[%s64]]
  %66 = xla_tuple %s61, %s63, %s65
  %s67 = sld [smem:[#allocation0]]
  $region177: #{decoder_forward.1} parent=0
    _
  %s69 = ssub.s32 1, %s67
  %s70 = scalar_select 0, %s69, %s67
  $region1: #{decoder_forward.1} parent=0
    #allocation4 [shape = 'u8[8192]{0}', space=vmem, size = 0x2000, scoped, tag = 'output window, operand 0, single buffered']
    #allocation5 [shape = 's32[2]{0}', space=sflag, size = 0x8, scoped, tag = 'scoped memory for decoder_forward.1']
    %71 = vsyncpa [#allocation5], 0
    loop: start=0, step=1, limit=4
    $region2: #{decoder_forward.1} parent=1 // loop_pre_header
      _
    $region3: #{decoder_forward.1} parent=1 // loop_header
      %s73 = sphi 0, %s77
      %p74 = scmp.ge.s32.totalorder %s73, 4
      %s81 = sphi 0, %s81
      %s83 = sphi 0, %s81
      %s84 = sphi 0, %s83
      %s98 = sphi 0, %s84
      %s102 = sphi 0, %s102
      %s104 = sphi 0, %s102
      %s105 = sphi 0, %s104
      %s119 = sphi 0, %s105
      %s123 = sphi 0, %s123
      %s125 = sphi 0, %s123
      %s126 = sphi 0, %s125
      %s140 = sphi 0, %s126
      %s144 = sphi 0, %s144
      %s146 = sphi 0, %s144
      %s147 = sphi 0, %s146
      %s161 = sphi 0, %s147
      %s165 = sphi 0, %s165
      %s167 = sphi 0, %s165
      %s168 = sphi 0, %s167
      %s182 = sphi 0, %s168
      %s186 = sphi 0, %s186
      %s188 = sphi 0, %s186
      %s189 = sphi 0, %s188
      %s203 = sphi 0, %s189
      %s209 = sphi 0, %s211
      %s212 = sphi 0, %s209
      %s213 = sphi 0, %s212
      %s229 = sphi 0, %s213
      %s235 = sphi 0, %s237
      %s238 = sphi 0, %s235
      %s239 = sphi 0, %s238
      %s255 = sphi 0, %s239
      %s261 = sphi 0, %s263
      %s264 = sphi 0, %s261
      %s265 = sphi 0, %s264
      %s281 = sphi 0, %s265
      %s287 = sphi 0, %s289
      %s290 = sphi 0, %s287
      %s291 = sphi 0, %s290
      %s307 = sphi 0, %s291
      %s313 = sphi 0, %s315
      %s316 = sphi 0, %s313
      %s317 = sphi 0, %s316
      %s333 = sphi 0, %s317
      %s339 = sphi 0, %s341
      %s342 = sphi 0, %s339
      %s343 = sphi 0, %s342
      %s359 = sphi 0, %s343
      %s365 = sphi 0, %s367
      %s368 = sphi 0, %s365
      %s369 = sphi 0, %s368
      %s385 = sphi 0, %s369
      %s391 = sphi 0, %s393
      %s394 = sphi 0, %s391
      %s395 = sphi 0, %s394
      %s411 = sphi 0, %s395
      %s417 = sphi 0, %s419
      %s420 = sphi 0, %s417
      %s421 = sphi 0, %s420
      %s437 = sphi 0, %s421
      %s443 = sphi 0, %s445
      %s446 = sphi 0, %s443
      %s447 = sphi 0, %s446
      %s463 = sphi 0, %s447
      %s469 = sphi 0, %s471
      %s472 = sphi 0, %s469
      %s473 = sphi 0, %s472
      %s489 = sphi 0, %s473
      %s495 = sphi 0, %s497
      %s498 = sphi 0, %s495
      %s499 = sphi 0, %s498
      %s515 = sphi 0, %s499
      %s521 = sphi 0, %s523
      %s524 = sphi 0, %s521
      %s525 = sphi 0, %s524
      %s541 = sphi 0, %s525
      %s547 = sphi 0, %s549
      %s550 = sphi 0, %s547
      %s551 = sphi 0, %s550
      %s567 = sphi 0, %s551
      %s573 = sphi 0, %s575
      %s576 = sphi 0, %s573
      %s577 = sphi 0, %s576
      %s593 = sphi 0, %s577
      %s599 = sphi 0, %s601
      %s602 = sphi 0, %s599
      %s603 = sphi 0, %s602
      %s619 = sphi 0, %s603
      %s625 = sphi 0, %s627
      %s628 = sphi 0, %s625
      %s629 = sphi 0, %s628
      %s645 = sphi 0, %s629
      %s651 = sphi 0, %s653
      %s654 = sphi 0, %s651
      %s655 = sphi 0, %s654
      %s671 = sphi 0, %s655
      %s677 = sphi 0, %s679
      %s680 = sphi 0, %s677
      %s681 = sphi 0, %s680
      %s697 = sphi 0, %s681
      %s703 = sphi 0, %s705
      %s706 = sphi 0, %s703
      %s707 = sphi 0, %s706
      %s723 = sphi 0, %s707
      %s729 = sphi 0, %s731
      %s732 = sphi 0, %s729
      %s733 = sphi 0, %s732
      %s749 = sphi 0, %s733
      %s755 = sphi 0, %s757
      %s758 = sphi 0, %s755
      %s759 = sphi 0, %s758
      %s775 = sphi 0, %s759
      %s779 = sphi 0, %s779
      %s781 = sphi 0, %s779
      %s782 = sphi 0, %s781
      %s796 = sphi 0, %s782
      %s800 = sphi 0, %s800
      %s802 = sphi 0, %s800
      %s803 = sphi 0, %s802
      %s817 = sphi 0, %s803
      %s821 = sphi 0, %s821
      %s823 = sphi 0, %s821
      %s824 = sphi 0, %s823
      %s838 = sphi 0, %s824
      %s844 = sphi 0, %s846
      %s847 = sphi 0, %s844
      %s848 = sphi 0, %s847
      %s864 = sphi 0, %s848
      %s870 = sphi 0, %s872
      %s873 = sphi 0, %s870
      %s874 = sphi 0, %s873
      %s890 = sphi 0, %s874
    $region4: #{decoder_forward.1} parent=1 // loop_header_branch
      %76 = sbr.rel (%p74) target = $region8
    $region5: #{decoder_forward.1} parent=1 // loop_body
      %s78 = ssub.s32 %s73, 1
      %s79 = ssub.s32 %s73, 2
      %s80 = sadd.s32 %s73, 1
      %s82 = sadd.s32 %s81, 1
      %p85 = scmp.eq.s32.totalorder %s73, 1
      %p86 = scmp.ne.s32.totalorder %s81, %s83
      %p87 = scmp.eq.s32.totalorder %s73, 0
      %p88 = por %p86, %p87
      %p89 = scmp.ne.s32.totalorder %s81, %s83
      %p90 = scmp.eq.s32.totalorder %s78, 1
      %p91 = por %p89, %p90
      %p92 = scmp.ne.s32.totalorder %s83, %s84
      %p93 = scmp.eq.s32.totalorder %s78, 0
      %p94 = por %p92, %p93
      %p95 = scmp.ne.s32.totalorder %s83, %s84
      %p96 = scmp.eq.s32.totalorder %s79, 1
      %p97 = por %p95, %p96
      %p99 = scmp.ne.s32.totalorder %s84, %s98
      %p100 = scmp.eq.s32.totalorder %s79, 0
      %p101 = por %p99, %p100
      %s103 = sadd.s32 %s102, 1
      %p106 = scmp.eq.s32.totalorder %s73, 1
      %p107 = scmp.ne.s32.totalorder %s102, %s104
      %p108 = scmp.eq.s32.totalorder %s73, 0
      %p109 = por %p107, %p108
      %p110 = scmp.ne.s32.totalorder %s102, %s104
      %p111 = scmp.eq.s32.totalorder %s78, 1
      %p112 = por %p110, %p111
      %p113 = scmp.ne.s32.totalorder %s104, %s105
      %p114 = scmp.eq.s32.totalorder %s78, 0
      %p115 = por %p113, %p114
      %p116 = scmp.ne.s32.totalorder %s104, %s105
      %p117 = scmp.eq.s32.totalorder %s79, 1
      %p118 = por %p116, %p117
      %p120 = scmp.ne.s32.totalorder %s105, %s119
      %p121 = scmp.eq.s32.totalorder %s79, 0
      %p122 = por %p120, %p121
      %s124 = sadd.s32 %s123, 1
      %p127 = scmp.eq.s32.totalorder %s73, 1
      %p128 = scmp.ne.s32.totalorder %s123, %s125
      %p129 = scmp.eq.s32.totalorder %s73, 0
      %p130 = por %p128, %p129
      %p131 = scmp.ne.s32.totalorder %s123, %s125
      %p132 = scmp.eq.s32.totalorder %s78, 1
      %p133 = por %p131, %p132
      %p134 = scmp.ne.s32.totalorder %s125, %s126
      %p135 = scmp.eq.s32.totalorder %s78, 0
      %p136 = por %p134, %p135
      %p137 = scmp.ne.s32.totalorder %s125, %s126
      %p138 = scmp.eq.s32.totalorder %s79, 1
      %p139 = por %p137, %p138
      %p141 = scmp.ne.s32.totalorder %s126, %s140
      %p142 = scmp.eq.s32.totalorder %s79, 0
      %p143 = por %p141, %p142
      %s145 = sadd.s32 %s144, 1
      %p148 = scmp.eq.s32.totalorder %s73, 1
      %p149 = scmp.ne.s32.totalorder %s144, %s146
      %p150 = scmp.eq.s32.totalorder %s73, 0
      %p151 = por %p149, %p150
      %p152 = scmp.ne.s32.totalorder %s144, %s146
      %p153 = scmp.eq.s32.totalorder %s78, 1
      %p154 = por %p152, %p153
      %p155 = scmp.ne.s32.totalorder %s146, %s147
      %p156 = scmp.eq.s32.totalorder %s78, 0
      %p157 = por %p155, %p156
      %p158 = scmp.ne.s32.totalorder %s146, %s147
      %p159 = scmp.eq.s32.totalorder %s79, 1
      %p160 = por %p158, %p159
      %p162 = scmp.ne.s32.totalorder %s147, %s161
      %p163 = scmp.eq.s32.totalorder %s79, 0
      %p164 = por %p162, %p163
      %s166 = sadd.s32 %s165, 1
      %p169 = scmp.eq.s32.totalorder %s73, 1
      %p170 = scmp.ne.s32.totalorder %s165, %s167
      %p171 = scmp.eq.s32.totalorder %s73, 0
      %p172 = por %p170, %p171
      %p173 = scmp.ne.s32.totalorder %s165, %s167
      %p174 = scmp.eq.s32.totalorder %s78, 1
      %p175 = por %p173, %p174
      %p176 = scmp.ne.s32.totalorder %s167, %s168
      %p177 = scmp.eq.s32.totalorder %s78, 0
      %p178 = por %p176, %p177
      %p179 = scmp.ne.s32.totalorder %s167, %s168
      %p180 = scmp.eq.s32.totalorder %s79, 1
      %p181 = por %p179, %p180
      %p183 = scmp.ne.s32.totalorder %s168, %s182
      %p184 = scmp.eq.s32.totalorder %s79, 0
      %p185 = por %p183, %p184
      %s187 = sadd.s32 %s186, 1
      %p190 = scmp.eq.s32.totalorder %s73, 1
      %p191 = scmp.ne.s32.totalorder %s186, %s188
      %p192 = scmp.eq.s32.totalorder %s73, 0
      %p193 = por %p191, %p192
      %p194 = scmp.ne.s32.totalorder %s186, %s188
      %p195 = scmp.eq.s32.totalorder %s78, 1
      %p196 = por %p194, %p195
      %p197 = scmp.ne.s32.totalorder %s188, %s189
      %p198 = scmp.eq.s32.totalorder %s78, 0
      %p199 = por %p197, %p198
      %p200 = scmp.ne.s32.totalorder %s188, %s189
      %p201 = scmp.eq.s32.totalorder %s79, 1
      %p202 = por %p200, %p201
      %p204 = scmp.ne.s32.totalorder %s189, %s203
      %p205 = scmp.eq.s32.totalorder %s79, 0
      %p206 = por %p204, %p205
      %s207 = ssub.s32 %s73, %s80
      %p208 = scmp.eq.s32.totalorder %s207, 0
      %s210 = sadd.s32 %s209, 1
      %s211 = scalar_select %p208, %s209, %s210
      %p214 = pneg %p208
      %p215 = scmp.eq.s32.totalorder %s73, 1
      %p216 = por %p214, %p215
      %p217 = scmp.ne.s32.totalorder %s209, %s212
      %p218 = scmp.eq.s32.totalorder %s73, 0
      %p219 = por %p217, %p218
      %p220 = scmp.ne.s32.totalorder %s209, %s212
      %p221 = scmp.eq.s32.totalorder %s78, 1
      %p222 = por %p220, %p221
      %p223 = scmp.ne.s32.totalorder %s212, %s213
      %p224 = scmp.eq.s32.totalorder %s78, 0
      %p225 = por %p223, %p224
      %p226 = scmp.ne.s32.totalorder %s212, %s213
      %p227 = scmp.eq.s32.totalorder %s79, 1
      %p228 = por %p226, %p227
      %p230 = scmp.ne.s32.totalorder %s213, %s229
      %p231 = scmp.eq.s32.totalorder %s79, 0
      %p232 = por %p230, %p231
      %s233 = ssub.s32 %s73, %s80
      %p234 = scmp.eq.s32.totalorder %s233, 0
      %s236 = sadd.s32 %s235, 1
      %s237 = scalar_select %p234, %s235, %s236
      %p240 = pneg %p234
      %p241 = scmp.eq.s32.totalorder %s73, 1
      %p242 = por %p240, %p241
      %p243 = scmp.ne.s32.totalorder %s235, %s238
      %p244 = scmp.eq.s32.totalorder %s73, 0
      %p245 = por %p243, %p244
      %p246 = scmp.ne.s32.totalorder %s235, %s238
      %p247 = scmp.eq.s32.totalorder %s78, 1
      %p248 = por %p246, %p247
      %p249 = scmp.ne.s32.totalorder %s238, %s239
      %p250 = scmp.eq.s32.totalorder %s78, 0
      %p251 = por %p249, %p250
      %p252 = scmp.ne.s32.totalorder %s238, %s239
      %p253 = scmp.eq.s32.totalorder %s79, 1
      %p254 = por %p252, %p253
      %p256 = scmp.ne.s32.totalorder %s239, %s255
      %p257 = scmp.eq.s32.totalorder %s79, 0
      %p258 = por %p256, %p257
      %s259 = ssub.s32 %s73, %s80
      %p260 = scmp.eq.s32.totalorder %s259, 0
      %s262 = sadd.s32 %s261, 1
      %s263 = scalar_select %p260, %s261, %s262
      %p266 = pneg %p260
      %p267 = scmp.eq.s32.totalorder %s73, 1
      %p268 = por %p266, %p267
      %p269 = scmp.ne.s32.totalorder %s261, %s264
      %p270 = scmp.eq.s32.totalorder %s73, 0
      %p271 = por %p269, %p270
      %p272 = scmp.ne.s32.totalorder %s261, %s264
      %p273 = scmp.eq.s32.totalorder %s78, 1
      %p274 = por %p272, %p273
      %p275 = scmp.ne.s32.totalorder %s264, %s265
      %p276 = scmp.eq.s32.totalorder %s78, 0
      %p277 = por %p275, %p276
      %p278 = scmp.ne.s32.totalorder %s264, %s265
      %p279 = scmp.eq.s32.totalorder %s79, 1
      %p280 = por %p278, %p279
      %p282 = scmp.ne.s32.totalorder %s265, %s281
      %p283 = scmp.eq.s32.totalorder %s79, 0
      %p284 = por %p282, %p283
      %s285 = ssub.s32 %s73, %s80
      %p286 = scmp.eq.s32.totalorder %s285, 0
      %s288 = sadd.s32 %s287, 1
      %s289 = scalar_select %p286, %s287, %s288
      %p292 = pneg %p286
      %p293 = scmp.eq.s32.totalorder %s73, 1
      %p294 = por %p292, %p293
      %p295 = scmp.ne.s32.totalorder %s287, %s290
      %p296 = scmp.eq.s32.totalorder %s73, 0
      %p297 = por %p295, %p296
      %p298 = scmp.ne.s32.totalorder %s287, %s290
      %p299 = scmp.eq.s32.totalorder %s78, 1
      %p300 = por %p298, %p299
      %p301 = scmp.ne.s32.totalorder %s290, %s291
      %p302 = scmp.eq.s32.totalorder %s78, 0
      %p303 = por %p301, %p302
      %p304 = scmp.ne.s32.totalorder %s290, %s291
      %p305 = scmp.eq.s32.totalorder %s79, 1
      %p306 = por %p304, %p305
      %p308 = scmp.ne.s32.totalorder %s291, %s307
      %p309 = scmp.eq.s32.totalorder %s79, 0
      %p310 = por %p308, %p309
      %s311 = ssub.s32 %s73, %s80
      %p312 = scmp.eq.s32.totalorder %s311, 0
      %s314 = sadd.s32 %s313, 1
      %s315 = scalar_select %p312, %s313, %s314
      %p318 = pneg %p312
      %p319 = scmp.eq.s32.totalorder %s73, 1
      %p320 = por %p318, %p319
      %p321 = scmp.ne.s32.totalorder %s313, %s316
      %p322 = scmp.eq.s32.totalorder %s73, 0
      %p323 = por %p321, %p322
      %p324 = scmp.ne.s32.totalorder %s313, %s316
      %p325 = scmp.eq.s32.totalorder %s78, 1
      %p326 = por %p324, %p325
      %p327 = scmp.ne.s32.totalorder %s316, %s317
      %p328 = scmp.eq.s32.totalorder %s78, 0
      %p329 = por %p327, %p328
      %p330 = scmp.ne.s32.totalorder %s316, %s317
      %p331 = scmp.eq.s32.totalorder %s79, 1
      %p332 = por %p330, %p331
      %p334 = scmp.ne.s32.totalorder %s317, %s333
      %p335 = scmp.eq.s32.totalorder %s79, 0
      %p336 = por %p334, %p335
      %s337 = ssub.s32 %s73, %s80
      %p338 = scmp.eq.s32.totalorder %s337, 0
      %s340 = sadd.s32 %s339, 1
      %s341 = scalar_select %p338, %s339, %s340
      %p344 = pneg %p338
      %p345 = scmp.eq.s32.totalorder %s73, 1
      %p346 = por %p344, %p345
      %p347 = scmp.ne.s32.totalorder %s339, %s342
      %p348 = scmp.eq.s32.totalorder %s73, 0
      %p349 = por %p347, %p348
      %p350 = scmp.ne.s32.totalorder %s339, %s342
      %p351 = scmp.eq.s32.totalorder %s78, 1
      %p352 = por %p350, %p351
      %p353 = scmp.ne.s32.totalorder %s342, %s343
      %p354 = scmp.eq.s32.totalorder %s78, 0
      %p355 = por %p353, %p354
      %p356 = scmp.ne.s32.totalorder %s342, %s343
      %p357 = scmp.eq.s32.totalorder %s79, 1
      %p358 = por %p356, %p357
      %p360 = scmp.ne.s32.totalorder %s343, %s359
      %p361 = scmp.eq.s32.totalorder %s79, 0
      %p362 = por %p360, %p361
      %s363 = ssub.s32 %s73, %s80
      %p364 = scmp.eq.s32.totalorder %s363, 0
      %s366 = sadd.s32 %s365, 1
      %s367 = scalar_select %p364, %s365, %s366
      %p370 = pneg %p364
      %p371 = scmp.eq.s32.totalorder %s73, 1
      %p372 = por %p370, %p371
      %p373 = scmp.ne.s32.totalorder %s365, %s368
      %p374 = scmp.eq.s32.totalorder %s73, 0
      %p375 = por %p373, %p374
      %p376 = scmp.ne.s32.totalorder %s365, %s368
      %p377 = scmp.eq.s32.totalorder %s78, 1
      %p378 = por %p376, %p377
      %p379 = scmp.ne.s32.totalorder %s368, %s369
      %p380 = scmp.eq.s32.totalorder %s78, 0
      %p381 = por %p379, %p380
      %p382 = scmp.ne.s32.totalorder %s368, %s369
      %p383 = scmp.eq.s32.totalorder %s79, 1
      %p384 = por %p382, %p383
      %p386 = scmp.ne.s32.totalorder %s369, %s385
      %p387 = scmp.eq.s32.totalorder %s79, 0
      %p388 = por %p386, %p387
      %s389 = ssub.s32 %s73, %s80
      %p390 = scmp.eq.s32.totalorder %s389, 0
      %s392 = sadd.s32 %s391, 1
      %s393 = scalar_select %p390, %s391, %s392
      %p396 = pneg %p390
      %p397 = scmp.eq.s32.totalorder %s73, 1
      %p398 = por %p396, %p397
      %p399 = scmp.ne.s32.totalorder %s391, %s394
      %p400 = scmp.eq.s32.totalorder %s73, 0
      %p401 = por %p399, %p400
      %p402 = scmp.ne.s32.totalorder %s391, %s394
      %p403 = scmp.eq.s32.totalorder %s78, 1
      %p404 = por %p402, %p403
      %p405 = scmp.ne.s32.totalorder %s394, %s395
      %p406 = scmp.eq.s32.totalorder %s78, 0
      %p407 = por %p405, %p406
      %p408 = scmp.ne.s32.totalorder %s394, %s395
      %p409 = scmp.eq.s32.totalorder %s79, 1
      %p410 = por %p408, %p409
      %p412 = scmp.ne.s32.totalorder %s395, %s411
      %p413 = scmp.eq.s32.totalorder %s79, 0
      %p414 = por %p412, %p413
      %s415 = ssub.s32 %s73, %s80
      %p416 = scmp.eq.s32.totalorder %s415, 0
      %s418 = sadd.s32 %s417, 1
      %s419 = scalar_select %p416, %s417, %s418
      %p422 = pneg %p416
      %p423 = scmp.eq.s32.totalorder %s73, 1
      %p424 = por %p422, %p423
      %p425 = scmp.ne.s32.totalorder %s417, %s420
      %p426 = scmp.eq.s32.totalorder %s73, 0
      %p427 = por %p425, %p426
      %p428 = scmp.ne.s32.totalorder %s417, %s420
      %p429 = scmp.eq.s32.totalorder %s78, 1
      %p430 = por %p428, %p429
      %p431 = scmp.ne.s32.totalorder %s420, %s421
      %p432 = scmp.eq.s32.totalorder %s78, 0
      %p433 = por %p431, %p432
      %p434 = scmp.ne.s32.totalorder %s420, %s421
      %p435 = scmp.eq.s32.totalorder %s79, 1
      %p436 = por %p434, %p435
      %p438 = scmp.ne.s32.totalorder %s421, %s437
      %p439 = scmp.eq.s32.totalorder %s79, 0
      %p440 = por %p438, %p439
      %s441 = ssub.s32 %s73, %s80
      %p442 = scmp.eq.s32.totalorder %s441, 0
      %s444 = sadd.s32 %s443, 1
      %s445 = scalar_select %p442, %s443, %s444
      %p448 = pneg %p442
      %p449 = scmp.eq.s32.totalorder %s73, 1
      %p450 = por %p448, %p449
      %p451 = scmp.ne.s32.totalorder %s443, %s446
      %p452 = scmp.eq.s32.totalorder %s73, 0
      %p453 = por %p451, %p452
      %p454 = scmp.ne.s32.totalorder %s443, %s446
      %p455 = scmp.eq.s32.totalorder %s78, 1
      %p456 = por %p454, %p455
      %p457 = scmp.ne.s32.totalorder %s446, %s447
      %p458 = scmp.eq.s32.totalorder %s78, 0
      %p459 = por %p457, %p458
      %p460 = scmp.ne.s32.totalorder %s446, %s447
      %p461 = scmp.eq.s32.totalorder %s79, 1
      %p462 = por %p460, %p461
      %p464 = scmp.ne.s32.totalorder %s447, %s463
      %p465 = scmp.eq.s32.totalorder %s79, 0
      %p466 = por %p464, %p465
      %s467 = ssub.s32 %s73, %s80
      %p468 = scmp.eq.s32.totalorder %s467, 0
      %s470 = sadd.s32 %s469, 1
      %s471 = scalar_select %p468, %s469, %s470
      %p474 = pneg %p468
      %p475 = scmp.eq.s32.totalorder %s73, 1
      %p476 = por %p474, %p475
      %p477 = scmp.ne.s32.totalorder %s469, %s472
      %p478 = scmp.eq.s32.totalorder %s73, 0
      %p479 = por %p477, %p478
      %p480 = scmp.ne.s32.totalorder %s469, %s472
      %p481 = scmp.eq.s32.totalorder %s78, 1
      %p482 = por %p480, %p481
      %p483 = scmp.ne.s32.totalorder %s472, %s473
      %p484 = scmp.eq.s32.totalorder %s78, 0
      %p485 = por %p483, %p484
      %p486 = scmp.ne.s32.totalorder %s472, %s473
      %p487 = scmp.eq.s32.totalorder %s79, 1
      %p488 = por %p486, %p487
      %p490 = scmp.ne.s32.totalorder %s473, %s489
      %p491 = scmp.eq.s32.totalorder %s79, 0
      %p492 = por %p490, %p491
      %s493 = ssub.s32 %s73, %s80
      %p494 = scmp.eq.s32.totalorder %s493, 0
      %s496 = sadd.s32 %s495, 1
      %s497 = scalar_select %p494, %s495, %s496
      %p500 = pneg %p494
      %p501 = scmp.eq.s32.totalorder %s73, 1
      %p502 = por %p500, %p501
      %p503 = scmp.ne.s32.totalorder %s495, %s498
      %p504 = scmp.eq.s32.totalorder %s73, 0
      %p505 = por %p503, %p504
      %p506 = scmp.ne.s32.totalorder %s495, %s498
      %p507 = scmp.eq.s32.totalorder %s78, 1
      %p508 = por %p506, %p507
      %p509 = scmp.ne.s32.totalorder %s498, %s499
      %p510 = scmp.eq.s32.totalorder %s78, 0
      %p511 = por %p509, %p510
      %p512 = scmp.ne.s32.totalorder %s498, %s499
      %p513 = scmp.eq.s32.totalorder %s79, 1
      %p514 = por %p512, %p513
      %p516 = scmp.ne.s32.totalorder %s499, %s515
      %p517 = scmp.eq.s32.totalorder %s79, 0
      %p518 = por %p516, %p517
      %s519 = ssub.s32 %s73, %s80
      %p520 = scmp.eq.s32.totalorder %s519, 0
      %s522 = sadd.s32 %s521, 1
      %s523 = scalar_select %p520, %s521, %s522
      %p526 = pneg %p520
      %p527 = scmp.eq.s32.totalorder %s73, 1
      %p528 = por %p526, %p527
      %p529 = scmp.ne.s32.totalorder %s521, %s524
      %p530 = scmp.eq.s32.totalorder %s73, 0
      %p531 = por %p529, %p530
      %p532 = scmp.ne.s32.totalorder %s521, %s524
      %p533 = scmp.eq.s32.totalorder %s78, 1
      %p534 = por %p532, %p533
      %p535 = scmp.ne.s32.totalorder %s524, %s525
      %p536 = scmp.eq.s32.totalorder %s78, 0
      %p537 = por %p535, %p536
      %p538 = scmp.ne.s32.totalorder %s524, %s525
      %p539 = scmp.eq.s32.totalorder %s79, 1
      %p540 = por %p538, %p539
      %p542 = scmp.ne.s32.totalorder %s525, %s541
      %p543 = scmp.eq.s32.totalorder %s79, 0
      %p544 = por %p542, %p543
      %s545 = ssub.s32 %s73, %s80
      %p546 = scmp.eq.s32.totalorder %s545, 0
      %s548 = sadd.s32 %s547, 1
      %s549 = scalar_select %p546, %s547, %s548
      %p552 = pneg %p546
      %p553 = scmp.eq.s32.totalorder %s73, 1
      %p554 = por %p552, %p553
      %p555 = scmp.ne.s32.totalorder %s547, %s550
      %p556 = scmp.eq.s32.totalorder %s73, 0
      %p557 = por %p555, %p556
      %p558 = scmp.ne.s32.totalorder %s547, %s550
      %p559 = scmp.eq.s32.totalorder %s78, 1
      %p560 = por %p558, %p559
      %p561 = scmp.ne.s32.totalorder %s550, %s551
      %p562 = scmp.eq.s32.totalorder %s78, 0
      %p563 = por %p561, %p562
      %p564 = scmp.ne.s32.totalorder %s550, %s551
      %p565 = scmp.eq.s32.totalorder %s79, 1
      %p566 = por %p564, %p565
      %p568 = scmp.ne.s32.totalorder %s551, %s567
      %p569 = scmp.eq.s32.totalorder %s79, 0
      %p570 = por %p568, %p569
      %s571 = ssub.s32 %s73, %s80
      %p572 = scmp.eq.s32.totalorder %s571, 0
      %s574 = sadd.s32 %s573, 1
      %s575 = scalar_select %p572, %s573, %s574
      %p578 = pneg %p572
      %p579 = scmp.eq.s32.totalorder %s73, 1
      %p580 = por %p578, %p579
      %p581 = scmp.ne.s32.totalorder %s573, %s576
      %p582 = scmp.eq.s32.totalorder %s73, 0
      %p583 = por %p581, %p582
      %p584 = scmp.ne.s32.totalorder %s573, %s576
      %p585 = scmp.eq.s32.totalorder %s78, 1
      %p586 = por %p584, %p585
      %p587 = scmp.ne.s32.totalorder %s576, %s577
      %p588 = scmp.eq.s32.totalorder %s78, 0
      %p589 = por %p587, %p588
      %p590 = scmp.ne.s32.totalorder %s576, %s577
      %p591 = scmp.eq.s32.totalorder %s79, 1
      %p592 = por %p590, %p591
      %p594 = scmp.ne.s32.totalorder %s577, %s593
      %p595 = scmp.eq.s32.totalorder %s79, 0
      %p596 = por %p594, %p595
      %s597 = ssub.s32 %s73, %s80
      %p598 = scmp.eq.s32.totalorder %s597, 0
      %s600 = sadd.s32 %s599, 1
      %s601 = scalar_select %p598, %s599, %s600
      %p604 = pneg %p598
      %p605 = scmp.eq.s32.totalorder %s73, 1
      %p606 = por %p604, %p605
      %p607 = scmp.ne.s32.totalorder %s599, %s602
      %p608 = scmp.eq.s32.totalorder %s73, 0
      %p609 = por %p607, %p608
      %p610 = scmp.ne.s32.totalorder %s599, %s602
      %p611 = scmp.eq.s32.totalorder %s78, 1
      %p612 = por %p610, %p611
      %p613 = scmp.ne.s32.totalorder %s602, %s603
      %p614 = scmp.eq.s32.totalorder %s78, 0
      %p615 = por %p613, %p614
      %p616 = scmp.ne.s32.totalorder %s602, %s603
      %p617 = scmp.eq.s32.totalorder %s79, 1
      %p618 = por %p616, %p617
      %p620 = scmp.ne.s32.totalorder %s603, %s619
      %p621 = scmp.eq.s32.totalorder %s79, 0
      %p622 = por %p620, %p621
      %s623 = ssub.s32 %s73, %s80
      %p624 = scmp.eq.s32.totalorder %s623, 0
      %s626 = sadd.s32 %s625, 1
      %s627 = scalar_select %p624, %s625, %s626
      %p630 = pneg %p624
      %p631 = scmp.eq.s32.totalorder %s73, 1
      %p632 = por %p630, %p631
      %p633 = scmp.ne.s32.totalorder %s625, %s628
      %p634 = scmp.eq.s32.totalorder %s73, 0
      %p635 = por %p633, %p634
      %p636 = scmp.ne.s32.totalorder %s625, %s628
      %p637 = scmp.eq.s32.totalorder %s78, 1
      %p638 = por %p636, %p637
      %p639 = scmp.ne.s32.totalorder %s628, %s629
      %p640 = scmp.eq.s32.totalorder %s78, 0
      %p641 = por %p639, %p640
      %p642 = scmp.ne.s32.totalorder %s628, %s629
      %p643 = scmp.eq.s32.totalorder %s79, 1
      %p644 = por %p642, %p643
      %p646 = scmp.ne.s32.totalorder %s629, %s645
      %p647 = scmp.eq.s32.totalorder %s79, 0
      %p648 = por %p646, %p647
      %s649 = ssub.s32 %s73, %s80
      %p650 = scmp.eq.s32.totalorder %s649, 0
      %s652 = sadd.s32 %s651, 1
      %s653 = scalar_select %p650, %s651, %s652
      %p656 = pneg %p650
      %p657 = scmp.eq.s32.totalorder %s73, 1
      %p658 = por %p656, %p657
      %p659 = scmp.ne.s32.totalorder %s651, %s654
      %p660 = scmp.eq.s32.totalorder %s73, 0
      %p661 = por %p659, %p660
      %p662 = scmp.ne.s32.totalorder %s651, %s654
      %p663 = scmp.eq.s32.totalorder %s78, 1
      %p664 = por %p662, %p663
      %p665 = scmp.ne.s32.totalorder %s654, %s655
      %p666 = scmp.eq.s32.totalorder %s78, 0
      %p667 = por %p665, %p666
      %p668 = scmp.ne.s32.totalorder %s654, %s655
      %p669 = scmp.eq.s32.totalorder %s79, 1
      %p670 = por %p668, %p669
      %p672 = scmp.ne.s32.totalorder %s655, %s671
      %p673 = scmp.eq.s32.totalorder %s79, 0
      %p674 = por %p672, %p673
      %s675 = ssub.s32 %s73, %s80
      %p676 = scmp.eq.s32.totalorder %s675, 0
      %s678 = sadd.s32 %s677, 1
      %s679 = scalar_select %p676, %s677, %s678
      %p682 = pneg %p676
      %p683 = scmp.eq.s32.totalorder %s73, 1
      %p684 = por %p682, %p683
      %p685 = scmp.ne.s32.totalorder %s677, %s680
      %p686 = scmp.eq.s32.totalorder %s73, 0
      %p687 = por %p685, %p686
      %p688 = scmp.ne.s32.totalorder %s677, %s680
      %p689 = scmp.eq.s32.totalorder %s78, 1
      %p690 = por %p688, %p689
      %p691 = scmp.ne.s32.totalorder %s680, %s681
      %p692 = scmp.eq.s32.totalorder %s78, 0
      %p693 = por %p691, %p692
      %p694 = scmp.ne.s32.totalorder %s680, %s681
      %p695 = scmp.eq.s32.totalorder %s79, 1
      %p696 = por %p694, %p695
      %p698 = scmp.ne.s32.totalorder %s681, %s697
      %p699 = scmp.eq.s32.totalorder %s79, 0
      %p700 = por %p698, %p699
      %s701 = ssub.s32 %s73, %s80
      %p702 = scmp.eq.s32.totalorder %s701, 0
      %s704 = sadd.s32 %s703, 1
      %s705 = scalar_select %p702, %s703, %s704
      %p708 = pneg %p702
      %p709 = scmp.eq.s32.totalorder %s73, 1
      %p710 = por %p708, %p709
      %p711 = scmp.ne.s32.totalorder %s703, %s706
      %p712 = scmp.eq.s32.totalorder %s73, 0
      %p713 = por %p711, %p712
      %p714 = scmp.ne.s32.totalorder %s703, %s706
      %p715 = scmp.eq.s32.totalorder %s78, 1
      %p716 = por %p714, %p715
      %p717 = scmp.ne.s32.totalorder %s706, %s707
      %p718 = scmp.eq.s32.totalorder %s78, 0
      %p719 = por %p717, %p718
      %p720 = scmp.ne.s32.totalorder %s706, %s707
      %p721 = scmp.eq.s32.totalorder %s79, 1
      %p722 = por %p720, %p721
      %p724 = scmp.ne.s32.totalorder %s707, %s723
      %p725 = scmp.eq.s32.totalorder %s79, 0
      %p726 = por %p724, %p725
      %s727 = ssub.s32 %s73, %s80
      %p728 = scmp.eq.s32.totalorder %s727, 0
      %s730 = sadd.s32 %s729, 1
      %s731 = scalar_select %p728, %s729, %s730
      %p734 = pneg %p728
      %p735 = scmp.eq.s32.totalorder %s73, 1
      %p736 = por %p734, %p735
      %p737 = scmp.ne.s32.totalorder %s729, %s732
      %p738 = scmp.eq.s32.totalorder %s73, 0
      %p739 = por %p737, %p738
      %p740 = scmp.ne.s32.totalorder %s729, %s732
      %p741 = scmp.eq.s32.totalorder %s78, 1
      %p742 = por %p740, %p741
      %p743 = scmp.ne.s32.totalorder %s732, %s733
      %p744 = scmp.eq.s32.totalorder %s78, 0
      %p745 = por %p743, %p744
      %p746 = scmp.ne.s32.totalorder %s732, %s733
      %p747 = scmp.eq.s32.totalorder %s79, 1
      %p748 = por %p746, %p747
      %p750 = scmp.ne.s32.totalorder %s733, %s749
      %p751 = scmp.eq.s32.totalorder %s79, 0
      %p752 = por %p750, %p751
      %s753 = ssub.s32 %s73, %s80
      %p754 = scmp.eq.s32.totalorder %s753, 0
      %s756 = sadd.s32 %s755, 1
      %s757 = scalar_select %p754, %s755, %s756
      %p760 = pneg %p754
      %p761 = scmp.eq.s32.totalorder %s73, 1
      %p762 = por %p760, %p761
      %p763 = scmp.ne.s32.totalorder %s755, %s758
      %p764 = scmp.eq.s32.totalorder %s73, 0
      %p765 = por %p763, %p764
      %p766 = scmp.ne.s32.totalorder %s755, %s758
      %p767 = scmp.eq.s32.totalorder %s78, 1
      %p768 = por %p766, %p767
      %p769 = scmp.ne.s32.totalorder %s758, %s759
      %p770 = scmp.eq.s32.totalorder %s78, 0
      %p771 = por %p769, %p770
      %p772 = scmp.ne.s32.totalorder %s758, %s759
      %p773 = scmp.eq.s32.totalorder %s79, 1
      %p774 = por %p772, %p773
      %p776 = scmp.ne.s32.totalorder %s759, %s775
      %p777 = scmp.eq.s32.totalorder %s79, 0
      %p778 = por %p776, %p777
      %s780 = sadd.s32 %s779, 1
      %p783 = scmp.eq.s32.totalorder %s73, 1
      %p784 = scmp.ne.s32.totalorder %s779, %s781
      %p785 = scmp.eq.s32.totalorder %s73, 0
      %p786 = por %p784, %p785
      %p787 = scmp.ne.s32.totalorder %s779, %s781
      %p788 = scmp.eq.s32.totalorder %s78, 1
      %p789 = por %p787, %p788
      %p790 = scmp.ne.s32.totalorder %s781, %s782
      %p791 = scmp.eq.s32.totalorder %s78, 0
      %p792 = por %p790, %p791
      %p793 = scmp.ne.s32.totalorder %s781, %s782
      %p794 = scmp.eq.s32.totalorder %s79, 1
      %p795 = por %p793, %p794
      %p797 = scmp.ne.s32.totalorder %s782, %s796
      %p798 = scmp.eq.s32.totalorder %s79, 0
      %p799 = por %p797, %p798
      %s801 = sadd.s32 %s800, 1
      %p804 = scmp.eq.s32.totalorder %s73, 1
      %p805 = scmp.ne.s32.totalorder %s800, %s802
      %p806 = scmp.eq.s32.totalorder %s73, 0
      %p807 = por %p805, %p806
      %p808 = scmp.ne.s32.totalorder %s800, %s802
      %p809 = scmp.eq.s32.totalorder %s78, 1
      %p810 = por %p808, %p809
      %p811 = scmp.ne.s32.totalorder %s802, %s803
      %p812 = scmp.eq.s32.totalorder %s78, 0
      %p813 = por %p811, %p812
      %p814 = scmp.ne.s32.totalorder %s802, %s803
      %p815 = scmp.eq.s32.totalorder %s79, 1
      %p816 = por %p814, %p815
      %p818 = scmp.ne.s32.totalorder %s803, %s817
      %p819 = scmp.eq.s32.totalorder %s79, 0
      %p820 = por %p818, %p819
      %s822 = sadd.s32 %s821, 1
      %p825 = scmp.eq.s32.totalorder %s73, 1
      %p826 = scmp.ne.s32.totalorder %s821, %s823
      %p827 = scmp.eq.s32.totalorder %s73, 0
      %p828 = por %p826, %p827
      %p829 = scmp.ne.s32.totalorder %s821, %s823
      %p830 = scmp.eq.s32.totalorder %s78, 1
      %p831 = por %p829, %p830
      %p832 = scmp.ne.s32.totalorder %s823, %s824
      %p833 = scmp.eq.s32.totalorder %s78, 0
      %p834 = por %p832, %p833
      %p835 = scmp.ne.s32.totalorder %s823, %s824
      %p836 = scmp.eq.s32.totalorder %s79, 1
      %p837 = por %p835, %p836
      %p839 = scmp.ne.s32.totalorder %s824, %s838
      %p840 = scmp.eq.s32.totalorder %s79, 0
      %p841 = por %p839, %p840
      %s842 = ssub.s32 %s73, %s80
      %p843 = scmp.eq.s32.totalorder %s842, 0
      %s845 = sadd.s32 %s844, 1
      %s846 = scalar_select %p843, %s844, %s845
      %p849 = pneg %p843
      %p850 = scmp.eq.s32.totalorder %s73, 1
      %p851 = por %p849, %p850
      %p852 = scmp.ne.s32.totalorder %s844, %s847
      %p853 = scmp.eq.s32.totalorder %s73, 0
      %p854 = por %p852, %p853
      %p855 = scmp.ne.s32.totalorder %s844, %s847
      %p856 = scmp.eq.s32.totalorder %s78, 1
      %p857 = por %p855, %p856
      %p858 = scmp.ne.s32.totalorder %s847, %s848
      %p859 = scmp.eq.s32.totalorder %s78, 0
      %p860 = por %p858, %p859
      %p861 = scmp.ne.s32.totalorder %s847, %s848
      %p862 = scmp.eq.s32.totalorder %s79, 1
      %p863 = por %p861, %p862
      %p865 = scmp.ne.s32.totalorder %s848, %s864
      %p866 = scmp.eq.s32.totalorder %s79, 0
      %p867 = por %p865, %p866
      %s868 = ssub.s32 %s73, %s80
      %p869 = scmp.eq.s32.totalorder %s868, 0
      %s871 = sadd.s32 %s870, 1
      %s872 = scalar_select %p869, %s870, %s871
      %p875 = pneg %p869
      %p876 = scmp.eq.s32.totalorder %s73, 1
      %p877 = por %p875, %p876
      %p878 = scmp.ne.s32.totalorder %s870, %s873
      %p879 = scmp.eq.s32.totalorder %s73, 0
      %p880 = por %p878, %p879
      %p881 = scmp.ne.s32.totalorder %s870, %s873
      %p882 = scmp.eq.s32.totalorder %s78, 1
      %p883 = por %p881, %p882
      %p884 = scmp.ne.s32.totalorder %s873, %s874
      %p885 = scmp.eq.s32.totalorder %s78, 0
      %p886 = por %p884, %p885
      %p887 = scmp.ne.s32.totalorder %s873, %s874
      %p888 = scmp.eq.s32.totalorder %s79, 1
      %p889 = por %p887, %p888
      %p891 = scmp.ne.s32.totalorder %s874, %s890
      %p892 = scmp.eq.s32.totalorder %s79, 0
      %p893 = por %p891, %p892
      %p894 = scmp.le.s32.totalorder 1, %s73
      %p895 = scmp.lt.s32.totalorder %s73, 3
      %p896 = pnand %p894, %p895
      %p897 = pneg %p896
      // Predicated region
      $region9: #{decoder_forward.1} parent=5 // pred_check
        _
      $region10: #{decoder_forward.1} parent=5 // pred_check_branch
        %899 = sbr.rel (%p896) target = $region12
      $region11: #{decoder_forward.1} parent=5 // pred_region
        %s900 = ssub.s32 %s73, 1
        // Predicated region
        $region13: #{decoder_forward.1} parent=11 // pred_check
          %p901 = pneg %p94
        $region14: #{decoder_forward.1} parent=11 // pred_check_branch
          %903 = sbr.rel (%p901) target = $region16
        $region15: #{decoder_forward.1} parent=11 // pred_region
          _
        $region16: #{decoder_forward.1} parent=11 // pred_fallthru
          _
        // Predicated region
        $region17: #{decoder_forward.1} parent=11 // pred_check
          %p904 = pneg %p115
        $region18: #{decoder_forward.1} parent=11 // pred_check_branch
          %906 = sbr.rel (%p904) target = $region20
        $region19: #{decoder_forward.1} parent=11 // pred_region
          _
        $region20: #{decoder_forward.1} parent=11 // pred_fallthru
          _
        // Predicated region
        $region21: #{decoder_forward.1} parent=11 // pred_check
          %p907 = pneg %p136
        $region22: #{decoder_forward.1} parent=11 // pred_check_branch
          %909 = sbr.rel (%p907) target = $region24
        $region23: #{decoder_forward.1} parent=11 // pred_region
          _
        $region24: #{decoder_forward.1} parent=11 // pred_fallthru
          _
        // Predicated region
        $region25: #{decoder_forward.1} parent=11 // pred_check
          %p910 = pneg %p157
        $region26: #{decoder_forward.1} parent=11 // pred_check_branch
          %912 = sbr.rel (%p910) target = $region28
        $region27: #{decoder_forward.1} parent=11 // pred_region
          _
        $region28: #{decoder_forward.1} parent=11 // pred_fallthru
          _
        // Predicated region
        $region29: #{decoder_forward.1} parent=11 // pred_check
          %p913 = pneg %p178
        $region30: #{decoder_forward.1} parent=11 // pred_check_branch
          %915 = sbr.rel (%p913) target = $region32
        $region31: #{decoder_forward.1} parent=11 // pred_region
          _
        $region32: #{decoder_forward.1} parent=11 // pred_fallthru
          _
        // Predicated region
        $region33: #{decoder_forward.1} parent=11 // pred_check
          %p916 = pneg %p199
        $region34: #{decoder_forward.1} parent=11 // pred_check_branch
          %918 = sbr.rel (%p916) target = $region36
        $region35: #{decoder_forward.1} parent=11 // pred_region
          _
        $region36: #{decoder_forward.1} parent=11 // pred_fallthru
          _
        // Predicated region
        $region37: #{decoder_forward.1} parent=11 // pred_check
          %p919 = pneg %p792
        $region38: #{decoder_forward.1} parent=11 // pred_check_branch
          %921 = sbr.rel (%p919) target = $region40
        $region39: #{decoder_forward.1} parent=11 // pred_region
          _
        $region40: #{decoder_forward.1} parent=11 // pred_fallthru
          _
        // Predicated region
        $region41: #{decoder_forward.1} parent=11 // pred_check
          %p922 = pneg %p813
        $region42: #{decoder_forward.1} parent=11 // pred_check_branch
          %924 = sbr.rel (%p922) target = $region44
        $region43: #{decoder_forward.1} parent=11 // pred_region
          _
        $region44: #{decoder_forward.1} parent=11 // pred_fallthru
          _
      $region12: #{decoder_forward.1} parent=5 // pred_fallthru
        _
      %p925 = scmp.lt.s32.totalorder %s73, 2
      // Predicated region
      $region45: #{decoder_forward.1} parent=5 // pred_check
        %p926 = pneg %p925
      $region46: #{decoder_forward.1} parent=5 // pred_check_branch
        %928 = sbr.rel (%p926) target = $region48
      $region47: #{decoder_forward.1} parent=5 // pred_region
        // Predicated region
        $region49: #{decoder_forward.1} parent=47 // pred_check
          %p929 = pneg %p219
        $region50: #{decoder_forward.1} parent=47 // pred_check_branch
          %931 = sbr.rel (%p929) target = $region52
        $region51: #{decoder_forward.1} parent=47 // pred_region
          %p932 = scmp.lt.s32.totalorder %s73, 1
          %s933 = scalar_select %p932, %s73, 1
          %s934 = scalar_lea.vmem %s13, %s933
        $region52: #{decoder_forward.1} parent=47 // pred_fallthru
          _
        // Predicated region
        $region53: #{decoder_forward.1} parent=47 // pred_check
          %p935 = pneg %p245
        $region54: #{decoder_forward.1} parent=47 // pred_check_branch
          %937 = sbr.rel (%p935) target = $region56
        $region55: #{decoder_forward.1} parent=47 // pred_region
          %p938 = scmp.lt.s32.totalorder %s73, 1
          %s939 = scalar_select %p938, %s73, 1
          %s940 = scalar_lea.vmem %s15, %s939
        $region56: #{decoder_forward.1} parent=47 // pred_fallthru
          _
        // Predicated region
        $region57: #{decoder_forward.1} parent=47 // pred_check
          %p941 = pneg %p271
        $region58: #{decoder_forward.1} parent=47 // pred_check_branch
          %943 = sbr.rel (%p941) target = $region60
        $region59: #{decoder_forward.1} parent=47 // pred_region
          %p944 = scmp.lt.s32.totalorder %s73, 1
          %s945 = scalar_select %p944, %s73, 1
          %s946 = smul.addr %s945, 4
          %s947 = smul.addr %s946, 4
          %s948 = scalar_lea.vmem %s17, %s947
        $region60: #{decoder_forward.1} parent=47 // pred_fallthru
          _
        // Predicated region
        $region61: #{decoder_forward.1} parent=47 // pred_check
          %p949 = pneg %p297
        $region62: #{decoder_forward.1} parent=47 // pred_check_branch
          %951 = sbr.rel (%p949) target = $region64
        $region63: #{decoder_forward.1} parent=47 // pred_region
          %p952 = scmp.lt.s32.totalorder %s73, 1
          %s953 = scalar_select %p952, %s73, 1
          %s954 = scalar_lea.vmem %s19, %s953
        $region64: #{decoder_forward.1} parent=47 // pred_fallthru
          _
        // Predicated region
        $region65: #{decoder_forward.1} parent=47 // pred_check
          %p955 = pneg %p323
        $region66: #{decoder_forward.1} parent=47 // pred_check_branch
          %957 = sbr.rel (%p955) target = $region68
        $region67: #{decoder_forward.1} parent=47 // pred_region
          %p958 = scmp.lt.s32.totalorder %s73, 1
          %s959 = scalar_select %p958, %s73, 1
          %s960 = smul.addr %s959, 4
          %s961 = smul.addr %s960, 4
          %s962 = scalar_lea.vmem %s21, %s961
        $region68: #{decoder_forward.1} parent=47 // pred_fallthru
          _
        // Predicated region
        $region69: #{decoder_forward.1} parent=47 // pred_check
          %p963 = pneg %p349
        $region70: #{decoder_forward.1} parent=47 // pred_check_branch
          %965 = sbr.rel (%p963) target = $region72
        $region71: #{decoder_forward.1} parent=47 // pred_region
          %p966 = scmp.lt.s32.totalorder %s73, 1
          %s967 = scalar_select %p966, %s73, 1
          %s968 = scalar_lea.vmem %s23, %s967
        $region72: #{decoder_forward.1} parent=47 // pred_fallthru
          _
        // Predicated region
        $region73: #{decoder_forward.1} parent=47 // pred_check
          %p969 = pneg %p375
        $region74: #{decoder_forward.1} parent=47 // pred_check_branch
          %971 = sbr.rel (%p969) target = $region76
        $region75: #{decoder_forward.1} parent=47 // pred_region
          %p972 = scmp.lt.s32.totalorder %s73, 1
          %s973 = scalar_select %p972, %s73, 1
          %s974 = scalar_lea.vmem %s25, %s973
        $region76: #{decoder_forward.1} parent=47 // pred_fallthru
          _
        // Predicated region
        $region77: #{decoder_forward.1} parent=47 // pred_check
          %p975 = pneg %p401
        $region78: #{decoder_forward.1} parent=47 // pred_check_branch
          %977 = sbr.rel (%p975) target = $region80
        $region79: #{decoder_forward.1} parent=47 // pred_region
          %p978 = scmp.lt.s32.totalorder %s73, 1
          %s979 = scalar_select %p978, %s73, 1
          %s980 = scalar_lea.vmem %s27, %s979
        $region80: #{decoder_forward.1} parent=47 // pred_fallthru
          _
        // Predicated region
        $region81: #{decoder_forward.1} parent=47 // pred_check
          %p981 = pneg %p427
        $region82: #{decoder_forward.1} parent=47 // pred_check_branch
          %983 = sbr.rel (%p981) target = $region84
        $region83: #{decoder_forward.1} parent=47 // pred_region
          %p984 = scmp.lt.s32.totalorder %s73, 1
          %s985 = scalar_select %p984, %s73, 1
          %s986 = smul.addr %s985, 4
          %s987 = smul.addr %s986, 4
          %s988 = scalar_lea.vmem %s29, %s987
        $region84: #{decoder_forward.1} parent=47 // pred_fallthru
          _
        // Predicated region
        $region85: #{decoder_forward.1} parent=47 // pred_check
          %p989 = pneg %p453
        $region86: #{decoder_forward.1} parent=47 // pred_check_branch
          %991 = sbr.rel (%p989) target = $region88
        $region87: #{decoder_forward.1} parent=47 // pred_region
          %p992 = scmp.lt.s32.totalorder %s73, 1
          %s993 = scalar_select %p992, %s73, 1
          %s994 = scalar_lea.vmem %s31, %s993
        $region88: #{decoder_forward.1} parent=47 // pred_fallthru
          _
        // Predicated region
        $region89: #{decoder_forward.1} parent=47 // pred_check
          %p995 = pneg %p479
        $region90: #{decoder_forward.1} parent=47 // pred_check_branch
          %997 = sbr.rel (%p995) target = $region92
        $region91: #{decoder_forward.1} parent=47 // pred_region
          %p998 = scmp.lt.s32.totalorder %s73, 1
          %s999 = scalar_select %p998, %s73, 1
          %s1000 = smul.addr %s999, 4
          %s1001 = smul.addr %s1000, 4
          %s1002 = scalar_lea.vmem %s33, %s1001
        $region92: #{decoder_forward.1} parent=47 // pred_fallthru
          _
        // Predicated region
        $region93: #{decoder_forward.1} parent=47 // pred_check
          %p1003 = pneg %p505
        $region94: #{decoder_forward.1} parent=47 // pred_check_branch
          %1005 = sbr.rel (%p1003) target = $region96
        $region95: #{decoder_forward.1} parent=47 // pred_region
          %p1006 = scmp.lt.s32.totalorder %s73, 1
          %s1007 = scalar_select %p1006, %s73, 1
          %s1008 = scalar_lea.vmem %s35, %s1007
        $region96: #{decoder_forward.1} parent=47 // pred_fallthru
          _
        // Predicated region
        $region97: #{decoder_forward.1} parent=47 // pred_check
          %p1009 = pneg %p531
        $region98: #{decoder_forward.1} parent=47 // pred_check_branch
          %1011 = sbr.rel (%p1009) target = $region100
        $region99: #{decoder_forward.1} parent=47 // pred_region
          %p1012 = scmp.lt.s32.totalorder %s73, 1
          %s1013 = scalar_select %p1012, %s73, 1
          %s1014 = smul.addr %s1013, 4
          %s1015 = smul.addr %s1014, 4
          %s1016 = scalar_lea.vmem %s37, %s1015
        $region100: #{decoder_forward.1} parent=47 // pred_fallthru
          _
        // Predicated region
        $region101: #{decoder_forward.1} parent=47 // pred_check
          %p1017 = pneg %p557
        $region102: #{decoder_forward.1} parent=47 // pred_check_branch
          %1019 = sbr.rel (%p1017) target = $region104
        $region103: #{decoder_forward.1} parent=47 // pred_region
          %p1020 = scmp.lt.s32.totalorder %s73, 1
          %s1021 = scalar_select %p1020, %s73, 1
          %s1022 = scalar_lea.vmem %s39, %s1021
        $region104: #{decoder_forward.1} parent=47 // pred_fallthru
          _
        // Predicated region
        $region105: #{decoder_forward.1} parent=47 // pred_check
          %p1023 = pneg %p583
        $region106: #{decoder_forward.1} parent=47 // pred_check_branch
          %1025 = sbr.rel (%p1023) target = $region108
        $region107: #{decoder_forward.1} parent=47 // pred_region
          %p1026 = scmp.lt.s32.totalorder %s73, 1
          %s1027 = scalar_select %p1026, %s73, 1
          %s1028 = scalar_lea.vmem %s41, %s1027
        $region108: #{decoder_forward.1} parent=47 // pred_fallthru
          _
        // Predicated region
        $region109: #{decoder_forward.1} parent=47 // pred_check
          %p1029 = pneg %p609
        $region110: #{decoder_forward.1} parent=47 // pred_check_branch
          %1031 = sbr.rel (%p1029) target = $region112
        $region111: #{decoder_forward.1} parent=47 // pred_region
          %p1032 = scmp.lt.s32.totalorder %s73, 1
          %s1033 = scalar_select %p1032, %s73, 1
          %s1034 = scalar_lea.vmem %s43, %s1033
        $region112: #{decoder_forward.1} parent=47 // pred_fallthru
          _
        // Predicated region
        $region113: #{decoder_forward.1} parent=47 // pred_check
          %p1035 = pneg %p635
        $region114: #{decoder_forward.1} parent=47 // pred_check_branch
          %1037 = sbr.rel (%p1035) target = $region116
        $region115: #{decoder_forward.1} parent=47 // pred_region
          %p1038 = scmp.lt.s32.totalorder %s73, 1
          %s1039 = scalar_select %p1038, %s73, 1
          %s1040 = smul.addr %s1039, 4
          %s1041 = smul.addr %s1040, 4
          %s1042 = scalar_lea.vmem %s45, %s1041
        $region116: #{decoder_forward.1} parent=47 // pred_fallthru
          _
        // Predicated region
        $region117: #{decoder_forward.1} parent=47 // pred_check
          %p1043 = pneg %p661
        $region118: #{decoder_forward.1} parent=47 // pred_check_branch
          %1045 = sbr.rel (%p1043) target = $region120
        $region119: #{decoder_forward.1} parent=47 // pred_region
          %p1046 = scmp.lt.s32.totalorder %s73, 1
          %s1047 = scalar_select %p1046, %s73, 1
          %s1048 = scalar_lea.vmem %s47, %s1047
        $region120: #{decoder_forward.1} parent=47 // pred_fallthru
          _
        // Predicated region
        $region121: #{decoder_forward.1} parent=47 // pred_check
          %p1049 = pneg %p687
        $region122: #{decoder_forward.1} parent=47 // pred_check_branch
          %1051 = sbr.rel (%p1049) target = $region124
        $region123: #{decoder_forward.1} parent=47 // pred_region
          %p1052 = scmp.lt.s32.totalorder %s73, 1
          %s1053 = scalar_select %p1052, %s73, 1
          %s1054 = smul.addr %s1053, 16
          %s1055 = smul.addr %s1054, 4
          %s1056 = scalar_lea.vmem %s49, %s1055
        $region124: #{decoder_forward.1} parent=47 // pred_fallthru
          _
        // Predicated region
        $region125: #{decoder_forward.1} parent=47 // pred_check
          %p1057 = pneg %p713
        $region126: #{decoder_forward.1} parent=47 // pred_check_branch
          %1059 = sbr.rel (%p1057) target = $region128
        $region127: #{decoder_forward.1} parent=47 // pred_region
          %p1060 = scmp.lt.s32.totalorder %s73, 1
          %s1061 = scalar_select %p1060, %s73, 1
          %s1062 = scalar_lea.vmem %s51, %s1061
        $region128: #{decoder_forward.1} parent=47 // pred_fallthru
          _
        // Predicated region
        $region129: #{decoder_forward.1} parent=47 // pred_check
          %p1063 = pneg %p739
        $region130: #{decoder_forward.1} parent=47 // pred_check_branch
          %1065 = sbr.rel (%p1063) target = $region132
        $region131: #{decoder_forward.1} parent=47 // pred_region
          %p1066 = scmp.lt.s32.totalorder %s73, 1
          %s1067 = scalar_select %p1066, %s73, 1
          %s1068 = scalar_lea.vmem %s53, %s1067
        $region132: #{decoder_forward.1} parent=47 // pred_fallthru
          _
        // Predicated region
        $region133: #{decoder_forward.1} parent=47 // pred_check
          %p1069 = pneg %p765
        $region134: #{decoder_forward.1} parent=47 // pred_check_branch
          %1071 = sbr.rel (%p1069) target = $region136
        $region135: #{decoder_forward.1} parent=47 // pred_region
          %p1072 = scmp.lt.s32.totalorder %s73, 1
          %s1073 = scalar_select %p1072, %s73, 1
          %s1074 = scalar_lea.vmem %s55, %s1073
        $region136: #{decoder_forward.1} parent=47 // pred_fallthru
          _
      $region48: #{decoder_forward.1} parent=5 // pred_fallthru
        _
      %p1075 = scmp.le.s32.totalorder 1, %s73
      %p1076 = scmp.lt.s32.totalorder %s73, 3
      %p1077 = pnand %p1075, %p1076
      %p1078 = pneg %p1077
      // Predicated region
      $region137: #{decoder_forward.1} parent=5 // pred_check
        _
      $region138: #{decoder_forward.1} parent=5 // pred_check_branch
        %1080 = sbr.rel (%p1077) target = $region140
      $region139: #{decoder_forward.1} parent=5 // pred_region
        %s1081 = ssub.s32 %s73, 1
        %p1082 = pneg %p94
        %p1083 = pneg %p91
        %p1084 = pneg %p115
        %p1085 = pneg %p112
        %p1086 = pneg %p136
        %p1087 = pneg %p133
        %p1088 = pneg %p157
        %p1089 = pneg %p154
        %p1090 = pneg %p178
        %p1091 = pneg %p175
        %p1092 = pneg %p199
        %p1093 = pneg %p196
        %p1094 = scmp.lt.s32.totalorder %s78, 1
        %s1095 = scalar_select %p1094, %s78, 1
        %s1096 = scalar_lea.vmem %s13, %s1095
        %p1097 = pneg %p225
        %p1098 = pneg %p222
        %p1099 = scmp.lt.s32.totalorder %s78, 1
        %s1100 = scalar_select %p1099, %s78, 1
        %s1101 = scalar_lea.vmem %s15, %s1100
        %p1102 = pneg %p251
        %p1103 = pneg %p248
        %p1104 = scmp.lt.s32.totalorder %s78, 1
        %s1105 = scalar_select %p1104, %s78, 1
        %s1106 = smul.addr %s1105, 4
        %s1107 = smul.addr %s1106, 4
        %s1108 = scalar_lea.vmem %s17, %s1107
        %p1109 = pneg %p277
        %p1110 = pneg %p274
        %p1111 = scmp.lt.s32.totalorder %s78, 1
        %s1112 = scalar_select %p1111, %s78, 1
        %s1113 = scalar_lea.vmem %s19, %s1112
        %p1114 = pneg %p303
        %p1115 = pneg %p300
        %p1116 = scmp.lt.s32.totalorder %s78, 1
        %s1117 = scalar_select %p1116, %s78, 1
        %s1118 = smul.addr %s1117, 4
        %s1119 = smul.addr %s1118, 4
        %s1120 = scalar_lea.vmem %s21, %s1119
        %p1121 = pneg %p329
        %p1122 = pneg %p326
        %p1123 = scmp.lt.s32.totalorder %s78, 1
        %s1124 = scalar_select %p1123, %s78, 1
        %s1125 = scalar_lea.vmem %s23, %s1124
        %p1126 = pneg %p355
        %p1127 = pneg %p352
        %p1128 = scmp.lt.s32.totalorder %s78, 1
        %s1129 = scalar_select %p1128, %s78, 1
        %s1130 = scalar_lea.vmem %s25, %s1129
        %p1131 = pneg %p381
        %p1132 = pneg %p378
        %p1133 = scmp.lt.s32.totalorder %s78, 1
        %s1134 = scalar_select %p1133, %s78, 1
        %s1135 = scalar_lea.vmem %s27, %s1134
        %p1136 = pneg %p407
        %p1137 = pneg %p404
        %p1138 = scmp.lt.s32.totalorder %s78, 1
        %s1139 = scalar_select %p1138, %s78, 1
        %s1140 = smul.addr %s1139, 4
        %s1141 = smul.addr %s1140, 4
        %s1142 = scalar_lea.vmem %s29, %s1141
        %p1143 = pneg %p433
        %p1144 = pneg %p430
        %p1145 = scmp.lt.s32.totalorder %s78, 1
        %s1146 = scalar_select %p1145, %s78, 1
        %s1147 = scalar_lea.vmem %s31, %s1146
        %p1148 = pneg %p459
        %p1149 = pneg %p456
        %p1150 = scmp.lt.s32.totalorder %s78, 1
        %s1151 = scalar_select %p1150, %s78, 1
        %s1152 = smul.addr %s1151, 4
        %s1153 = smul.addr %s1152, 4
        %s1154 = scalar_lea.vmem %s33, %s1153
        %p1155 = pneg %p485
        %p1156 = pneg %p482
        %p1157 = scmp.lt.s32.totalorder %s78, 1
        %s1158 = scalar_select %p1157, %s78, 1
        %s1159 = scalar_lea.vmem %s35, %s1158
        %p1160 = pneg %p511
        %p1161 = pneg %p508
        %p1162 = scmp.lt.s32.totalorder %s78, 1
        %s1163 = scalar_select %p1162, %s78, 1
        %s1164 = smul.addr %s1163, 4
        %s1165 = smul.addr %s1164, 4
        %s1166 = scalar_lea.vmem %s37, %s1165
        %p1167 = pneg %p537
        %p1168 = pneg %p534
        %p1169 = scmp.lt.s32.totalorder %s78, 1
        %s1170 = scalar_select %p1169, %s78, 1
        %s1171 = scalar_lea.vmem %s39, %s1170
        %p1172 = pneg %p563
        %p1173 = pneg %p560
        %p1174 = scmp.lt.s32.totalorder %s78, 1
        %s1175 = scalar_select %p1174, %s78, 1
        %s1176 = scalar_lea.vmem %s41, %s1175
        %p1177 = pneg %p589
        %p1178 = pneg %p586
        %p1179 = scmp.lt.s32.totalorder %s78, 1
        %s1180 = scalar_select %p1179, %s78, 1
        %s1181 = scalar_lea.vmem %s43, %s1180
        %p1182 = pneg %p615
        %p1183 = pneg %p612
        %p1184 = scmp.lt.s32.totalorder %s78, 1
        %s1185 = scalar_select %p1184, %s78, 1
        %s1186 = smul.addr %s1185, 4
        %s1187 = smul.addr %s1186, 4
        %s1188 = scalar_lea.vmem %s45, %s1187
        %p1189 = pneg %p641
        %p1190 = pneg %p638
        %p1191 = scmp.lt.s32.totalorder %s78, 1
        %s1192 = scalar_select %p1191, %s78, 1
        %s1193 = scalar_lea.vmem %s47, %s1192
        %p1194 = pneg %p667
        %p1195 = pneg %p664
        %p1196 = scmp.lt.s32.totalorder %s78, 1
        %s1197 = scalar_select %p1196, %s78, 1
        %s1198 = smul.addr %s1197, 16
        %s1199 = smul.addr %s1198, 4
        %s1200 = scalar_lea.vmem %s49, %s1199
        %p1201 = pneg %p693
        %p1202 = pneg %p690
        %p1203 = scmp.lt.s32.totalorder %s78, 1
        %s1204 = scalar_select %p1203, %s78, 1
        %s1205 = scalar_lea.vmem %s51, %s1204
        %p1206 = pneg %p719
        %p1207 = pneg %p716
        %p1208 = scmp.lt.s32.totalorder %s78, 1
        %s1209 = scalar_select %p1208, %s78, 1
        %s1210 = scalar_lea.vmem %s53, %s1209
        %p1211 = pneg %p745
        %p1212 = pneg %p742
        %p1213 = scmp.lt.s32.totalorder %s78, 1
        %s1214 = scalar_select %p1213, %s78, 1
        %s1215 = scalar_lea.vmem %s55, %s1214
        %p1216 = pneg %p771
        %p1217 = pneg %p768
        %p1218 = pneg %p792
        %p1219 = pneg %p789
        %p1220 = pneg %p813
        %p1221 = pneg %p810
        %p1222 = pneg %p834
        %p1223 = pneg %p831
        %p1224 = pneg %p860
        %p1225 = pneg %p857
        %p1226 = scmp.lt.s32.totalorder %s78, 1
        %s1227 = scalar_select %p1226, %s78, 1
        %s1228 = smul.addr %s1227, 4
        %s1229 = smul.addr %s1228, 8
        %s1230 = scalar_lea.vmem %s63, %s1229
        %p1231 = pneg %p886
        %p1232 = pneg %p883
        %p1233 = scmp.lt.s32.totalorder %s78, 1
        %s1234 = scalar_select %p1233, %s78, 1
        %s1235 = smul.addr %s1234, 4
        %s1236 = smul.addr %s1235, 8
        %s1237 = scalar_lea.vmem %s65, %s1236
        %p1238 = scmp.lt.s32.totalorder %s78, 1
        %s1239 = scalar_select %p1238, %s78, 1
        %s1240 = scalar_lea.vmem %s13, %s1239
        %p1241 = scmp.lt.s32.totalorder %s78, 1
        %s1242 = scalar_select %p1241, %s78, 1
        %s1243 = scalar_lea.vmem %s15, %s1242
        %p1244 = scmp.lt.s32.totalorder %s78, 1
        %s1245 = scalar_select %p1244, %s78, 1
        %s1246 = smul.addr %s1245, 4
        %s1247 = smul.addr %s1246, 4
        %s1248 = scalar_lea.vmem %s17, %s1247
        %p1249 = scmp.lt.s32.totalorder %s78, 1
        %s1250 = scalar_select %p1249, %s78, 1
        %s1251 = scalar_lea.vmem %s19, %s1250
        %p1252 = scmp.lt.s32.totalorder %s78, 1
        %s1253 = scalar_select %p1252, %s78, 1
        %s1254 = smul.addr %s1253, 4
        %s1255 = smul.addr %s1254, 4
        %s1256 = scalar_lea.vmem %s21, %s1255
        %p1257 = scmp.lt.s32.totalorder %s78, 1
        %s1258 = scalar_select %p1257, %s78, 1
        %s1259 = scalar_lea.vmem %s23, %s1258
        %p1260 = scmp.lt.s32.totalorder %s78, 1
        %s1261 = scalar_select %p1260, %s78, 1
        %s1262 = scalar_lea.vmem %s25, %s1261
        %p1263 = scmp.lt.s32.totalorder %s78, 1
        %s1264 = scalar_select %p1263, %s78, 1
        %s1265 = scalar_lea.vmem %s27, %s1264
        %p1266 = scmp.lt.s32.totalorder %s78, 1
        %s1267 = scalar_select %p1266, %s78, 1
        %s1268 = smul.addr %s1267, 4
        %s1269 = smul.addr %s1268, 4
        %s1270 = scalar_lea.vmem %s29, %s1269
        %p1271 = scmp.lt.s32.totalorder %s78, 1
        %s1272 = scalar_select %p1271, %s78, 1
        %s1273 = scalar_lea.vmem %s31, %s1272
        %p1274 = scmp.lt.s32.totalorder %s78, 1
        %s1275 = scalar_select %p1274, %s78, 1
        %s1276 = smul.addr %s1275, 4
        %s1277 = smul.addr %s1276, 4
        %s1278 = scalar_lea.vmem %s33, %s1277
        %p1279 = scmp.lt.s32.totalorder %s78, 1
        %s1280 = scalar_select %p1279, %s78, 1
        %s1281 = scalar_lea.vmem %s35, %s1280
        %p1282 = scmp.lt.s32.totalorder %s78, 1
        %s1283 = scalar_select %p1282, %s78, 1
        %s1284 = smul.addr %s1283, 4
        %s1285 = smul.addr %s1284, 4
        %s1286 = scalar_lea.vmem %s37, %s1285
        %p1287 = scmp.lt.s32.totalorder %s78, 1
        %s1288 = scalar_select %p1287, %s78, 1
        %s1289 = scalar_lea.vmem %s39, %s1288
        %p1290 = scmp.lt.s32.totalorder %s78, 1
        %s1291 = scalar_select %p1290, %s78, 1
        %s1292 = scalar_lea.vmem %s41, %s1291
        %p1293 = scmp.lt.s32.totalorder %s78, 1
        %s1294 = scalar_select %p1293, %s78, 1
        %s1295 = scalar_lea.vmem %s43, %s1294
        %p1296 = scmp.lt.s32.totalorder %s78, 1
        %s1297 = scalar_select %p1296, %s78, 1
        %s1298 = smul.addr %s1297, 4
        %s1299 = smul.addr %s1298, 4
        %s1300 = scalar_lea.vmem %s45, %s1299
        %p1301 = scmp.lt.s32.totalorder %s78, 1
        %s1302 = scalar_select %p1301, %s78, 1
        %s1303 = scalar_lea.vmem %s47, %s1302
        %p1304 = scmp.lt.s32.totalorder %s78, 1
        %s1305 = scalar_select %p1304, %s78, 1
        %s1306 = smul.addr %s1305, 16
        %s1307 = smul.addr %s1306, 4
        %s1308 = scalar_lea.vmem %s49, %s1307
        %p1309 = scmp.lt.s32.totalorder %s78, 1
        %s1310 = scalar_select %p1309, %s78, 1
        %s1311 = scalar_lea.vmem %s51, %s1310
        %p1312 = scmp.lt.s32.totalorder %s78, 1
        %s1313 = scalar_select %p1312, %s78, 1
        %s1314 = scalar_lea.vmem %s53, %s1313
        %p1315 = scmp.lt.s32.totalorder %s78, 1
        %s1316 = scalar_select %p1315, %s78, 1
        %s1317 = scalar_lea.vmem %s55, %s1316
        %p1318 = scmp.lt.s32.totalorder %s78, 1
        %s1319 = scalar_select %p1318, %s78, 1
        %s1320 = smul.addr %s1319, 4
        %s1321 = smul.addr %s1320, 8
        %s1322 = scalar_lea.vmem %s63, %s1321
        %p1323 = scmp.lt.s32.totalorder %s78, 1
        %s1324 = scalar_select %p1323, %s78, 1
        %s1325 = smul.addr %s1324, 4
        %s1326 = smul.addr %s1325, 8
        %s1327 = scalar_lea.vmem %s65, %s1326
        %p1329 = scmp.eq.s32.totalorder %s78, 0
        // Predicated region
        $region141: #{decoder_forward.1} parent=139 // pred_check
          %p1330 = pneg %p1329
        $region142: #{decoder_forward.1} parent=139 // pred_check_branch
          %1332 = sbr.rel (%p1330) target = $region144
        $region143: #{decoder_forward.1} parent=139 // pred_region
          %v1333 = vld [vmem:[%s1] sm:$0xff]
          %v1334 = vld [vmem:[%s1 + $0x8] sm:$0xff]
          %v1335 = vmul.f32 %v1333, 5.656854
          %v1336 = vmul.f32 %v1334, 5.656854
          %v1337 = vld [vmem:[%s5] sm:$0xff]
          %v1338 = vld [vmem:[%s5 + $0x8] sm:$0xff]
          %v1339 = vadd.f32 %v1335, %v1337
          %v1340 = vadd.f32 %v1336, %v1338
          %vm1341 = vcmask 261120
          %1342 = vst.msk [vmem:[#allocation2] sm:$0xff] %vm1341, %v1339
          %1343 = vst.msk [vmem:[#allocation2 + $0x8] sm:$0xff] %vm1341, %v1340
          %v1344 = vld [vmem:[%s3] sm:$0xff]
          %v1345 = vld [vmem:[%s3 + $0x8] sm:$0xff]
          %v1346 = vmul.f32 %v1344, 5.656854
          %v1347 = vmul.f32 %v1345, 5.656854
          %v1348 = vld [vmem:[%s7] sm:$0xff]
          %v1349 = vld [vmem:[%s7 + $0x8] sm:$0xff]
          %v1350 = vadd.f32 %v1346, %v1348
          %v1351 = vadd.f32 %v1347, %v1349
          %1352 = vst.msk [vmem:[#allocation3] sm:$0xff] %vm1341, %v1350
          %1353 = vst.msk [vmem:[#allocation3 + $0x8] sm:$0xff] %vm1341, %v1351
        $region144: #{decoder_forward.1} parent=139 // pred_fallthru
          _
        %v1354 = vld [vmem:[#allocation2] sm:$0xff]
        %v1355 = vld [vmem:[#allocation2 + $0x8] sm:$0xff]
        %v1356 = vld [vmem:[#allocation3] sm:$0xff]
        %v1357 = vld [vmem:[#allocation3 + $0x8] sm:$0xff]
        %v1358 = vld [vmem:[%s9] sm:$0xff]
        %v1359 = vld [vmem:[%s9 + $0x8] sm:$0xff]
        %v1360 = vld [vmem:[%s11] sm:$0xff]
        %v1361 = vld [vmem:[%s11 + $0x8] sm:$0xff]
        %v1362 = vld [vmem:[%s1240] sm:$0x1]
        %v1363 = vld [vmem:[%s1243] sm:$0x1]
        %vm1364 = vcmask 261120
        %v1365 = vsel %vm1364, %v1354, 0.0
        %1366 = vadd.xlane.f32.xlu0 %v1365
        %v1367 = vpop.xlane.xlu0 %1366
        %v1368 = vsel %vm1364, %v1355, 0.0
        %1369 = vadd.xlane.f32.xlu0 %v1368
        %v1370 = vpop.xlane.xlu0 %1369
        %v1371 = vrcp.pop 32.0
        %v1372 = vmul.f32 %v1367, %v1371
        %v1373 = vmul.f32 %v1370, %v1371
        %v1374 = vsub.f32 %v1354, %v1372
        %v1375 = vsub.f32 %v1355, %v1373
        %v1376 = vmul.f32 %v1374, %v1374
        %v1377 = vmul.f32 %v1375, %v1375
        %v1378 = vsel %vm1364, %v1376, 0.0
        %1379 = vadd.xlane.f32.xlu0 %v1378
        %v1380 = vpop.xlane.xlu0 %1379
        %v1381 = vsel %vm1364, %v1377, 0.0
        %1382 = vadd.xlane.f32.xlu0 %v1381
        %v1383 = vpop.xlane.xlu0 %1382
        %v1384 = vmul.f32 %v1380, %v1371
        %v1385 = vmul.f32 %v1383, %v1371
        %v1386 = vadd.f32 %v1384, 1e-05
        %v1387 = vadd.f32 %v1385, 1e-05
        %v1388 = vrsqrt.pop %v1386
        %v1389 = vrsqrt.pop %v1387
        %v1390 = vmul.f32 %v1374, %v1388
        %v1391 = vmul.f32 %v1375, %v1389
        %v1393 = vlaneseq
        %v1394 = vshrl.u32 %v1393, 7
        %v1395 = vsub.s32 0, %v1394
        %v1396 = vrot.slane %v1362, %v1395
        %v1398 = vmul.f32 %v1390, %v1396
        %v1399 = vmul.f32 %v1391, %v1396
        %v1401 = vlaneseq
        %v1402 = vshrl.u32 %v1401, 7
        %v1403 = vsub.s32 0, %v1402
        %v1404 = vrot.slane %v1363, %v1403
        %v1406 = vadd.f32 %v1398, %v1404
        %v1407 = vadd.f32 %v1399, %v1404
        %v1408 = vpack.c.bf16 %v1407, %v1406
        %v1409 = vld [vmem:[%s1248] sm:$0xf]
        %v1410 = vld [vmem:[%s1248 + $0x4] sm:$0xf]
        %v1411 = vld [vmem:[%s1248 + $0x8] sm:$0xf]
        %v1412 = vld [vmem:[%s1248 + $0xc] sm:$0xf]
        %v1413 = vld [vmem:[%s1251] sm:$0x1]
        %v1415 = vlaneseq
        %v1416 = vshrl.u32 %v1415, 7
        %v1417 = vsub.s32 0, %v1416
        %v1418 = vrot.slane %v1413, %v1417
        %v1424 = vunpack.c.l.b16 %v1409
        %v1425 = vunpack.c.l.b16 %v1410
        %v1426 = vunpack.c.l.b16 %v1411
        %v1427 = vunpack.c.l.b16 %v1412
        %v1428 = vpack.c.b16 %v1425, %v1424
        %v1429 = vpack.c.b16 %v1427, %v1426
        %v1433 = vsel %vm1364, %v1408, 0
        %1435 = vmatprep.subr.bf16.mxu0 0
        %1436 = vmatpush1.bf16.msra.mxu0 %v1428
        %1437 = vmatprep.subr.bf16.mxu0 0
        %1438 = vmatpush1.bf16.msra.mxu0 %v1429
        %1439 = vmatprep.subr.bf16.mxu0 0
        %1440 = vmatpush1.bf16.msra.mxu0 0
        %1441 = vmatprep.subr.bf16.mxu0 0
        %1442 = vmatpush1.bf16.msra.mxu0 0
        %1443 = vmatprep.subr.bf16.mxu0 0
        %1444 = vmatpush1.bf16.msra.mxu0 0
        %1445 = vmatprep.subr.bf16.mxu0 0
        %1446 = vmatpush1.bf16.msra.mxu0 0
        %1447 = vmatprep.subr.bf16.mxu0 0
        %1448 = vmatpush1.bf16.msra.mxu0 0
        %1449 = vmatprep.subr.bf16.mxu0 0
        %1450 = vmatpush1.bf16.msra.mxu0 0
        %1451 = vmatprep.subr.bf16.mxu0 0
        %1452 = vmatpush1.bf16.msra.mxu0 0
        %1453 = vmatprep.subr.bf16.mxu0 0
        %1454 = vmatpush1.bf16.msra.mxu0 0
        %1455 = vmatprep.subr.bf16.mxu0 0
        %1456 = vmatpush1.bf16.msra.mxu0 0
        %1457 = vmatprep.subr.bf16.mxu0 0
        %1458 = vmatpush1.bf16.msra.mxu0 0
        %1459 = vmatprep.subr.bf16.mxu0 0
        %1460 = vmatpush1.bf16.msra.mxu0 0
        %1461 = vmatprep.subr.bf16.mxu0 0
        %1462 = vmatpush1.bf16.msra.mxu0 0
        %1463 = vmatprep.subr.bf16.mxu0 0
        %1464 = vmatpush1.bf16.msra.mxu0 0
        %1465 = vmatprep.subr.bf16.mxu0 0
        %1466 = vmatpush1.bf16.msra.mxu0 0
        %1467 = vmatprep.mubr.bf16.mxu0 0
        %1468 = vmatmul.mubr.bf16.gmra.mrb[0].mxu0 %v1433
        %v1469 = vpop.f32.mrb[0].mxu0
        %v1470 = vadd.f32 %v1418, %v1469
        %v1471 = vpop.f32.mrb[0].mxu0
        %v1472 = vpop.f32.mrb[0].mxu0
        %v1473 = vadd.f32 %v1418, %v1472
        %v1474 = vpop.f32.mrb[0].mxu0
        %1475 = vdwg.mxu0
        %v1476 = vld [vmem:[%s1256] sm:$0xf]
        %v1477 = vld [vmem:[%s1256 + $0x4] sm:$0xf]
        %v1478 = vld [vmem:[%s1256 + $0x8] sm:$0xf]
        %v1479 = vld [vmem:[%s1256 + $0xc] sm:$0xf]
        %v1480 = vld [vmem:[%s1259] sm:$0x1]
        %1483 = vrot.lane.b32.xlu0 %v1470, 112
        %v1484 = vpop.permute.xlu0 %1483
        %1485 = vrot.lane.b32.xlu0 %v1473, 112
        %v1486 = vpop.permute.xlu0 %1485
        %v1489 = vpack.c.bf16 %v1470, %v1470
        %v1490 = vpack.c.bf16 %v1473, %v1473
        %v1491 = vpack.c.bf16 %v1484, %v1484
        %v1492 = vpack.c.bf16 %v1486, %v1486
        %1494 = vrot.lane.b32.xlu0 %v1489, 96
        %v1495 = vpop.permute.xlu0 %1494
        %vm1496 = vcmask 130048
        %v1498 = vsel %vm1496, %v1489, 0
        %v1501 = vsel %vm1496, %v1495, 0
        %1503 = vmatprep.subr.bf16.mxu0 0
        %1504 = vmatpush1.bf16.xpose.msra.mxu0 %v1501
        %1505 = vmatprep.subr.bf16.mxu0 0
        %1506 = vmatpush1.bf16.xpose.msra.mxu0 0
        %1507 = vmatprep.subr.bf16.mxu0 0
        %1508 = vmatpush1.bf16.xpose.msra.mxu0 0
        %1509 = vmatprep.subr.bf16.mxu0 0
        %1510 = vmatpush1.bf16.xpose.msra.mxu0 0
        %1511 = vmatprep.subr.bf16.mxu0 0
        %1512 = vmatpush1.bf16.xpose.msra.mxu0 0
        %1513 = vmatprep.subr.bf16.mxu0 0
        %1514 = vmatpush1.bf16.xpose.msra.mxu0 0
        %1515 = vmatprep.subr.bf16.mxu0 0
        %1516 = vmatpush1.bf16.xpose.msra.mxu0 0
        %1517 = vmatprep.subr.bf16.mxu0 0
        %1518 = vmatpush1.bf16.xpose.msra.mxu0 0
        %1519 = vmatprep.subr.bf16.mxu0 0
        %1520 = vmatpush1.bf16.xpose.msra.mxu0 0
        %1521 = vmatprep.subr.bf16.mxu0 0
        %1522 = vmatpush1.bf16.xpose.msra.mxu0 0
        %1523 = vmatprep.subr.bf16.mxu0 0
        %1524 = vmatpush1.bf16.xpose.msra.mxu0 0
        %1525 = vmatprep.subr.bf16.mxu0 0
        %1526 = vmatpush1.bf16.xpose.msra.mxu0 0
        %1527 = vmatprep.subr.bf16.mxu0 0
        %1528 = vmatpush1.bf16.xpose.msra.mxu0 0
        %1529 = vmatprep.subr.bf16.mxu0 0
        %1530 = vmatpush1.bf16.xpose.msra.mxu0 0
        %1531 = vmatprep.subr.bf16.mxu0 0
        %1532 = vmatpush1.bf16.xpose.msra.mxu0 0
        %1533 = vmatprep.subr.bf16.mxu0 0
        %1534 = vmatpush1.bf16.xpose.msra.mxu0 0
        %1535 = vmatprep.mubr.bf16.mxu0 0
        %1536 = vmatmul.mubr.bf16.gmra.mrb[0].mxu0 %v1498
        %v1537 = vpop.f32.mrb[0].mxu0
        %v1538 = vadd.f32 0.0, %v1537
        %v1539 = vpop.f32.mrb[0].mxu0
        %v1540 = vpop.f32.mrb[0].mxu0
        %v1541 = vpop.f32.mrb[0].mxu0
        %1542 = vdwg.mxu0
        %1544 = vrot.lane.b32.xlu0 %v1490, 96
        %v1545 = vpop.permute.xlu0 %1544
        %v1547 = vsel %vm1496, %v1490, 0
        %v1550 = vsel %vm1496, %v1545, 0
        %1552 = vmatprep.subr.bf16.mxu0 0
        %1553 = vmatpush1.bf16.xpose.msra.mxu0 %v1550
        %1554 = vmatprep.subr.bf16.mxu0 0
        %1555 = vmatpush1.bf16.xpose.msra.mxu0 0
        %1556 = vmatprep.subr.bf16.mxu0 0
        %1557 = vmatpush1.bf16.xpose.msra.mxu0 0
        %1558 = vmatprep.subr.bf16.mxu0 0
        %1559 = vmatpush1.bf16.xpose.msra.mxu0 0
        %1560 = vmatprep.subr.bf16.mxu0 0
        %1561 = vmatpush1.bf16.xpose.msra.mxu0 0
        %1562 = vmatprep.subr.bf16.mxu0 0
        %1563 = vmatpush1.bf16.xpose.msra.mxu0 0
        %1564 = vmatprep.subr.bf16.mxu0 0
        %1565 = vmatpush1.bf16.xpose.msra.mxu0 0
        %1566 = vmatprep.subr.bf16.mxu0 0
        %1567 = vmatpush1.bf16.xpose.msra.mxu0 0
        %1568 = vmatprep.subr.bf16.mxu0 0
        %1569 = vmatpush1.bf16.xpose.msra.mxu0 0
        %1570 = vmatprep.subr.bf16.mxu0 0
        %1571 = vmatpush1.bf16.xpose.msra.mxu0 0
        %1572 = vmatprep.subr.bf16.mxu0 0
        %1573 = vmatpush1.bf16.xpose.msra.mxu0 0
        %1574 = vmatprep.subr.bf16.mxu0 0
        %1575 = vmatpush1.bf16.xpose.msra.mxu0 0
        %1576 = vmatprep.subr.bf16.mxu0 0
        %1577 = vmatpush1.bf16.xpose.msra.mxu0 0
        %1578 = vmatprep.subr.bf16.mxu0 0
        %1579 = vmatpush1.bf16.xpose.msra.mxu0 0
        %1580 = vmatprep.subr.bf16.mxu0 0
        %1581 = vmatpush1.bf16.xpose.msra.mxu0 0
        %1582 = vmatprep.subr.bf16.mxu0 0
        %1583 = vmatpush1.bf16.xpose.msra.mxu0 0
        %1584 = vmatprep.mubr.bf16.mxu0 0
        %1585 = vmatmul.mubr.bf16.gmra.mrb[0].mxu0 %v1547
        %v1586 = vpop.f32.mrb[0].mxu0
        %v1587 = vadd.f32 0.0, %v1586
        %v1588 = vpop.f32.mrb[0].mxu0
        %v1589 = vpop.f32.mrb[0].mxu0
        %v1590 = vpop.f32.mrb[0].mxu0
        %1591 = vdwg.mxu0
        %1593 = vrot.lane.b32.xlu0 %v1491, 96
        %v1594 = vpop.permute.xlu0 %1593
        %v1596 = vsel %vm1496, %v1491, 0
        %v1599 = vsel %vm1496, %v1594, 0
        %1601 = vmatprep.subr.bf16.mxu0 0
        %1602 = vmatpush1.bf16.xpose.msra.mxu0 %v1599
        %1603 = vmatprep.subr.bf16.mxu0 0
        %1604 = vmatpush1.bf16.xpose.msra.mxu0 0
        %1605 = vmatprep.subr.bf16.mxu0 0
        %1606 = vmatpush1.bf16.xpose.msra.mxu0 0
        %1607 = vmatprep.subr.bf16.mxu0 0
        %1608 = vmatpush1.bf16.xpose.msra.mxu0 0
        %1609 = vmatprep.subr.bf16.mxu0 0
        %1610 = vmatpush1.bf16.xpose.msra.mxu0 0
        %1611 = vmatprep.subr.bf16.mxu0 0
        %1612 = vmatpush1.bf16.xpose.msra.mxu0 0
        %1613 = vmatprep.subr.bf16.mxu0 0
        %1614 = vmatpush1.bf16.xpose.msra.mxu0 0
        %1615 = vmatprep.subr.bf16.mxu0 0
        %1616 = vmatpush1.bf16.xpose.msra.mxu0 0
        %1617 = vmatprep.subr.bf16.mxu0 0
        %1618 = vmatpush1.bf16.xpose.msra.mxu0 0
        %1619 = vmatprep.subr.bf16.mxu0 0
        %1620 = vmatpush1.bf16.xpose.msra.mxu0 0
        %1621 = vmatprep.subr.bf16.mxu0 0
        %1622 = vmatpush1.bf16.xpose.msra.mxu0 0
        %1623 = vmatprep.subr.bf16.mxu0 0
        %1624 = vmatpush1.bf16.xpose.msra.mxu0 0
        %1625 = vmatprep.subr.bf16.mxu0 0
        %1626 = vmatpush1.bf16.xpose.msra.mxu0 0
        %1627 = vmatprep.subr.bf16.mxu0 0
        %1628 = vmatpush1.bf16.xpose.msra.mxu0 0
        %1629 = vmatprep.subr.bf16.mxu0 0
        %1630 = vmatpush1.bf16.xpose.msra.mxu0 0
        %1631 = vmatprep.subr.bf16.mxu0 0
        %1632 = vmatpush1.bf16.xpose.msra.mxu0 0
        %1633 = vmatprep.mubr.bf16.mxu0 0
        %1634 = vmatmul.mubr.bf16.gmra.mrb[0].mxu0 %v1596
        %v1635 = vpop.f32.mrb[0].mxu0
        %v1636 = vadd.f32 0.0, %v1635
        %v1637 = vpop.f32.mrb[0].mxu0
        %v1638 = vpop.f32.mrb[0].mxu0
        %v1639 = vpop.f32.mrb[0].mxu0
        %1640 = vdwg.mxu0
        %1642 = vrot.lane.b32.xlu0 %v1492, 96
        %v1643 = vpop.permute.xlu0 %1642
        %v1645 = vsel %vm1496, %v1492, 0
        %v1648 = vsel %vm1496, %v1643, 0
        %1650 = vmatprep.subr.bf16.mxu0 0
        %1651 = vmatpush1.bf16.xpose.msra.mxu0 %v1648
        %1652 = vmatprep.subr.bf16.mxu0 0
        %1653 = vmatpush1.bf16.xpose.msra.mxu0 0
        %1654 = vmatprep.subr.bf16.mxu0 0
        %1655 = vmatpush1.bf16.xpose.msra.mxu0 0
        %1656 = vmatprep.subr.bf16.mxu0 0
        %1657 = vmatpush1.bf16.xpose.msra.mxu0 0
        %1658 = vmatprep.subr.bf16.mxu0 0
        %1659 = vmatpush1.bf16.xpose.msra.mxu0 0
        %1660 = vmatprep.subr.bf16.mxu0 0
        %1661 = vmatpush1.bf16.xpose.msra.mxu0 0
        %1662 = vmatprep.subr.bf16.mxu0 0
        %1663 = vmatpush1.bf16.xpose.msra.mxu0 0
        %1664 = vmatprep.subr.bf16.mxu0 0
        %1665 = vmatpush1.bf16.xpose.msra.mxu0 0
        %1666 = vmatprep.subr.bf16.mxu0 0
        %1667 = vmatpush1.bf16.xpose.msra.mxu0 0
        %1668 = vmatprep.subr.bf16.mxu0 0
        %1669 = vmatpush1.bf16.xpose.msra.mxu0 0
        %1670 = vmatprep.subr.bf16.mxu0 0
        %1671 = vmatpush1.bf16.xpose.msra.mxu0 0
        %1672 = vmatprep.subr.bf16.mxu0 0
        %1673 = vmatpush1.bf16.xpose.msra.mxu0 0
        %1674 = vmatprep.subr.bf16.mxu0 0
        %1675 = vmatpush1.bf16.xpose.msra.mxu0 0
        %1676 = vmatprep.subr.bf16.mxu0 0
        %1677 = vmatpush1.bf16.xpose.msra.mxu0 0
        %1678 = vmatprep.subr.bf16.mxu0 0
        %1679 = vmatpush1.bf16.xpose.msra.mxu0 0
        %1680 = vmatprep.subr.bf16.mxu0 0
        %1681 = vmatpush1.bf16.xpose.msra.mxu0 0
        %1682 = vmatprep.mubr.bf16.mxu0 0
        %1683 = vmatmul.mubr.bf16.gmra.mrb[0].mxu0 %v1645
        %v1684 = vpop.f32.mrb[0].mxu0
        %v1685 = vadd.f32 0.0, %v1684
        %v1686 = vpop.f32.mrb[0].mxu0
        %v1687 = vpop.f32.mrb[0].mxu0
        %v1688 = vpop.f32.mrb[0].mxu0
        %1689 = vdwg.mxu0
        %v1690 = vmul.f32 %v1538, 0.25
        %v1691 = vmul.f32 %v1587, 0.25
        %v1692 = vmul.f32 %v1636, 0.25
        %v1693 = vmul.f32 %v1685, 0.25
        %v1694 = vadd.f32 %v1690, %v1358
        %v1695 = vadd.f32 %v1691, %v1359
        %v1696 = vadd.f32 %v1692, %v1358
        %v1697 = vadd.f32 %v1693, %v1359
        %vm1698 = vcmask 64512
        %v1699 = vsel %vm1698, %v1694, -inf
        %1700 = vmax.xlane.f32.xlu0 %v1699
        %v1701 = vpop.xlane.xlu0 %1700
        %v1702 = vsel %vm1698, %v1695, -inf
        %1703 = vmax.xlane.f32.xlu0 %v1702
        %v1704 = vpop.xlane.xlu0 %1703
        %v1705 = vsel %vm1698, %v1696, -inf
        %1706 = vmax.xlane.f32.xlu0 %v1705
        %v1707 = vpop.xlane.xlu0 %1706
        %v1708 = vsel %vm1698, %v1697, -inf
        %1709 = vmax.xlane.f32.xlu0 %v1708
        %v1710 = vpop.xlane.xlu0 %1709
        %v1711 = vsub.f32 %v1694, %v1701
        %v1712 = vsub.f32 %v1695, %v1704
        %v1713 = vsub.f32 %v1696, %v1707
        %v1714 = vsub.f32 %v1697, %v1710
        %v1715 = vmul.f32 %v1711, 1.442695
        %v1716 = vpow.pop %v1715
        %v1717 = vmul.f32 %v1712, 1.442695
        %v1718 = vpow.pop %v1717
        %v1719 = vmul.f32 %v1713, 1.442695
        %v1720 = vpow.pop %v1719
        %v1721 = vmul.f32 %v1714, 1.442695
        %v1722 = vpow.pop %v1721
        %v1723 = vsel %vm1698, %v1716, 0.0
        %1724 = vadd.xlane.f32.xlu0 %v1723
        %v1725 = vpop.xlane.xlu0 %1724
        %v1726 = vsel %vm1698, %v1718, 0.0
        %1727 = vadd.xlane.f32.xlu0 %v1726
        %v1728 = vpop.xlane.xlu0 %1727
        %v1729 = vsel %vm1698, %v1720, 0.0
        %1730 = vadd.xlane.f32.xlu0 %v1729
        %v1731 = vpop.xlane.xlu0 %1730
        %v1732 = vsel %vm1698, %v1722, 0.0
        %1733 = vadd.xlane.f32.xlu0 %v1732
        %v1734 = vpop.xlane.xlu0 %1733
        %v1735 = vrcp.pop %v1725
        %v1736 = vrcp.pop %v1728
        %v1737 = vrcp.pop %v1731
        %v1738 = vrcp.pop %v1734
        %v1739 = vmul.f32 %v1716, %v1735
        %v1740 = vmul.f32 %v1718, %v1736
        %v1741 = vmul.f32 %v1720, %v1737
        %v1742 = vmul.f32 %v1722, %v1738
        %1743 = vst.msk [vmem:[%s1322] sm:$0xff] %vm1698, %v1739
        %1744 = vst.msk [vmem:[%s1322 + $0x8] sm:$0xff] %vm1698, %v1740
        %1745 = vst.msk [vmem:[%s1322 + $0x10] sm:$0xff] %vm1698, %v1741
        %1746 = vst.msk [vmem:[%s1322 + $0x18] sm:$0xff] %vm1698, %v1742
        %v1747 = vpack.c.bf16 %v1739, %v1739
        %v1748 = vpack.c.bf16 %v1740, %v1740
        %v1749 = vpack.c.bf16 %v1741, %v1741
        %v1750 = vpack.c.bf16 %v1742, %v1742
        %1751 = vrot.lane.b32.xlu0 %v1489, 64
        %v1752 = vpop.permute.xlu0 %1751
        %v1754 = vsel %vm1698, %v1747, 0
        %vm1756 = vcmask 1043456
        %v1758 = vsel %vm1756, %v1752, 0
        %1760 = vmatprep.subr.bf16.mxu0 0
        %1761 = vmatpush1.bf16.msra.mxu0 %v1758
        %1762 = vmatprep.subr.bf16.mxu0 0
        %1763 = vmatpush1.bf16.msra.mxu0 0
        %1764 = vmatprep.subr.bf16.mxu0 0
        %1765 = vmatpush1.bf16.msra.mxu0 0
        %1766 = vmatprep.subr.bf16.mxu0 0
        %1767 = vmatpush1.bf16.msra.mxu0 0
        %1768 = vmatprep.subr.bf16.mxu0 0
        %1769 = vmatpush1.bf16.msra.mxu0 0
        %1770 = vmatprep.subr.bf16.mxu0 0
        %1771 = vmatpush1.bf16.msra.mxu0 0
        %1772 = vmatprep.subr.bf16.mxu0 0
        %1773 = vmatpush1.bf16.msra.mxu0 0
        %1774 = vmatprep.subr.bf16.mxu0 0
        %1775 = vmatpush1.bf16.msra.mxu0 0
        %1776 = vmatprep.subr.bf16.mxu0 0
        %1777 = vmatpush1.bf16.msra.mxu0 0
        %1778 = vmatprep.subr.bf16.mxu0 0
        %1779 = vmatpush1.bf16.msra.mxu0 0
        %1780 = vmatprep.subr.bf16.mxu0 0
        %1781 = vmatpush1.bf16.msra.mxu0 0
        %1782 = vmatprep.subr.bf16.mxu0 0
        %1783 = vmatpush1.bf16.msra.mxu0 0
        %1784 = vmatprep.subr.bf16.mxu0 0
        %1785 = vmatpush1.bf16.msra.mxu0 0
        %1786 = vmatprep.subr.bf16.mxu0 0
        %1787 = vmatpush1.bf16.msra.mxu0 0
        %1788 = vmatprep.subr.bf16.mxu0 0
        %1789 = vmatpush1.bf16.msra.mxu0 0
        %1790 = vmatprep.subr.bf16.mxu0 0
        %1791 = vmatpush1.bf16.msra.mxu0 0
        %1792 = vmatprep.mubr.bf16.mxu0 0
        %1793 = vmatmul.mubr.bf16.gmra.mrb[0].mxu0 %v1754
        %v1794 = vpop.f32.mrb[0].mxu0
        %v1795 = vadd.f32 0.0, %v1794
        %v1796 = vpop.f32.mrb[0].mxu0
        %v1797 = vpop.f32.mrb[0].mxu0
        %v1798 = vpop.f32.mrb[0].mxu0
        %1799 = vdwg.mxu0
        %1800 = vrot.lane.b32.xlu0 %v1490, 64
        %v1801 = vpop.permute.xlu0 %1800
        %v1803 = vsel %vm1698, %v1748, 0
        %v1806 = vsel %vm1756, %v1801, 0
        %1808 = vmatprep.subr.bf16.mxu0 0
        %1809 = vmatpush1.bf16.msra.mxu0 %v1806
        %1810 = vmatprep.subr.bf16.mxu0 0
        %1811 = vmatpush1.bf16.msra.mxu0 0
        %1812 = vmatprep.subr.bf16.mxu0 0
        %1813 = vmatpush1.bf16.msra.mxu0 0
        %1814 = vmatprep.subr.bf16.mxu0 0
        %1815 = vmatpush1.bf16.msra.mxu0 0
        %1816 = vmatprep.subr.bf16.mxu0 0
        %1817 = vmatpush1.bf16.msra.mxu0 0
        %1818 = vmatprep.subr.bf16.mxu0 0
        %1819 = vmatpush1.bf16.msra.mxu0 0
        %1820 = vmatprep.subr.bf16.mxu0 0
        %1821 = vmatpush1.bf16.msra.mxu0 0
        %1822 = vmatprep.subr.bf16.mxu0 0
        %1823 = vmatpush1.bf16.msra.mxu0 0
        %1824 = vmatprep.subr.bf16.mxu0 0
        %1825 = vmatpush1.bf16.msra.mxu0 0
        %1826 = vmatprep.subr.bf16.mxu0 0
        %1827 = vmatpush1.bf16.msra.mxu0 0
        %1828 = vmatprep.subr.bf16.mxu0 0
        %1829 = vmatpush1.bf16.msra.mxu0 0
        %1830 = vmatprep.subr.bf16.mxu0 0
        %1831 = vmatpush1.bf16.msra.mxu0 0
        %1832 = vmatprep.subr.bf16.mxu0 0
        %1833 = vmatpush1.bf16.msra.mxu0 0
        %1834 = vmatprep.subr.bf16.mxu0 0
        %1835 = vmatpush1.bf16.msra.mxu0 0
        %1836 = vmatprep.subr.bf16.mxu0 0
        %1837 = vmatpush1.bf16.msra.mxu0 0
        %1838 = vmatprep.subr.bf16.mxu0 0
        %1839 = vmatpush1.bf16.msra.mxu0 0
        %1840 = vmatprep.mubr.bf16.mxu0 0
        %1841 = vmatmul.mubr.bf16.gmra.mrb[0].mxu0 %v1803
        %v1842 = vpop.f32.mrb[0].mxu0
        %v1843 = vadd.f32 0.0, %v1842
        %v1844 = vpop.f32.mrb[0].mxu0
        %v1845 = vpop.f32.mrb[0].mxu0
        %v1846 = vpop.f32.mrb[0].mxu0
        %1847 = vdwg.mxu0
        %1848 = vrot.lane.b32.xlu0 %v1491, 64
        %v1849 = vpop.permute.xlu0 %1848
        %v1851 = vsel %vm1698, %v1749, 0
        %v1854 = vsel %vm1756, %v1849, 0
        %1856 = vmatprep.subr.bf16.mxu0 0
        %1857 = vmatpush1.bf16.msra.mxu0 %v1854
        %1858 = vmatprep.subr.bf16.mxu0 0
        %1859 = vmatpush1.bf16.msra.mxu0 0
        %1860 = vmatprep.subr.bf16.mxu0 0
        %1861 = vmatpush1.bf16.msra.mxu0 0
        %1862 = vmatprep.subr.bf16.mxu0 0
        %1863 = vmatpush1.bf16.msra.mxu0 0
        %1864 = vmatprep.subr.bf16.mxu0 0
        %1865 = vmatpush1.bf16.msra.mxu0 0
        %1866 = vmatprep.subr.bf16.mxu0 0
        %1867 = vmatpush1.bf16.msra.mxu0 0
        %1868 = vmatprep.subr.bf16.mxu0 0
        %1869 = vmatpush1.bf16.msra.mxu0 0
        %1870 = vmatprep.subr.bf16.mxu0 0
        %1871 = vmatpush1.bf16.msra.mxu0 0
        %1872 = vmatprep.subr.bf16.mxu0 0
        %1873 = vmatpush1.bf16.msra.mxu0 0
        %1874 = vmatprep.subr.bf16.mxu0 0
        %1875 = vmatpush1.bf16.msra.mxu0 0
        %1876 = vmatprep.subr.bf16.mxu0 0
        %1877 = vmatpush1.bf16.msra.mxu0 0
        %1878 = vmatprep.subr.bf16.mxu0 0
        %1879 = vmatpush1.bf16.msra.mxu0 0
        %1880 = vmatprep.subr.bf16.mxu0 0
        %1881 = vmatpush1.bf16.msra.mxu0 0
        %1882 = vmatprep.subr.bf16.mxu0 0
        %1883 = vmatpush1.bf16.msra.mxu0 0
        %1884 = vmatprep.subr.bf16.mxu0 0
        %1885 = vmatpush1.bf16.msra.mxu0 0
        %1886 = vmatprep.subr.bf16.mxu0 0
        %1887 = vmatpush1.bf16.msra.mxu0 0
        %1888 = vmatprep.mubr.bf16.mxu0 0
        %1889 = vmatmul.mubr.bf16.gmra.mrb[0].mxu0 %v1851
        %v1890 = vpop.f32.mrb[0].mxu0
        %v1891 = vadd.f32 0.0, %v1890
        %v1892 = vpop.f32.mrb[0].mxu0
        %v1893 = vpop.f32.mrb[0].mxu0
        %v1894 = vpop.f32.mrb[0].mxu0
        %1895 = vdwg.mxu0
        %1896 = vrot.lane.b32.xlu0 %v1492, 64
        %v1897 = vpop.permute.xlu0 %1896
        %v1899 = vsel %vm1698, %v1750, 0
        %v1902 = vsel %vm1756, %v1897, 0
        %1904 = vmatprep.subr.bf16.mxu0 0
        %1905 = vmatpush1.bf16.msra.mxu0 %v1902
        %1906 = vmatprep.subr.bf16.mxu0 0
        %1907 = vmatpush1.bf16.msra.mxu0 0
        %1908 = vmatprep.subr.bf16.mxu0 0
        %1909 = vmatpush1.bf16.msra.mxu0 0
        %1910 = vmatprep.subr.bf16.mxu0 0
        %1911 = vmatpush1.bf16.msra.mxu0 0
        %1912 = vmatprep.subr.bf16.mxu0 0
        %1913 = vmatpush1.bf16.msra.mxu0 0
        %1914 = vmatprep.subr.bf16.mxu0 0
        %1915 = vmatpush1.bf16.msra.mxu0 0
        %1916 = vmatprep.subr.bf16.mxu0 0
        %1917 = vmatpush1.bf16.msra.mxu0 0
        %1918 = vmatprep.subr.bf16.mxu0 0
        %1919 = vmatpush1.bf16.msra.mxu0 0
        %1920 = vmatprep.subr.bf16.mxu0 0
        %1921 = vmatpush1.bf16.msra.mxu0 0
        %1922 = vmatprep.subr.bf16.mxu0 0
        %1923 = vmatpush1.bf16.msra.mxu0 0
        %1924 = vmatprep.subr.bf16.mxu0 0
        %1925 = vmatpush1.bf16.msra.mxu0 0
        %1926 = vmatprep.subr.bf16.mxu0 0
        %1927 = vmatpush1.bf16.msra.mxu0 0
        %1928 = vmatprep.subr.bf16.mxu0 0
        %1929 = vmatpush1.bf16.msra.mxu0 0
        %1930 = vmatprep.subr.bf16.mxu0 0
        %1931 = vmatpush1.bf16.msra.mxu0 0
        %1932 = vmatprep.subr.bf16.mxu0 0
        %1933 = vmatpush1.bf16.msra.mxu0 0
        %1934 = vmatprep.subr.bf16.mxu0 0
        %1935 = vmatpush1.bf16.msra.mxu0 0
        %1936 = vmatprep.mubr.bf16.mxu0 0
        %1937 = vmatmul.mubr.bf16.gmra.mrb[0].mxu0 %v1899
        %v1938 = vpop.f32.mrb[0].mxu0
        %v1939 = vadd.f32 0.0, %v1938
        %v1940 = vpop.f32.mrb[0].mxu0
        %v1941 = vpop.f32.mrb[0].mxu0
        %v1942 = vpop.f32.mrb[0].mxu0
        %1943 = vdwg.mxu0
        %1946 = vrot.lane.b32.xlu0 %v1891, 16
        %v1947 = vpop.permute.xlu0 %1946
        %1948 = vrot.lane.b32.xlu0 %v1939, 16
        %v1949 = vpop.permute.xlu0 %1948
        %v1952 = vsel %vm1496, %v1795, %v1947
        %v1953 = vsel %vm1496, %v1843, %v1949
        %v1954 = vpack.c.bf16 %v1953, %v1952
        %v1956 = vlaneseq
        %v1957 = vshrl.u32 %v1956, 7
        %v1958 = vsub.s32 0, %v1957
        %v1959 = vrot.slane %v1480, %v1958
        %v1965 = vunpack.c.l.b16 %v1476
        %v1966 = vunpack.c.l.b16 %v1477
        %v1967 = vunpack.c.l.b16 %v1478
        %v1968 = vunpack.c.l.b16 %v1479
        %v1969 = vpack.c.b16 %v1966, %v1965
        %v1970 = vpack.c.b16 %v1968, %v1967
        %v1974 = vsel %vm1364, %v1954, 0
        %1976 = vmatprep.subr.bf16.mxu0 0
        %1977 = vmatpush1.bf16.msra.mxu0 %v1969
        %1978 = vmatprep.subr.bf16.mxu0 0
        %1979 = vmatpush1.bf16.msra.mxu0 %v1970
        %1980 = vmatprep.subr.bf16.mxu0 0
        %1981 = vmatpush1.bf16.msra.mxu0 0
        %1982 = vmatprep.subr.bf16.mxu0 0
        %1983 = vmatpush1.bf16.msra.mxu0 0
        %1984 = vmatprep.subr.bf16.mxu0 0
        %1985 = vmatpush1.bf16.msra.mxu0 0
        %1986 = vmatprep.subr.bf16.mxu0 0
        %1987 = vmatpush1.bf16.msra.mxu0 0
        %1988 = vmatprep.subr.bf16.mxu0 0
        %1989 = vmatpush1.bf16.msra.mxu0 0
        %1990 = vmatprep.subr.bf16.mxu0 0
        %1991 = vmatpush1.bf16.msra.mxu0 0
        %1992 = vmatprep.subr.bf16.mxu0 0
        %1993 = vmatpush1.bf16.msra.mxu0 0
        %1994 = vmatprep.subr.bf16.mxu0 0
        %1995 = vmatpush1.bf16.msra.mxu0 0
        %1996 = vmatprep.subr.bf16.mxu0 0
        %1997 = vmatpush1.bf16.msra.mxu0 0
        %1998 = vmatprep.subr.bf16.mxu0 0
        %1999 = vmatpush1.bf16.msra.mxu0 0
        %2000 = vmatprep.subr.bf16.mxu0 0
        %2001 = vmatpush1.bf16.msra.mxu0 0
        %2002 = vmatprep.subr.bf16.mxu0 0
        %2003 = vmatpush1.bf16.msra.mxu0 0
        %2004 = vmatprep.subr.bf16.mxu0 0
        %2005 = vmatpush1.bf16.msra.mxu0 0
        %2006 = vmatprep.subr.bf16.mxu0 0
        %2007 = vmatpush1.bf16.msra.mxu0 0
        %2008 = vmatprep.mubr.bf16.mxu0 0
        %2009 = vmatmul.mubr.bf16.gmra.mrb[0].mxu0 %v1974
        %v2010 = vpop.f32.mrb[0].mxu0
        %v2011 = vadd.f32 %v1959, %v2010
        %v2012 = vpop.f32.mrb[0].mxu0
        %v2013 = vpop.f32.mrb[0].mxu0
        %v2014 = vadd.f32 %v1959, %v2013
        %v2015 = vpop.f32.mrb[0].mxu0
        %2016 = vdwg.mxu0
        %v2017 = vadd.f32 %v2011, %v1354
        %v2018 = vadd.f32 %v2014, %v1355
        %v2019 = vld [vmem:[%s1262] sm:$0x1]
        %v2020 = vld [vmem:[%s1265] sm:$0x1]
        %v2021 = vsel %vm1364, %v2017, 0.0
        %2022 = vadd.xlane.f32.xlu0 %v2021
        %v2023 = vpop.xlane.xlu0 %2022
        %v2024 = vsel %vm1364, %v2018, 0.0
        %2025 = vadd.xlane.f32.xlu0 %v2024
        %v2026 = vpop.xlane.xlu0 %2025
        %v2027 = vmul.f32 %v2023, %v1371
        %v2028 = vmul.f32 %v2026, %v1371
        %v2029 = vsub.f32 %v2017, %v2027
        %v2030 = vsub.f32 %v2018, %v2028
        %v2031 = vmul.f32 %v2029, %v2029
        %v2032 = vmul.f32 %v2030, %v2030
        %v2033 = vsel %vm1364, %v2031, 0.0
        %2034 = vadd.xlane.f32.xlu0 %v2033
        %v2035 = vpop.xlane.xlu0 %2034
        %v2036 = vsel %vm1364, %v2032, 0.0
        %2037 = vadd.xlane.f32.xlu0 %v2036
        %v2038 = vpop.xlane.xlu0 %2037
        %v2039 = vmul.f32 %v2035, %v1371
        %v2040 = vmul.f32 %v2038, %v1371
        %v2041 = vadd.f32 %v2039, 1e-05
        %v2042 = vadd.f32 %v2040, 1e-05
        %v2043 = vrsqrt.pop %v2041
        %v2044 = vrsqrt.pop %v2042
        %v2045 = vmul.f32 %v2029, %v2043
        %v2046 = vmul.f32 %v2030, %v2044
        %v2048 = vlaneseq
        %v2049 = vshrl.u32 %v2048, 7
        %v2050 = vsub.s32 0, %v2049
        %v2051 = vrot.slane %v2019, %v2050
        %v2053 = vmul.f32 %v2045, %v2051
        %v2054 = vmul.f32 %v2046, %v2051
        %v2056 = vlaneseq
        %v2057 = vshrl.u32 %v2056, 7
        %v2058 = vsub.s32 0, %v2057
        %v2059 = vrot.slane %v2020, %v2058
        %v2061 = vadd.f32 %v2053, %v2059
        %v2062 = vadd.f32 %v2054, %v2059
        %v2063 = vpack.c.bf16 %v2062, %v2061
        %v2064 = vld [vmem:[%s1270] sm:$0xf]
        %v2065 = vld [vmem:[%s1270 + $0x4] sm:$0xf]
        %v2066 = vld [vmem:[%s1270 + $0x8] sm:$0xf]
        %v2067 = vld [vmem:[%s1270 + $0xc] sm:$0xf]
        %v2068 = vld [vmem:[%s1273] sm:$0x1]
        %v2070 = vlaneseq
        %v2071 = vshrl.u32 %v2070, 7
        %v2072 = vsub.s32 0, %v2071
        %v2073 = vrot.slane %v2068, %v2072
        %v2079 = vunpack.c.l.b16 %v2064
        %v2080 = vunpack.c.l.b16 %v2065
        %v2081 = vunpack.c.l.b16 %v2066
        %v2082 = vunpack.c.l.b16 %v2067
        %v2083 = vpack.c.b16 %v2080, %v2079
        %v2084 = vpack.c.b16 %v2082, %v2081
        %v2088 = vsel %vm1364, %v2063, 0
        %2090 = vmatprep.subr.bf16.mxu0 0
        %2091 = vmatpush1.bf16.msra.mxu0 %v2083
        %2092 = vmatprep.subr.bf16.mxu0 0
        %2093 = vmatpush1.bf16.msra.mxu0 %v2084
        %2094 = vmatprep.subr.bf16.mxu0 0
        %2095 = vmatpush1.bf16.msra.mxu0 0
        %2096 = vmatprep.subr.bf16.mxu0 0
        %2097 = vmatpush1.bf16.msra.mxu0 0
        %2098 = vmatprep.subr.bf16.mxu0 0
        %2099 = vmatpush1.bf16.msra.mxu0 0
        %2100 = vmatprep.subr.bf16.mxu0 0
        %2101 = vmatpush1.bf16.msra.mxu0 0
        %2102 = vmatprep.subr.bf16.mxu0 0
        %2103 = vmatpush1.bf16.msra.mxu0 0
        %2104 = vmatprep.subr.bf16.mxu0 0
        %2105 = vmatpush1.bf16.msra.mxu0 0
        %2106 = vmatprep.subr.bf16.mxu0 0
        %2107 = vmatpush1.bf16.msra.mxu0 0
        %2108 = vmatprep.subr.bf16.mxu0 0
        %2109 = vmatpush1.bf16.msra.mxu0 0
        %2110 = vmatprep.subr.bf16.mxu0 0
        %2111 = vmatpush1.bf16.msra.mxu0 0
        %2112 = vmatprep.subr.bf16.mxu0 0
        %2113 = vmatpush1.bf16.msra.mxu0 0
        %2114 = vmatprep.subr.bf16.mxu0 0
        %2115 = vmatpush1.bf16.msra.mxu0 0
        %2116 = vmatprep.subr.bf16.mxu0 0
        %2117 = vmatpush1.bf16.msra.mxu0 0
        %2118 = vmatprep.subr.bf16.mxu0 0
        %2119 = vmatpush1.bf16.msra.mxu0 0
        %2120 = vmatprep.subr.bf16.mxu0 0
        %2121 = vmatpush1.bf16.msra.mxu0 0
        %2122 = vmatprep.mubr.bf16.mxu0 0
        %2123 = vmatmul.mubr.bf16.gmra.mrb[0].mxu0 %v2088
        %v2124 = vpop.f32.mrb[0].mxu0
        %v2125 = vadd.f32 %v2073, %v2124
        %v2126 = vpop.f32.mrb[0].mxu0
        %v2127 = vpop.f32.mrb[0].mxu0
        %v2128 = vadd.f32 %v2073, %v2127
        %v2129 = vpop.f32.mrb[0].mxu0
        %2130 = vdwg.mxu0
        %v2131 = vpack.c.bf16 %v1357, %v1356
        %v2132 = vld [vmem:[%s1278] sm:$0xf]
        %v2133 = vld [vmem:[%s1278 + $0x4] sm:$0xf]
        %v2134 = vld [vmem:[%s1278 + $0x8] sm:$0xf]
        %v2135 = vld [vmem:[%s1278 + $0xc] sm:$0xf]
        %v2136 = vld [vmem:[%s1281] sm:$0x1]
        %v2138 = vlaneseq
        %v2139 = vshrl.u32 %v2138, 7
        %v2140 = vsub.s32 0, %v2139
        %v2141 = vrot.slane %v2136, %v2140
        %v2147 = vunpack.c.l.b16 %v2132
        %v2148 = vunpack.c.l.b16 %v2133
        %v2149 = vunpack.c.l.b16 %v2134
        %v2150 = vunpack.c.l.b16 %v2135
        %v2151 = vpack.c.b16 %v2148, %v2147
        %v2152 = vpack.c.b16 %v2150, %v2149
        %v2156 = vsel %vm1364, %v2131, 0
        %2158 = vmatprep.subr.bf16.mxu0 0
        %2159 = vmatpush1.bf16.msra.mxu0 %v2151
        %2160 = vmatprep.subr.bf16.mxu0 0
        %2161 = vmatpush1.bf16.msra.mxu0 %v2152
        %2162 = vmatprep.subr.bf16.mxu0 0
        %2163 = vmatpush1.bf16.msra.mxu0 0
        %2164 = vmatprep.subr.bf16.mxu0 0
        %2165 = vmatpush1.bf16.msra.mxu0 0
        %2166 = vmatprep.subr.bf16.mxu0 0
        %2167 = vmatpush1.bf16.msra.mxu0 0
        %2168 = vmatprep.subr.bf16.mxu0 0
        %2169 = vmatpush1.bf16.msra.mxu0 0
        %2170 = vmatprep.subr.bf16.mxu0 0
        %2171 = vmatpush1.bf16.msra.mxu0 0
        %2172 = vmatprep.subr.bf16.mxu0 0
        %2173 = vmatpush1.bf16.msra.mxu0 0
        %2174 = vmatprep.subr.bf16.mxu0 0
        %2175 = vmatpush1.bf16.msra.mxu0 0
        %2176 = vmatprep.subr.bf16.mxu0 0
        %2177 = vmatpush1.bf16.msra.mxu0 0
        %2178 = vmatprep.subr.bf16.mxu0 0
        %2179 = vmatpush1.bf16.msra.mxu0 0
        %2180 = vmatprep.subr.bf16.mxu0 0
        %2181 = vmatpush1.bf16.msra.mxu0 0
        %2182 = vmatprep.subr.bf16.mxu0 0
        %2183 = vmatpush1.bf16.msra.mxu0 0
        %2184 = vmatprep.subr.bf16.mxu0 0
        %2185 = vmatpush1.bf16.msra.mxu0 0
        %2186 = vmatprep.subr.bf16.mxu0 0
        %2187 = vmatpush1.bf16.msra.mxu0 0
        %2188 = vmatprep.subr.bf16.mxu0 0
        %2189 = vmatpush1.bf16.msra.mxu0 0
        %2190 = vmatprep.mubr.bf16.mxu0 0
        %2191 = vmatmul.mubr.bf16.gmra.mrb[0].mxu0 %v2156
        %v2192 = vpop.f32.mrb[0].mxu0
        %v2193 = vadd.f32 %v2141, %v2192
        %v2194 = vpop.f32.mrb[0].mxu0
        %v2195 = vpop.f32.mrb[0].mxu0
        %v2196 = vadd.f32 %v2141, %v2195
        %v2197 = vpop.f32.mrb[0].mxu0
        %2198 = vdwg.mxu0
        %v2199 = vld [vmem:[%s1286] sm:$0xf]
        %v2200 = vld [vmem:[%s1286 + $0x4] sm:$0xf]
        %v2201 = vld [vmem:[%s1286 + $0x8] sm:$0xf]
        %v2202 = vld [vmem:[%s1286 + $0xc] sm:$0xf]
        %v2203 = vld [vmem:[%s1289] sm:$0x1]
        %2206 = vrot.lane.b32.xlu0 %v2125, 112
        %v2207 = vpop.permute.xlu0 %2206
        %2208 = vrot.lane.b32.xlu0 %v2128, 112
        %v2209 = vpop.permute.xlu0 %2208
        %2214 = vrot.lane.b32.xlu0 %v2193, 112
        %v2215 = vpop.permute.xlu0 %2214
        %2216 = vrot.lane.b32.xlu0 %v2196, 112
        %v2217 = vpop.permute.xlu0 %2216
        %v2220 = vpack.c.bf16 %v2125, %v2125
        %v2221 = vpack.c.bf16 %v2128, %v2128
        %v2222 = vpack.c.bf16 %v2207, %v2207
        %v2223 = vpack.c.bf16 %v2209, %v2209
        %v2224 = vpack.c.bf16 %v2193, %v2193
        %v2225 = vpack.c.bf16 %v2196, %v2196
        %v2226 = vpack.c.bf16 %v2215, %v2215
        %v2227 = vpack.c.bf16 %v2217, %v2217
        %v2229 = vsel %vm1496, %v2220, 0
        %v2232 = vsel %vm1496, %v2224, 0
        %2234 = vmatprep.subr.bf16.mxu0 0
        %2235 = vmatpush1.bf16.xpose.msra.mxu0 %v2232
        %2236 = vmatprep.subr.bf16.mxu0 0
        %2237 = vmatpush1.bf16.xpose.msra.mxu0 0
        %2238 = vmatprep.subr.bf16.mxu0 0
        %2239 = vmatpush1.bf16.xpose.msra.mxu0 0
        %2240 = vmatprep.subr.bf16.mxu0 0
        %2241 = vmatpush1.bf16.xpose.msra.mxu0 0
        %2242 = vmatprep.subr.bf16.mxu0 0
        %2243 = vmatpush1.bf16.xpose.msra.mxu0 0
        %2244 = vmatprep.subr.bf16.mxu0 0
        %2245 = vmatpush1.bf16.xpose.msra.mxu0 0
        %2246 = vmatprep.subr.bf16.mxu0 0
        %2247 = vmatpush1.bf16.xpose.msra.mxu0 0
        %2248 = vmatprep.subr.bf16.mxu0 0
        %2249 = vmatpush1.bf16.xpose.msra.mxu0 0
        %2250 = vmatprep.subr.bf16.mxu0 0
        %2251 = vmatpush1.bf16.xpose.msra.mxu0 0
        %2252 = vmatprep.subr.bf16.mxu0 0
        %2253 = vmatpush1.bf16.xpose.msra.mxu0 0
        %2254 = vmatprep.subr.bf16.mxu0 0
        %2255 = vmatpush1.bf16.xpose.msra.mxu0 0
        %2256 = vmatprep.subr.bf16.mxu0 0
        %2257 = vmatpush1.bf16.xpose.msra.mxu0 0
        %2258 = vmatprep.subr.bf16.mxu0 0
        %2259 = vmatpush1.bf16.xpose.msra.mxu0 0
        %2260 = vmatprep.subr.bf16.mxu0 0
        %2261 = vmatpush1.bf16.xpose.msra.mxu0 0
        %2262 = vmatprep.subr.bf16.mxu0 0
        %2263 = vmatpush1.bf16.xpose.msra.mxu0 0
        %2264 = vmatprep.subr.bf16.mxu0 0
        %2265 = vmatpush1.bf16.xpose.msra.mxu0 0
        %2266 = vmatprep.mubr.bf16.mxu0 0
        %2267 = vmatmul.mubr.bf16.gmra.mrb[0].mxu0 %v2229
        %v2268 = vpop.f32.mrb[0].mxu0
        %v2269 = vadd.f32 0.0, %v2268
        %v2270 = vpop.f32.mrb[0].mxu0
        %v2271 = vpop.f32.mrb[0].mxu0
        %v2272 = vpop.f32.mrb[0].mxu0
        %2273 = vdwg.mxu0
        %v2275 = vsel %vm1496, %v2221, 0
        %v2278 = vsel %vm1496, %v2225, 0
        %2280 = vmatprep.subr.bf16.mxu0 0
        %2281 = vmatpush1.bf16.xpose.msra.mxu0 %v2278
        %2282 = vmatprep.subr.bf16.mxu0 0
        %2283 = vmatpush1.bf16.xpose.msra.mxu0 0
        %2284 = vmatprep.subr.bf16.mxu0 0
        %2285 = vmatpush1.bf16.xpose.msra.mxu0 0
        %2286 = vmatprep.subr.bf16.mxu0 0
        %2287 = vmatpush1.bf16.xpose.msra.mxu0 0
        %2288 = vmatprep.subr.bf16.mxu0 0
        %2289 = vmatpush1.bf16.xpose.msra.mxu0 0
        %2290 = vmatprep.subr.bf16.mxu0 0
        %2291 = vmatpush1.bf16.xpose.msra.mxu0 0
        %2292 = vmatprep.subr.bf16.mxu0 0
        %2293 = vmatpush1.bf16.xpose.msra.mxu0 0
        %2294 = vmatprep.subr.bf16.mxu0 0
        %2295 = vmatpush1.bf16.xpose.msra.mxu0 0
        %2296 = vmatprep.subr.bf16.mxu0 0
        %2297 = vmatpush1.bf16.xpose.msra.mxu0 0
        %2298 = vmatprep.subr.bf16.mxu0 0
        %2299 = vmatpush1.bf16.xpose.msra.mxu0 0
        %2300 = vmatprep.subr.bf16.mxu0 0
        %2301 = vmatpush1.bf16.xpose.msra.mxu0 0
        %2302 = vmatprep.subr.bf16.mxu0 0
        %2303 = vmatpush1.bf16.xpose.msra.mxu0 0
        %2304 = vmatprep.subr.bf16.mxu0 0
        %2305 = vmatpush1.bf16.xpose.msra.mxu0 0
        %2306 = vmatprep.subr.bf16.mxu0 0
        %2307 = vmatpush1.bf16.xpose.msra.mxu0 0
        %2308 = vmatprep.subr.bf16.mxu0 0
        %2309 = vmatpush1.bf16.xpose.msra.mxu0 0
        %2310 = vmatprep.subr.bf16.mxu0 0
        %2311 = vmatpush1.bf16.xpose.msra.mxu0 0
        %2312 = vmatprep.mubr.bf16.mxu0 0
        %2313 = vmatmul.mubr.bf16.gmra.mrb[0].mxu0 %v2275
        %v2314 = vpop.f32.mrb[0].mxu0
        %v2315 = vadd.f32 0.0, %v2314
        %v2316 = vpop.f32.mrb[0].mxu0
        %v2317 = vpop.f32.mrb[0].mxu0
        %v2318 = vpop.f32.mrb[0].mxu0
        %2319 = vdwg.mxu0
        %v2321 = vsel %vm1496, %v2222, 0
        %v2324 = vsel %vm1496, %v2226, 0
        %2326 = vmatprep.subr.bf16.mxu0 0
        %2327 = vmatpush1.bf16.xpose.msra.mxu0 %v2324
        %2328 = vmatprep.subr.bf16.mxu0 0
        %2329 = vmatpush1.bf16.xpose.msra.mxu0 0
        %2330 = vmatprep.subr.bf16.mxu0 0
        %2331 = vmatpush1.bf16.xpose.msra.mxu0 0
        %2332 = vmatprep.subr.bf16.mxu0 0
        %2333 = vmatpush1.bf16.xpose.msra.mxu0 0
        %2334 = vmatprep.subr.bf16.mxu0 0
        %2335 = vmatpush1.bf16.xpose.msra.mxu0 0
        %2336 = vmatprep.subr.bf16.mxu0 0
        %2337 = vmatpush1.bf16.xpose.msra.mxu0 0
        %2338 = vmatprep.subr.bf16.mxu0 0
        %2339 = vmatpush1.bf16.xpose.msra.mxu0 0
        %2340 = vmatprep.subr.bf16.mxu0 0
        %2341 = vmatpush1.bf16.xpose.msra.mxu0 0
        %2342 = vmatprep.subr.bf16.mxu0 0
        %2343 = vmatpush1.bf16.xpose.msra.mxu0 0
        %2344 = vmatprep.subr.bf16.mxu0 0
        %2345 = vmatpush1.bf16.xpose.msra.mxu0 0
        %2346 = vmatprep.subr.bf16.mxu0 0
        %2347 = vmatpush1.bf16.xpose.msra.mxu0 0
        %2348 = vmatprep.subr.bf16.mxu0 0
        %2349 = vmatpush1.bf16.xpose.msra.mxu0 0
        %2350 = vmatprep.subr.bf16.mxu0 0
        %2351 = vmatpush1.bf16.xpose.msra.mxu0 0
        %2352 = vmatprep.subr.bf16.mxu0 0
        %2353 = vmatpush1.bf16.xpose.msra.mxu0 0
        %2354 = vmatprep.subr.bf16.mxu0 0
        %2355 = vmatpush1.bf16.xpose.msra.mxu0 0
        %2356 = vmatprep.subr.bf16.mxu0 0
        %2357 = vmatpush1.bf16.xpose.msra.mxu0 0
        %2358 = vmatprep.mubr.bf16.mxu0 0
        %2359 = vmatmul.mubr.bf16.gmra.mrb[0].mxu0 %v2321
        %v2360 = vpop.f32.mrb[0].mxu0
        %v2361 = vadd.f32 0.0, %v2360
        %v2362 = vpop.f32.mrb[0].mxu0
        %v2363 = vpop.f32.mrb[0].mxu0
        %v2364 = vpop.f32.mrb[0].mxu0
        %2365 = vdwg.mxu0
        %v2367 = vsel %vm1496, %v2223, 0
        %v2370 = vsel %vm1496, %v2227, 0
        %2372 = vmatprep.subr.bf16.mxu0 0
        %2373 = vmatpush1.bf16.xpose.msra.mxu0 %v2370
        %2374 = vmatprep.subr.bf16.mxu0 0
        %2375 = vmatpush1.bf16.xpose.msra.mxu0 0
        %2376 = vmatprep.subr.bf16.mxu0 0
        %2377 = vmatpush1.bf16.xpose.msra.mxu0 0
        %2378 = vmatprep.subr.bf16.mxu0 0
        %2379 = vmatpush1.bf16.xpose.msra.mxu0 0
        %2380 = vmatprep.subr.bf16.mxu0 0
        %2381 = vmatpush1.bf16.xpose.msra.mxu0 0
        %2382 = vmatprep.subr.bf16.mxu0 0
        %2383 = vmatpush1.bf16.xpose.msra.mxu0 0
        %2384 = vmatprep.subr.bf16.mxu0 0
        %2385 = vmatpush1.bf16.xpose.msra.mxu0 0
        %2386 = vmatprep.subr.bf16.mxu0 0
        %2387 = vmatpush1.bf16.xpose.msra.mxu0 0
        %2388 = vmatprep.subr.bf16.mxu0 0
        %2389 = vmatpush1.bf16.xpose.msra.mxu0 0
        %2390 = vmatprep.subr.bf16.mxu0 0
        %2391 = vmatpush1.bf16.xpose.msra.mxu0 0
        %2392 = vmatprep.subr.bf16.mxu0 0
        %2393 = vmatpush1.bf16.xpose.msra.mxu0 0
        %2394 = vmatprep.subr.bf16.mxu0 0
        %2395 = vmatpush1.bf16.xpose.msra.mxu0 0
        %2396 = vmatprep.subr.bf16.mxu0 0
        %2397 = vmatpush1.bf16.xpose.msra.mxu0 0
        %2398 = vmatprep.subr.bf16.mxu0 0
        %2399 = vmatpush1.bf16.xpose.msra.mxu0 0
        %2400 = vmatprep.subr.bf16.mxu0 0
        %2401 = vmatpush1.bf16.xpose.msra.mxu0 0
        %2402 = vmatprep.subr.bf16.mxu0 0
        %2403 = vmatpush1.bf16.xpose.msra.mxu0 0
        %2404 = vmatprep.mubr.bf16.mxu0 0
        %2405 = vmatmul.mubr.bf16.gmra.mrb[0].mxu0 %v2367
        %v2406 = vpop.f32.mrb[0].mxu0
        %v2407 = vadd.f32 0.0, %v2406
        %v2408 = vpop.f32.mrb[0].mxu0
        %v2409 = vpop.f32.mrb[0].mxu0
        %v2410 = vpop.f32.mrb[0].mxu0
        %2411 = vdwg.mxu0
        %v2412 = vmul.f32 %v2269, 0.25
        %v2413 = vmul.f32 %v2315, 0.25
        %v2414 = vmul.f32 %v2361, 0.25
        %v2415 = vmul.f32 %v2407, 0.25
        %v2416 = vadd.f32 %v2412, %v1360
        %v2417 = vadd.f32 %v2413, %v1361
        %v2418 = vadd.f32 %v2414, %v1360
        %v2419 = vadd.f32 %v2415, %v1361
        %v2420 = vsel %vm1698, %v2416, -inf
        %2421 = vmax.xlane.f32.xlu0 %v2420
        %v2422 = vpop.xlane.xlu0 %2421
        %v2423 = vsel %vm1698, %v2417, -inf
        %2424 = vmax.xlane.f32.xlu0 %v2423
        %v2425 = vpop.xlane.xlu0 %2424
        %v2426 = vsel %vm1698, %v2418, -inf
        %2427 = vmax.xlane.f32.xlu0 %v2426
        %v2428 = vpop.xlane.xlu0 %2427
        %v2429 = vsel %vm1698, %v2419, -inf
        %2430 = vmax.xlane.f32.xlu0 %v2429
        %v2431 = vpop.xlane.xlu0 %2430
        %v2432 = vsub.f32 %v2416, %v2422
        %v2433 = vsub.f32 %v2417, %v2425
        %v2434 = vsub.f32 %v2418, %v2428
        %v2435 = vsub.f32 %v2419, %v2431
        %v2436 = vmul.f32 %v2432, 1.442695
        %v2437 = vpow.pop %v2436
        %v2438 = vmul.f32 %v2433, 1.442695
        %v2439 = vpow.pop %v2438
        %v2440 = vmul.f32 %v2434, 1.442695
        %v2441 = vpow.pop %v2440
        %v2442 = vmul.f32 %v2435, 1.442695
        %v2443 = vpow.pop %v2442
        %v2444 = vsel %vm1698, %v2437, 0.0
        %2445 = vadd.xlane.f32.xlu0 %v2444
        %v2446 = vpop.xlane.xlu0 %2445
        %v2447 = vsel %vm1698, %v2439, 0.0
        %2448 = vadd.xlane.f32.xlu0 %v2447
        %v2449 = vpop.xlane.xlu0 %2448
        %v2450 = vsel %vm1698, %v2441, 0.0
        %2451 = vadd.xlane.f32.xlu0 %v2450
        %v2452 = vpop.xlane.xlu0 %2451
        %v2453 = vsel %vm1698, %v2443, 0.0
        %2454 = vadd.xlane.f32.xlu0 %v2453
        %v2455 = vpop.xlane.xlu0 %2454
        %v2456 = vrcp.pop %v2446
        %v2457 = vrcp.pop %v2449
        %v2458 = vrcp.pop %v2452
        %v2459 = vrcp.pop %v2455
        %v2460 = vmul.f32 %v2437, %v2456
        %v2461 = vmul.f32 %v2439, %v2457
        %v2462 = vmul.f32 %v2441, %v2458
        %v2463 = vmul.f32 %v2443, %v2459
        %2464 = vst.msk [vmem:[%s1327] sm:$0xff] %vm1698, %v2460
        %2465 = vst.msk [vmem:[%s1327 + $0x8] sm:$0xff] %vm1698, %v2461
        %2466 = vst.msk [vmem:[%s1327 + $0x10] sm:$0xff] %vm1698, %v2462
        %2467 = vst.msk [vmem:[%s1327 + $0x18] sm:$0xff] %vm1698, %v2463
        %v2468 = vpack.c.bf16 %v2460, %v2460
        %v2469 = vpack.c.bf16 %v2461, %v2461
        %v2470 = vpack.c.bf16 %v2462, %v2462
        %v2471 = vpack.c.bf16 %v2463, %v2463
        %2473 = vrot.lane.b32.xlu0 %v2224, 96
        %v2474 = vpop.permute.xlu0 %2473
        %v2476 = vsel %vm1698, %v2468, 0
        %v2479 = vsel %vm1756, %v2474, 0
        %2481 = vmatprep.subr.bf16.mxu0 0
        %2482 = vmatpush1.bf16.msra.mxu0 %v2479
        %2483 = vmatprep.subr.bf16.mxu0 0
        %2484 = vmatpush1.bf16.msra.mxu0 0
        %2485 = vmatprep.subr.bf16.mxu0 0
        %2486 = vmatpush1.bf16.msra.mxu0 0
        %2487 = vmatprep.subr.bf16.mxu0 0
        %2488 = vmatpush1.bf16.msra.mxu0 0
        %2489 = vmatprep.subr.bf16.mxu0 0
        %2490 = vmatpush1.bf16.msra.mxu0 0
        %2491 = vmatprep.subr.bf16.mxu0 0
        %2492 = vmatpush1.bf16.msra.mxu0 0
        %2493 = vmatprep.subr.bf16.mxu0 0
        %2494 = vmatpush1.bf16.msra.mxu0 0
        %2495 = vmatprep.subr.bf16.mxu0 0
        %2496 = vmatpush1.bf16.msra.mxu0 0
        %2497 = vmatprep.subr.bf16.mxu0 0
        %2498 = vmatpush1.bf16.msra.mxu0 0
        %2499 = vmatprep.subr.bf16.mxu0 0
        %2500 = vmatpush1.bf16.msra.mxu0 0
        %2501 = vmatprep.subr.bf16.mxu0 0
        %2502 = vmatpush1.bf16.msra.mxu0 0
        %2503 = vmatprep.subr.bf16.mxu0 0
        %2504 = vmatpush1.bf16.msra.mxu0 0
        %2505 = vmatprep.subr.bf16.mxu0 0
        %2506 = vmatpush1.bf16.msra.mxu0 0
        %2507 = vmatprep.subr.bf16.mxu0 0
        %2508 = vmatpush1.bf16.msra.mxu0 0
        %2509 = vmatprep.subr.bf16.mxu0 0
        %2510 = vmatpush1.bf16.msra.mxu0 0
        %2511 = vmatprep.subr.bf16.mxu0 0
        %2512 = vmatpush1.bf16.msra.mxu0 0
        %2513 = vmatprep.mubr.bf16.mxu0 0
        %2514 = vmatmul.mubr.bf16.gmra.mrb[0].mxu0 %v2476
        %v2515 = vpop.f32.mrb[0].mxu0
        %v2516 = vadd.f32 0.0, %v2515
        %v2517 = vpop.f32.mrb[0].mxu0
        %v2518 = vpop.f32.mrb[0].mxu0
        %v2519 = vpop.f32.mrb[0].mxu0
        %2520 = vdwg.mxu0
        %2522 = vrot.lane.b32.xlu0 %v2225, 96
        %v2523 = vpop.permute.xlu0 %2522
        %v2525 = vsel %vm1698, %v2469, 0
        %v2528 = vsel %vm1756, %v2523, 0
        %2530 = vmatprep.subr.bf16.mxu0 0
        %2531 = vmatpush1.bf16.msra.mxu0 %v2528
        %2532 = vmatprep.subr.bf16.mxu0 0
        %2533 = vmatpush1.bf16.msra.mxu0 0
        %2534 = vmatprep.subr.bf16.mxu0 0
        %2535 = vmatpush1.bf16.msra.mxu0 0
        %2536 = vmatprep.subr.bf16.mxu0 0
        %2537 = vmatpush1.bf16.msra.mxu0 0
        %2538 = vmatprep.subr.bf16.mxu0 0
        %2539 = vmatpush1.bf16.msra.mxu0 0
        %2540 = vmatprep.subr.bf16.mxu0 0
        %2541 = vmatpush1.bf16.msra.mxu0 0
        %2542 = vmatprep.subr.bf16.mxu0 0
        %2543 = vmatpush1.bf16.msra.mxu0 0
        %2544 = vmatprep.subr.bf16.mxu0 0
        %2545 = vmatpush1.bf16.msra.mxu0 0
        %2546 = vmatprep.subr.bf16.mxu0 0
        %2547 = vmatpush1.bf16.msra.mxu0 0
        %2548 = vmatprep.subr.bf16.mxu0 0
        %2549 = vmatpush1.bf16.msra.mxu0 0
        %2550 = vmatprep.subr.bf16.mxu0 0
        %2551 = vmatpush1.bf16.msra.mxu0 0
        %2552 = vmatprep.subr.bf16.mxu0 0
        %2553 = vmatpush1.bf16.msra.mxu0 0
        %2554 = vmatprep.subr.bf16.mxu0 0
        %2555 = vmatpush1.bf16.msra.mxu0 0
        %2556 = vmatprep.subr.bf16.mxu0 0
        %2557 = vmatpush1.bf16.msra.mxu0 0
        %2558 = vmatprep.subr.bf16.mxu0 0
        %2559 = vmatpush1.bf16.msra.mxu0 0
        %2560 = vmatprep.subr.bf16.mxu0 0
        %2561 = vmatpush1.bf16.msra.mxu0 0
        %2562 = vmatprep.mubr.bf16.mxu0 0
        %2563 = vmatmul.mubr.bf16.gmra.mrb[0].mxu0 %v2525
        %v2564 = vpop.f32.mrb[0].mxu0
        %v2565 = vadd.f32 0.0, %v2564
        %v2566 = vpop.f32.mrb[0].mxu0
        %v2567 = vpop.f32.mrb[0].mxu0
        %v2568 = vpop.f32.mrb[0].mxu0
        %2569 = vdwg.mxu0
        %2571 = vrot.lane.b32.xlu0 %v2226, 96
        %v2572 = vpop.permute.xlu0 %2571
        %v2574 = vsel %vm1698, %v2470, 0
        %v2577 = vsel %vm1756, %v2572, 0
        %2579 = vmatprep.subr.bf16.mxu0 0
        %2580 = vmatpush1.bf16.msra.mxu0 %v2577
        %2581 = vmatprep.subr.bf16.mxu0 0
        %2582 = vmatpush1.bf16.msra.mxu0 0
        %2583 = vmatprep.subr.bf16.mxu0 0
        %2584 = vmatpush1.bf16.msra.mxu0 0
        %2585 = vmatprep.subr.bf16.mxu0 0
        %2586 = vmatpush1.bf16.msra.mxu0 0
        %2587 = vmatprep.subr.bf16.mxu0 0
        %2588 = vmatpush1.bf16.msra.mxu0 0
        %2589 = vmatprep.subr.bf16.mxu0 0
        %2590 = vmatpush1.bf16.msra.mxu0 0
        %2591 = vmatprep.subr.bf16.mxu0 0
        %2592 = vmatpush1.bf16.msra.mxu0 0
        %2593 = vmatprep.subr.bf16.mxu0 0
        %2594 = vmatpush1.bf16.msra.mxu0 0
        %2595 = vmatprep.subr.bf16.mxu0 0
        %2596 = vmatpush1.bf16.msra.mxu0 0
        %2597 = vmatprep.subr.bf16.mxu0 0
        %2598 = vmatpush1.bf16.msra.mxu0 0
        %2599 = vmatprep.subr.bf16.mxu0 0
        %2600 = vmatpush1.bf16.msra.mxu0 0
        %2601 = vmatprep.subr.bf16.mxu0 0
        %2602 = vmatpush1.bf16.msra.mxu0 0
        %2603 = vmatprep.subr.bf16.mxu0 0
        %2604 = vmatpush1.bf16.msra.mxu0 0
        %2605 = vmatprep.subr.bf16.mxu0 0
        %2606 = vmatpush1.bf16.msra.mxu0 0
        %2607 = vmatprep.subr.bf16.mxu0 0
        %2608 = vmatpush1.bf16.msra.mxu0 0
        %2609 = vmatprep.subr.bf16.mxu0 0
        %2610 = vmatpush1.bf16.msra.mxu0 0
        %2611 = vmatprep.mubr.bf16.mxu0 0
        %2612 = vmatmul.mubr.bf16.gmra.mrb[0].mxu0 %v2574
        %v2613 = vpop.f32.mrb[0].mxu0
        %v2614 = vadd.f32 0.0, %v2613
        %v2615 = vpop.f32.mrb[0].mxu0
        %v2616 = vpop.f32.mrb[0].mxu0
        %v2617 = vpop.f32.mrb[0].mxu0
        %2618 = vdwg.mxu0
        %2620 = vrot.lane.b32.xlu0 %v2227, 96
        %v2621 = vpop.permute.xlu0 %2620
        %v2623 = vsel %vm1698, %v2471, 0
        %v2626 = vsel %vm1756, %v2621, 0
        %2628 = vmatprep.subr.bf16.mxu0 0
        %2629 = vmatpush1.bf16.msra.mxu0 %v2626
        %2630 = vmatprep.subr.bf16.mxu0 0
        %2631 = vmatpush1.bf16.msra.mxu0 0
        %2632 = vmatprep.subr.bf16.mxu0 0
        %2633 = vmatpush1.bf16.msra.mxu0 0
        %2634 = vmatprep.subr.bf16.mxu0 0
        %2635 = vmatpush1.bf16.msra.mxu0 0
        %2636 = vmatprep.subr.bf16.mxu0 0
        %2637 = vmatpush1.bf16.msra.mxu0 0
        %2638 = vmatprep.subr.bf16.mxu0 0
        %2639 = vmatpush1.bf16.msra.mxu0 0
        %2640 = vmatprep.subr.bf16.mxu0 0
        %2641 = vmatpush1.bf16.msra.mxu0 0
        %2642 = vmatprep.subr.bf16.mxu0 0
        %2643 = vmatpush1.bf16.msra.mxu0 0
        %2644 = vmatprep.subr.bf16.mxu0 0
        %2645 = vmatpush1.bf16.msra.mxu0 0
        %2646 = vmatprep.subr.bf16.mxu0 0
        %2647 = vmatpush1.bf16.msra.mxu0 0
        %2648 = vmatprep.subr.bf16.mxu0 0
        %2649 = vmatpush1.bf16.msra.mxu0 0
        %2650 = vmatprep.subr.bf16.mxu0 0
        %2651 = vmatpush1.bf16.msra.mxu0 0
        %2652 = vmatprep.subr.bf16.mxu0 0
        %2653 = vmatpush1.bf16.msra.mxu0 0
        %2654 = vmatprep.subr.bf16.mxu0 0
        %2655 = vmatpush1.bf16.msra.mxu0 0
        %2656 = vmatprep.subr.bf16.mxu0 0
        %2657 = vmatpush1.bf16.msra.mxu0 0
        %2658 = vmatprep.subr.bf16.mxu0 0
        %2659 = vmatpush1.bf16.msra.mxu0 0
        %2660 = vmatprep.mubr.bf16.mxu0 0
        %2661 = vmatmul.mubr.bf16.gmra.mrb[0].mxu0 %v2623
        %v2662 = vpop.f32.mrb[0].mxu0
        %v2663 = vadd.f32 0.0, %v2662
        %v2664 = vpop.f32.mrb[0].mxu0
        %v2665 = vpop.f32.mrb[0].mxu0
        %v2666 = vpop.f32.mrb[0].mxu0
        %2667 = vdwg.mxu0
        %2670 = vrot.lane.b32.xlu0 %v2614, 16
        %v2671 = vpop.permute.xlu0 %2670
        %2672 = vrot.lane.b32.xlu0 %v2663, 16
        %v2673 = vpop.permute.xlu0 %2672
        %v2676 = vsel %vm1496, %v2516, %v2671
        %v2677 = vsel %vm1496, %v2565, %v2673
        %v2678 = vpack.c.bf16 %v2677, %v2676
        %v2680 = vlaneseq
        %v2681 = vshrl.u32 %v2680, 7
        %v2682 = vsub.s32 0, %v2681
        %v2683 = vrot.slane %v2203, %v2682
        %v2689 = vunpack.c.l.b16 %v2199
        %v2690 = vunpack.c.l.b16 %v2200
        %v2691 = vunpack.c.l.b16 %v2201
        %v2692 = vunpack.c.l.b16 %v2202
        %v2693 = vpack.c.b16 %v2690, %v2689
        %v2694 = vpack.c.b16 %v2692, %v2691
        %v2698 = vsel %vm1364, %v2678, 0
        %2700 = vmatprep.subr.bf16.mxu0 0
        %2701 = vmatpush1.bf16.msra.mxu0 %v2693
        %2702 = vmatprep.subr.bf16.mxu0 0
        %2703 = vmatpush1.bf16.msra.mxu0 %v2694
        %2704 = vmatprep.subr.bf16.mxu0 0
        %2705 = vmatpush1.bf16.msra.mxu0 0
        %2706 = vmatprep.subr.bf16.mxu0 0
        %2707 = vmatpush1.bf16.msra.mxu0 0
        %2708 = vmatprep.subr.bf16.mxu0 0
        %2709 = vmatpush1.bf16.msra.mxu0 0
        %2710 = vmatprep.subr.bf16.mxu0 0
        %2711 = vmatpush1.bf16.msra.mxu0 0
        %2712 = vmatprep.subr.bf16.mxu0 0
        %2713 = vmatpush1.bf16.msra.mxu0 0
        %2714 = vmatprep.subr.bf16.mxu0 0
        %2715 = vmatpush1.bf16.msra.mxu0 0
        %2716 = vmatprep.subr.bf16.mxu0 0
        %2717 = vmatpush1.bf16.msra.mxu0 0
        %2718 = vmatprep.subr.bf16.mxu0 0
        %2719 = vmatpush1.bf16.msra.mxu0 0
        %2720 = vmatprep.subr.bf16.mxu0 0
        %2721 = vmatpush1.bf16.msra.mxu0 0
        %2722 = vmatprep.subr.bf16.mxu0 0
        %2723 = vmatpush1.bf16.msra.mxu0 0
        %2724 = vmatprep.subr.bf16.mxu0 0
        %2725 = vmatpush1.bf16.msra.mxu0 0
        %2726 = vmatprep.subr.bf16.mxu0 0
        %2727 = vmatpush1.bf16.msra.mxu0 0
        %2728 = vmatprep.subr.bf16.mxu0 0
        %2729 = vmatpush1.bf16.msra.mxu0 0
        %2730 = vmatprep.subr.bf16.mxu0 0
        %2731 = vmatpush1.bf16.msra.mxu0 0
        %2732 = vmatprep.mubr.bf16.mxu0 0
        %2733 = vmatmul.mubr.bf16.gmra.mrb[0].mxu0 %v2698
        %v2734 = vpop.f32.mrb[0].mxu0
        %v2735 = vadd.f32 %v2683, %v2734
        %v2736 = vpop.f32.mrb[0].mxu0
        %v2737 = vpop.f32.mrb[0].mxu0
        %v2738 = vadd.f32 %v2683, %v2737
        %v2739 = vpop.f32.mrb[0].mxu0
        %2740 = vdwg.mxu0
        %v2741 = vadd.f32 %v2735, %v2061
        %v2742 = vadd.f32 %v2738, %v2062
        %v2743 = vld [vmem:[%s1292] sm:$0x1]
        %v2744 = vld [vmem:[%s1295] sm:$0x1]
        %v2745 = vsel %vm1364, %v2741, 0.0
        %2746 = vadd.xlane.f32.xlu0 %v2745
        %v2747 = vpop.xlane.xlu0 %2746
        %v2748 = vsel %vm1364, %v2742, 0.0
        %2749 = vadd.xlane.f32.xlu0 %v2748
        %v2750 = vpop.xlane.xlu0 %2749
        %v2751 = vmul.f32 %v2747, %v1371
        %v2752 = vmul.f32 %v2750, %v1371
        %v2753 = vsub.f32 %v2741, %v2751
        %v2754 = vsub.f32 %v2742, %v2752
        %v2755 = vmul.f32 %v2753, %v2753
        %v2756 = vmul.f32 %v2754, %v2754
        %v2757 = vsel %vm1364, %v2755, 0.0
        %2758 = vadd.xlane.f32.xlu0 %v2757
        %v2759 = vpop.xlane.xlu0 %2758
        %v2760 = vsel %vm1364, %v2756, 0.0
        %2761 = vadd.xlane.f32.xlu0 %v2760
        %v2762 = vpop.xlane.xlu0 %2761
        %v2763 = vmul.f32 %v2759, %v1371
        %v2764 = vmul.f32 %v2762, %v1371
        %v2765 = vadd.f32 %v2763, 1e-05
        %v2766 = vadd.f32 %v2764, 1e-05
        %v2767 = vrsqrt.pop %v2765
        %v2768 = vrsqrt.pop %v2766
        %v2769 = vmul.f32 %v2753, %v2767
        %v2770 = vmul.f32 %v2754, %v2768
        %v2772 = vlaneseq
        %v2773 = vshrl.u32 %v2772, 7
        %v2774 = vsub.s32 0, %v2773
        %v2775 = vrot.slane %v2743, %v2774
        %v2777 = vmul.f32 %v2769, %v2775
        %v2778 = vmul.f32 %v2770, %v2775
        %v2780 = vlaneseq
        %v2781 = vshrl.u32 %v2780, 7
        %v2782 = vsub.s32 0, %v2781
        %v2783 = vrot.slane %v2744, %v2782
        %v2785 = vadd.f32 %v2777, %v2783
        %v2786 = vadd.f32 %v2778, %v2783
        %v2787 = vpack.c.bf16 %v2786, %v2785
        %v2788 = vld [vmem:[%s1300] sm:$0xf]
        %v2789 = vld [vmem:[%s1300 + $0x4] sm:$0xf]
        %v2790 = vld [vmem:[%s1300 + $0x8] sm:$0xf]
        %v2791 = vld [vmem:[%s1300 + $0xc] sm:$0xf]
        %v2792 = vld [vmem:[%s1303] sm:$0x1]
        %v2794 = vlaneseq
        %v2795 = vshrl.u32 %v2794, 7
        %v2796 = vsub.s32 0, %v2795
        %v2797 = vrot.slane %v2792, %v2796
        %v2803 = vunpack.c.l.b16 %v2788
        %v2804 = vunpack.c.l.b16 %v2789
        %v2805 = vunpack.c.l.b16 %v2790
        %v2806 = vunpack.c.l.b16 %v2791
        %v2807 = vpack.c.b16 %v2804, %v2803
        %v2808 = vpack.c.b16 %v2806, %v2805
        %v2812 = vsel %vm1364, %v2787, 0
        %2814 = vmatprep.subr.bf16.mxu0 0
        %2815 = vmatpush1.bf16.msra.mxu0 %v2807
        %2816 = vmatprep.subr.bf16.mxu0 0
        %2817 = vmatpush1.bf16.msra.mxu0 %v2808
        %2818 = vmatprep.subr.bf16.mxu0 0
        %2819 = vmatpush1.bf16.msra.mxu0 0
        %2820 = vmatprep.subr.bf16.mxu0 0
        %2821 = vmatpush1.bf16.msra.mxu0 0
        %2822 = vmatprep.subr.bf16.mxu0 0
        %2823 = vmatpush1.bf16.msra.mxu0 0
        %2824 = vmatprep.subr.bf16.mxu0 0
        %2825 = vmatpush1.bf16.msra.mxu0 0
        %2826 = vmatprep.subr.bf16.mxu0 0
        %2827 = vmatpush1.bf16.msra.mxu0 0
        %2828 = vmatprep.subr.bf16.mxu0 0
        %2829 = vmatpush1.bf16.msra.mxu0 0
        %2830 = vmatprep.subr.bf16.mxu0 0
        %2831 = vmatpush1.bf16.msra.mxu0 0
        %2832 = vmatprep.subr.bf16.mxu0 0
        %2833 = vmatpush1.bf16.msra.mxu0 0
        %2834 = vmatprep.subr.bf16.mxu0 0
        %2835 = vmatpush1.bf16.msra.mxu0 0
        %2836 = vmatprep.subr.bf16.mxu0 0
        %2837 = vmatpush1.bf16.msra.mxu0 0
        %2838 = vmatprep.subr.bf16.mxu0 0
        %2839 = vmatpush1.bf16.msra.mxu0 0
        %2840 = vmatprep.subr.bf16.mxu0 0
        %2841 = vmatpush1.bf16.msra.mxu0 0
        %2842 = vmatprep.subr.bf16.mxu0 0
        %2843 = vmatpush1.bf16.msra.mxu0 0
        %2844 = vmatprep.subr.bf16.mxu0 0
        %2845 = vmatpush1.bf16.msra.mxu0 0
        %2846 = vmatprep.mubr.bf16.mxu0 0
        %2847 = vmatmul.mubr.bf16.gmra.mrb[0].mxu0 %v2812
        %v2848 = vpop.f32.mrb[0].mxu0
        %v2849 = vadd.f32 %v2797, %v2848
        %v2850 = vpop.f32.mrb[0].mxu0
        %v2851 = vpop.f32.mrb[0].mxu0
        %v2852 = vadd.f32 %v2797, %v2851
        %v2853 = vpop.f32.mrb[0].mxu0
        %2854 = vdwg.mxu0
        %v2855 = vmax.f32 %v2849, 0.0
        %v2856 = vmax.f32 %v2852, 0.0
        %v2857 = vpack.c.bf16 %v2856, %v2855
        %v2858 = vld [vmem:[%s1308] sm:$0xf]
        %v2859 = vld [vmem:[%s1308 + $0x4] sm:$0xf]
        %v2860 = vld [vmem:[%s1308 + $0x8] sm:$0xf]
        %v2861 = vld [vmem:[%s1308 + $0xc] sm:$0xf]
        %v2862 = vld [vmem:[%s1308 + $0x10] sm:$0xf]
        %v2863 = vld [vmem:[%s1308 + $0x14] sm:$0xf]
        %v2864 = vld [vmem:[%s1308 + $0x18] sm:$0xf]
        %v2865 = vld [vmem:[%s1308 + $0x1c] sm:$0xf]
        %v2866 = vld [vmem:[%s1308 + $0x20] sm:$0xf]
        %v2867 = vld [vmem:[%s1308 + $0x24] sm:$0xf]
        %v2868 = vld [vmem:[%s1308 + $0x28] sm:$0xf]
        %v2869 = vld [vmem:[%s1308 + $0x2c] sm:$0xf]
        %v2870 = vld [vmem:[%s1308 + $0x30] sm:$0xf]
        %v2871 = vld [vmem:[%s1308 + $0x34] sm:$0xf]
        %v2872 = vld [vmem:[%s1308 + $0x38] sm:$0xf]
        %v2873 = vld [vmem:[%s1308 + $0x3c] sm:$0xf]
        %v2874 = vld [vmem:[%s1311] sm:$0x1]
        %v2876 = vlaneseq
        %v2877 = vshrl.u32 %v2876, 7
        %v2878 = vsub.s32 0, %v2877
        %v2879 = vrot.slane %v2874, %v2878
        %v2897 = vunpack.c.l.b16 %v2858
        %v2898 = vunpack.c.l.b16 %v2859
        %v2899 = vunpack.c.l.b16 %v2860
        %v2900 = vunpack.c.l.b16 %v2861
        %v2901 = vunpack.c.l.b16 %v2862
        %v2902 = vunpack.c.l.b16 %v2863
        %v2903 = vunpack.c.l.b16 %v2864
        %v2904 = vunpack.c.l.b16 %v2865
        %v2905 = vunpack.c.l.b16 %v2866
        %v2906 = vunpack.c.l.b16 %v2867
        %v2907 = vunpack.c.l.b16 %v2868
        %v2908 = vunpack.c.l.b16 %v2869
        %v2909 = vunpack.c.l.b16 %v2870
        %v2910 = vunpack.c.l.b16 %v2871
        %v2911 = vunpack.c.l.b16 %v2872
        %v2912 = vunpack.c.l.b16 %v2873
        %v2913 = vpack.c.b16 %v2898, %v2897
        %v2914 = vpack.c.b16 %v2900, %v2899
        %v2915 = vpack.c.b16 %v2902, %v2901
        %v2916 = vpack.c.b16 %v2904, %v2903
        %v2917 = vpack.c.b16 %v2906, %v2905
        %v2918 = vpack.c.b16 %v2908, %v2907
        %v2919 = vpack.c.b16 %v2910, %v2909
        %v2920 = vpack.c.b16 %v2912, %v2911
        %2929 = vmatprep.subr.bf16.mxu0 0
        %2930 = vmatpush1.bf16.msra.mxu0 %v2913
        %2931 = vmatprep.subr.bf16.mxu0 0
        %2932 = vmatpush1.bf16.msra.mxu0 %v2914
        %2933 = vmatprep.subr.bf16.mxu0 0
        %2934 = vmatpush1.bf16.msra.mxu0 %v2915
        %2935 = vmatprep.subr.bf16.mxu0 0
        %2936 = vmatpush1.bf16.msra.mxu0 %v2916
        %2937 = vmatprep.subr.bf16.mxu0 0
        %2938 = vmatpush1.bf16.msra.mxu0 %v2917
        %2939 = vmatprep.subr.bf16.mxu0 0
        %2940 = vmatpush1.bf16.msra.mxu0 %v2918
        %2941 = vmatprep.subr.bf16.mxu0 0
        %2942 = vmatpush1.bf16.msra.mxu0 %v2919
        %2943 = vmatprep.subr.bf16.mxu0 0
        %2944 = vmatpush1.bf16.msra.mxu0 %v2920
        %2945 = vmatprep.subr.bf16.mxu0 0
        %2946 = vmatpush1.bf16.msra.mxu0 0
        %2947 = vmatprep.subr.bf16.mxu0 0
        %2948 = vmatpush1.bf16.msra.mxu0 0
        %2949 = vmatprep.subr.bf16.mxu0 0
        %2950 = vmatpush1.bf16.msra.mxu0 0
        %2951 = vmatprep.subr.bf16.mxu0 0
        %2952 = vmatpush1.bf16.msra.mxu0 0
        %2953 = vmatprep.subr.bf16.mxu0 0
        %2954 = vmatpush1.bf16.msra.mxu0 0
        %2955 = vmatprep.subr.bf16.mxu0 0
        %2956 = vmatpush1.bf16.msra.mxu0 0
        %2957 = vmatprep.subr.bf16.mxu0 0
        %2958 = vmatpush1.bf16.msra.mxu0 0
        %2959 = vmatprep.subr.bf16.mxu0 0
        %2960 = vmatpush1.bf16.msra.mxu0 0
        %2961 = vmatprep.mubr.bf16.mxu0 0
        %2962 = vmatmul.mubr.bf16.gmra.mrb[0].mxu0 %v2857
        %v2963 = vpop.f32.mrb[0].mxu0
        %v2964 = vadd.f32 %v2879, %v2963
        %v2965 = vpop.f32.mrb[0].mxu0
        %v2966 = vpop.f32.mrb[0].mxu0
        %v2967 = vadd.f32 %v2879, %v2966
        %v2968 = vpop.f32.mrb[0].mxu0
        %2969 = vdwg.mxu0
        %v2970 = vadd.f32 %v2964, %v2785
        %v2971 = vadd.f32 %v2967, %v2786
        %v2972 = vld [vmem:[%s1314] sm:$0x1]
        %v2973 = vld [vmem:[%s1317] sm:$0x1]
        %v2974 = vsel %vm1364, %v2970, 0.0
        %2975 = vadd.xlane.f32.xlu0 %v2974
        %v2976 = vpop.xlane.xlu0 %2975
        %v2977 = vsel %vm1364, %v2971, 0.0
        %2978 = vadd.xlane.f32.xlu0 %v2977
        %v2979 = vpop.xlane.xlu0 %2978
        %v2980 = vmul.f32 %v2976, %v1371
        %v2981 = vmul.f32 %v2979, %v1371
        %v2982 = vsub.f32 %v2970, %v2980
        %v2983 = vsub.f32 %v2971, %v2981
        %v2984 = vmul.f32 %v2982, %v2982
        %v2985 = vmul.f32 %v2983, %v2983
        %v2986 = vsel %vm1364, %v2984, 0.0
        %2987 = vadd.xlane.f32.xlu0 %v2986
        %v2988 = vpop.xlane.xlu0 %2987
        %v2989 = vsel %vm1364, %v2985, 0.0
        %2990 = vadd.xlane.f32.xlu0 %v2989
        %v2991 = vpop.xlane.xlu0 %2990
        %v2992 = vmul.f32 %v2988, %v1371
        %v2993 = vmul.f32 %v2991, %v1371
        %v2994 = vadd.f32 %v2992, 1e-05
        %v2995 = vadd.f32 %v2993, 1e-05
        %v2996 = vrsqrt.pop %v2994
        %v2997 = vrsqrt.pop %v2995
        %v2998 = vmul.f32 %v2982, %v2996
        %v2999 = vmul.f32 %v2983, %v2997
        %v3001 = vlaneseq
        %v3002 = vshrl.u32 %v3001, 7
        %v3003 = vsub.s32 0, %v3002
        %v3004 = vrot.slane %v2972, %v3003
        %v3006 = vmul.f32 %v2998, %v3004
        %v3007 = vmul.f32 %v2999, %v3004
        %v3009 = vlaneseq
        %v3010 = vshrl.u32 %v3009, 7
        %v3011 = vsub.s32 0, %v3010
        %v3012 = vrot.slane %v2973, %v3011
        %v3014 = vadd.f32 %v3006, %v3012
        %v3015 = vadd.f32 %v3007, %v3012
        %3016 = vst.msk [vmem:[#allocation2] sm:$0xff] %vm1364, %v3014
        %3017 = vst.msk [vmem:[#allocation2 + $0x8] sm:$0xff] %vm1364, %v3015
        %p3018 = scmp.eq.s32.totalorder %s78, 1
        // Predicated region
        $region145: #{decoder_forward.1} parent=139 // pred_check
          %p3019 = pneg %p3018
        $region146: #{decoder_forward.1} parent=139 // pred_check_branch
          %3021 = sbr.rel (%p3019) target = $region148
        $region147: #{decoder_forward.1} parent=139 // pred_region
          %v3022 = vld [vmem:[%s57] sm:$0x1]
          %v3023 = vld [vmem:[%s59] sm:$0x1]
          %v3024 = vsel %vm1364, %v3014, 0.0
          %3025 = vadd.xlane.f32.xlu0 %v3024
          %v3026 = vpop.xlane.xlu0 %3025
          %v3027 = vsel %vm1364, %v3015, 0.0
          %3028 = vadd.xlane.f32.xlu0 %v3027
          %v3029 = vpop.xlane.xlu0 %3028
          %v3030 = vmul.f32 %v3026, %v1371
          %v3031 = vmul.f32 %v3029, %v1371
          %v3032 = vsub.f32 %v3014, %v3030
          %v3033 = vsub.f32 %v3015, %v3031
          %v3034 = vmul.f32 %v3032, %v3032
          %v3035 = vmul.f32 %v3033, %v3033
          %v3036 = vsel %vm1364, %v3034, 0.0
          %3037 = vadd.xlane.f32.xlu0 %v3036
          %v3038 = vpop.xlane.xlu0 %3037
          %v3039 = vsel %vm1364, %v3035, 0.0
          %3040 = vadd.xlane.f32.xlu0 %v3039
          %v3041 = vpop.xlane.xlu0 %3040
          %v3042 = vmul.f32 %v3038, %v1371
          %v3043 = vmul.f32 %v3041, %v1371
          %v3044 = vadd.f32 %v3042, 1e-05
          %v3045 = vadd.f32 %v3043, 1e-05
          %v3046 = vrsqrt.pop %v3044
          %v3047 = vrsqrt.pop %v3045
          %v3048 = vmul.f32 %v3032, %v3046
          %v3049 = vmul.f32 %v3033, %v3047
          %v3051 = vlaneseq
          %v3052 = vshrl.u32 %v3051, 7
          %v3053 = vsub.s32 0, %v3052
          %v3054 = vrot.slane %v3022, %v3053
          %v3056 = vmul.f32 %v3048, %v3054
          %v3057 = vmul.f32 %v3049, %v3054
          %v3059 = vlaneseq
          %v3060 = vshrl.u32 %v3059, 7
          %v3061 = vsub.s32 0, %v3060
          %v3062 = vrot.slane %v3023, %v3061
          %v3064 = vadd.f32 %v3056, %v3062
          %v3065 = vadd.f32 %v3057, %v3062
          %3066 = vst.msk [vmem:[#allocation4] sm:$0xff] %vm1364, %v3064
          %3067 = vst.msk [vmem:[#allocation4 + $0x8] sm:$0xff] %vm1364, %v3065
        $region148: #{decoder_forward.1} parent=139 // pred_fallthru
          _
        %p3068 = scmp.lt.s32.totalorder %s78, 1
        %s3069 = scalar_select %p3068, %s78, 1
        %s3070 = smul.addr %s3069, 4
        %s3071 = smul.addr %s3070, 8
        %s3072 = scalar_lea.vmem %s63, %s3071
        %p3073 = scmp.lt.s32.totalorder %s78, 1
        %s3074 = scalar_select %p3073, %s78, 1
        %s3075 = smul.addr %s3074, 4
        %s3076 = smul.addr %s3075, 8
        %s3077 = scalar_lea.vmem %s65, %s3076
        // Predicated region
        $region149: #{decoder_forward.1} parent=139 // pred_check
          %p3078 = pneg %p831
        $region150: #{decoder_forward.1} parent=139 // pred_check_branch
          %3080 = sbr.rel (%p3078) target = $region152
        $region151: #{decoder_forward.1} parent=139 // pred_region
          %s3082 = ssub.s32 256, 256
          %3083 = vsyncadd [#allocation5], %s3082
          %s3084 = sshll.u32 [#allocation4], 4
          %s3085 = int_to_ptr.vmem [resolvable:$true] %s3084
          %3090 = dma.vmem_to_hbm [thread:$0]  %s3085, 256, %s61, [#allocation5], 128, 128, 8
        $region152: #{decoder_forward.1} parent=139 // pred_fallthru
          _
        // Predicated region
        $region153: #{decoder_forward.1} parent=139 // pred_check
          %p3091 = pneg %p857
        $region154: #{decoder_forward.1} parent=139 // pred_check_branch
          %3093 = sbr.rel (%p3091) target = $region156
        $region155: #{decoder_forward.1} parent=139 // pred_region
          _
        $region156: #{decoder_forward.1} parent=139 // pred_fallthru
          _
        // Predicated region
        $region157: #{decoder_forward.1} parent=139 // pred_check
          %p3094 = pneg %p883
        $region158: #{decoder_forward.1} parent=139 // pred_check_branch
          %3096 = sbr.rel (%p3094) target = $region160
        $region159: #{decoder_forward.1} parent=139 // pred_region
          _
        $region160: #{decoder_forward.1} parent=139 // pred_fallthru
          _
        // Predicated region
        $region161: #{decoder_forward.1} parent=139 // pred_check
          %p3097 = pneg %p831
        $region162: #{decoder_forward.1} parent=139 // pred_check_branch
          %3099 = sbr.rel (%p3097) target = $region164
        $region163: #{decoder_forward.1} parent=139 // pred_region
          %3100 = dma.done [#allocation5], 256
        $region164: #{decoder_forward.1} parent=139 // pred_fallthru
          _
      $region140: #{decoder_forward.1} parent=5 // pred_fallthru
        _
      %p3101 = scmp.le.s32.totalorder 2, %s73
      // Predicated region
      $region165: #{decoder_forward.1} parent=5 // pred_check
        %p3102 = pneg %p3101
      $region166: #{decoder_forward.1} parent=5 // pred_check_branch
        %3104 = sbr.rel (%p3102) target = $region168
      $region167: #{decoder_forward.1} parent=5 // pred_region
        %s3105 = ssub.s32 %s73, 2
        // Predicated region
        $region169: #{decoder_forward.1} parent=167 // pred_check
          %p3106 = pneg %p863
        $region170: #{decoder_forward.1} parent=167 // pred_check_branch
          %3108 = sbr.rel (%p3106) target = $region172
        $region171: #{decoder_forward.1} parent=167 // pred_region
          %p3109 = scmp.lt.s32.totalorder %s79, 1
          %s3110 = scalar_select %p3109, %s79, 1
          %s3111 = smul.addr %s3110, 4
          %s3112 = smul.addr %s3111, 8
          %s3113 = scalar_lea.vmem %s63, %s3112
        $region172: #{decoder_forward.1} parent=167 // pred_fallthru
          _
        // Predicated region
        $region173: #{decoder_forward.1} parent=167 // pred_check
          %p3114 = pneg %p889
        $region174: #{decoder_forward.1} parent=167 // pred_check_branch
          %3116 = sbr.rel (%p3114) target = $region176
        $region175: #{decoder_forward.1} parent=167 // pred_region
          %p3117 = scmp.lt.s32.totalorder %s79, 1
          %s3118 = scalar_select %p3117, %s79, 1
          %s3119 = smul.addr %s3118, 4
          %s3120 = smul.addr %s3119, 8
          %s3121 = scalar_lea.vmem %s65, %s3120
        $region176: #{decoder_forward.1} parent=167 // pred_fallthru
          _
      $region168: #{decoder_forward.1} parent=5 // pred_fallthru
        _
    $region6: #{decoder_forward.1} parent=1 // loop_footer
      %s77 = sadd.s32 1, %s73
    $region7: #{decoder_forward.1} parent=1 // loop_footer_branch
      %72 = sbr.rel target = $region3
    $region8: #{decoder_forward.1} parent=1 // loop_exit
      _
    %3122 = vsyncpa [#allocation5], 1
    %s3123 = scalar_lea.sflag [#allocation5], 1
    %3124 = vsyncpa %s3123, 1

</llo_original>
